<compile_context>
chip_gen: v6e
topology: v6e:2x2x1
jax: 0.10.0
libtpu: 0.0.40
codegen_flags: <defaults>
</compile_context>

<pallas_src>
import functools

import jax
import jax.numpy as jnp
from jax.experimental import pallas as pl
from jax.experimental.pallas import tpu as pltpu


def _rbm_kernel(x_ref, w_ref, wt_ref, bh_ref, bv_ref, rh_ref, rv_ref, out_ref, *, K):
    tile_t = x_ref.shape[0]

    x = x_ref[...]      # (tile_t, nv) f32, binary 0/1 visible data (padding rows = 0)
    w = w_ref[...]      # (nh, nv) bf16, VMEM-resident across all tiles
    wt = wt_ref[...]    # (nv, nh) bf16, pre-transposed copy (both matmuls canonical)
    bh = bh_ref[...]    # (1, nh) f32
    bv = bv_ref[...]    # (1, nv) f32

    def h_activation(v_f32):
        # v @ w.T + bh : bf16 MXU matmul, f32 accumulation (v is exact 0/1).
        return jnp.dot(v_f32.astype(jnp.bfloat16), wt,
                       preferred_element_type=jnp.float32) + bh

    def softplus(a):
        # Numerically stable log(1 + exp(a)); naive log1p(exp(a)) overflows a > ~88.
        return jnp.maximum(a, 0.0) + jnp.log1p(jnp.exp(-jnp.abs(a)))

    # Shared by free_energy(x) and Gibbs step 0 (saves one (tile_t,nv)x(nv,nh) matmul).
    act0 = h_activation(x)                                         # (tile_t, nh)

    # K-step Gibbs chain.  Carrying (vs, h_act) lets the final carry's h_act be
    # reused directly as the activation needed by free_energy(vs).
    def gibbs_step(k, carry):
        vs, h_act = carry
        p_h = jax.nn.sigmoid(h_act)                                # f32 VPU/EUP
        h_s = (rh_ref[k] < p_h).astype(jnp.bfloat16)               # Bernoulli(p_h), exact 0/1
        v_act = jnp.dot(h_s, w, preferred_element_type=jnp.float32) + bv
        p_v = jax.nn.sigmoid(v_act)
        vs_new = (rv_ref[k] < p_v).astype(jnp.float32)             # Bernoulli(p_v)
        return vs_new, h_activation(vs_new)

    vs, act_s = jax.lax.fori_loop(0, K, gibbs_step, (x, act0), unroll=K <= 8)

    def free_energy(v, act):
        hidden = jnp.sum(softplus(act), axis=-1, keepdims=True)    # (tile_t, 1)
        visible = jnp.sum(v * bv, axis=-1, keepdims=True)
        return -hidden - visible

    row_cost = free_energy(x, act0) - free_energy(vs, act_s)       # (tile_t, 1)
    partial = jnp.sum(row_cost).reshape(1, 1)                      # per-tile partial sum
    # Lane-dense (8,128) block write; wrapper reads element [0,0] of each tile.
    out_ref[...] = jnp.broadcast_to(partial, (8, 128))


@functools.partial(jax.jit, static_argnames=("K", "tile_t"))
def rbm_forward(x, w, bh, bv, *, K, rng_key, tile_t=128):
    """Pallas equivalent of RBM.forward(x, K): mean_t [F(x_t) - F(Gibbs_K(x_t))].

    tile_t: rows per grid step.  128 saturates the v5e MXU and fits every VMEM
    budget; use 256-512 on v6e/v7x for higher MXU row utilization.
    """
    T, nv = x.shape
    nh = w.shape[0]
    assert w.shape == (nh, nv) and bh.shape == (nh,) and bv.shape == (nv,)
    assert K >= 0

    tile_t = max(8, min(tile_t, pl.cdiv(T, 8) * 8))   # keep sublane-aligned, no oversizing
    num_tiles = pl.cdiv(T, tile_t)
    T_pad = num_tiles * tile_t

    x_p = jnp.zeros((T_pad, nv), jnp.float32).at[:T].set(x.astype(jnp.float32))
    w_bf = w.astype(jnp.bfloat16)      # MXU operand: cast once, halves its VMEM footprint
    wt_bf = w_bf.T                     # pre-transposed copy; both stay VMEM-resident
    bh2 = bh.reshape(1, nh).astype(jnp.float32)
    bv2 = bv.reshape(1, nv).astype(jnp.float32)

    # TODO(synk): torch.bernoulli's exact RNG stream cannot be matched; uniforms are
    # drawn with jax.random (same Bernoulli(p) semantics, deterministic per key).
    Kr = max(K, 1)
    kh, kv = jax.random.split(rng_key)
    rh = jax.random.uniform(kh, (Kr, T_pad, nh), dtype=jnp.float32)
    rv = jax.random.uniform(kv, (Kr, T_pad, nv), dtype=jnp.float32)
    # Force padded rows to sample vs == 0 (uniform 1.0 never fires since `<` is strict),
    # so their cost F(0) - F(0) is exactly 0 and needs no in-kernel masking.
    rv = rv.at[:, T:, :].set(1.0)

    kernel = functools.partial(_rbm_kernel, K=K)

    out = pl.pallas_call(
        kernel,
        out_shape=jax.ShapeDtypeStruct((num_tiles * 8, 128), jnp.float32),
        grid_spec=pltpu.PrefetchScalarGridSpec(
            num_scalar_prefetch=0,
            grid=(num_tiles,),
            in_specs=[
                pl.BlockSpec((tile_t, nv), lambda i: (i, 0)),          # x tile (pipelined)
                pl.BlockSpec((nh, nv), lambda i: (0, 0)),              # w    (resident)
                pl.BlockSpec((nv, nh), lambda i: (0, 0)),              # w.T  (resident)
                pl.BlockSpec((1, nh), lambda i: (0, 0)),               # bh
                pl.BlockSpec((1, nv), lambda i: (0, 0)),               # bv
                pl.BlockSpec((Kr, tile_t, nh), lambda i: (0, i, 0)),   # hidden uniforms
                pl.BlockSpec((Kr, tile_t, nv), lambda i: (0, i, 0)),   # visible uniforms
            ],
            out_specs=pl.BlockSpec((8, 128), lambda i: (i, 0)),
        ),
        compiler_params=pltpu.CompilerParams(
            # Tiles are independent Gibbs chains -> shardable across TCs on v7x.
            dimension_semantics=("parallel",),
            vmem_limit_bytes=32 * 1024 * 1024,
        ),
    )(x_p, w_bf, wt_bf, bh2, bv2, rh, rv)

    partials = out.reshape(num_tiles, 8, 128)[:, 0, 0]   # one partial sum per tile
    return jnp.sum(partials) / T


if __name__ == "__main__":
    # Small, MXU-friendly demo shapes: batch T=256 (2 tiles of 128), nv=128, nh=128, K=3.
    T, nv, nh, K = 256, 128, 128, 3

    key = jax.random.PRNGKey(0)
    k1, k2, k3, k4, k5 = jax.random.split(key, 5)
    # Binary visible data (typical RBM input); small random parameters instead of the
    # all-zeros __init__ so the kernel does non-trivial work.
    x = (jax.random.uniform(k1, (T, nv)) < 0.5).astype(jnp.float32)
    w = 0.05 * jax.random.normal(k2, (nh, nv), dtype=jnp.float32)
    bh = 0.05 * jax.random.normal(k3, (nh,), dtype=jnp.float32)
    bv = 0.05 * jax.random.normal(k4, (nv,), dtype=jnp.float32)

    cost = rbm_forward(x, w, bh, bv, K=K, rng_key=k5)
    jax.block_until_ready(cost)
    assert cost.shape == () and cost.dtype == jnp.float32
    assert bool(jnp.isfinite(cost))
    print("KERNEL_OK")
</pallas_src>

<mosaic_0001>
module attributes {stable_mosaic.version = 11 : i64} {
  func.func @_rbm_kernel(%arg0: i32, %arg1: memref<128x128xf32, #tpu.memory_space<vmem>>, %arg2: memref<128x128xbf16, #tpu.memory_space<vmem>>, %arg3: memref<128x128xbf16, #tpu.memory_space<vmem>>, %arg4: memref<1x128xf32, #tpu.memory_space<vmem>>, %arg5: memref<1x128xf32, #tpu.memory_space<vmem>>, %arg6: memref<3x128x128xf32, #tpu.memory_space<vmem>>, %arg7: memref<3x128x128xf32, #tpu.memory_space<vmem>>, %arg8: memref<8x128xf32, #tpu.memory_space<vmem>>) attributes {dimension_semantics = [#tpu.dimension_semantics<parallel>], iteration_bounds = array<i64: 2>, scalar_prefetch = 0 : i64, scratch_operands = 0 : i64, tpu.core_type = #tpu.core_type<tc>, window_params = [{transform_indices = @transform_0, window_bounds = array<i64: 128, 128>}, {pipeline_mode = #tpu.pipeline_mode<synchronous>, transform_indices = @transform_1, window_bounds = array<i64: 128, 128>}, {pipeline_mode = #tpu.pipeline_mode<synchronous>, transform_indices = @transform_2, window_bounds = array<i64: 128, 128>}, {pipeline_mode = #tpu.pipeline_mode<synchronous>, transform_indices = @transform_3, window_bounds = array<i64: 1, 128>}, {pipeline_mode = #tpu.pipeline_mode<synchronous>, transform_indices = @transform_4, window_bounds = array<i64: 1, 128>}, {transform_indices = @transform_5, window_bounds = array<i64: 3, 128, 128>}, {transform_indices = @transform_6, window_bounds = array<i64: 3, 128, 128>}, {transform_indices = @transform_7, window_bounds = array<i64: 8, 128>}]} {
    %c0 = arith.constant 0 : index
    %c0_0 = arith.constant 0 : index
    %0 = vector.load %arg1[%c0, %c0_0] : memref<128x128xf32, #tpu.memory_space<vmem>>, vector<128x128xf32>
    %c0_1 = arith.constant 0 : index
    %c0_2 = arith.constant 0 : index
    %1 = vector.load %arg2[%c0_1, %c0_2] : memref<128x128xbf16, #tpu.memory_space<vmem>>, vector<128x128xbf16>
    %c0_3 = arith.constant 0 : index
    %c0_4 = arith.constant 0 : index
    %2 = vector.load %arg3[%c0_3, %c0_4] : memref<128x128xbf16, #tpu.memory_space<vmem>>, vector<128x128xbf16>
    %c0_5 = arith.constant 0 : index
    %c0_6 = arith.constant 0 : index
    %3 = vector.load %arg4[%c0_5, %c0_6] : memref<1x128xf32, #tpu.memory_space<vmem>>, vector<1x128xf32>
    %c0_7 = arith.constant 0 : index
    %c0_8 = arith.constant 0 : index
    %4 = vector.load %arg5[%c0_7, %c0_8] : memref<1x128xf32, #tpu.memory_space<vmem>>, vector<1x128xf32>
    %5 = arith.truncf %0 : vector<128x128xf32> to vector<128x128xbf16>
    %cst = arith.constant dense<0.000000e+00> : vector<128x128xf32>
    %6 = tpu.matmul %5, %2, %cst {dimension_numbers = #tpu.dot_dimension_numbers<[1], [0], [0], [1], [0, 0, 1, 1], [], []>} : vector<128x128xbf16>, vector<128x128xbf16>, vector<128x128xf32> -> vector<128x128xf32>
    %7 = vector.broadcast %3 : vector<1x128xf32> to vector<128x128xf32>
    %8 = arith.addf %6, %7 : vector<128x128xf32>
    %c0_i32 = arith.constant 0 : i32
    %9 = arith.negf %8 : vector<128x128xf32>
    %10 = math.exp %9 : vector<128x128xf32>
    %cst_9 = arith.constant 1.000000e+00 : f32
    %11 = vector.broadcast %cst_9 : f32 to vector<128x128xf32>
    %12 = arith.addf %11, %10 : vector<128x128xf32>
    %13 = arith.divf %11, %12 : vector<128x128xf32>
    %14 = arith.index_cast %c0_i32 : i32 to index
    %c0_10 = arith.constant 0 : index
    %c0_11 = arith.constant 0 : index
    %15 = vector.load %arg6[%14, %c0_10, %c0_11] : memref<3x128x128xf32, #tpu.memory_space<vmem>>, vector<1x128x128xf32>
    %16 = vector.shape_cast %15 : vector<1x128x128xf32> to vector<128x128xf32>
    %17 = arith.cmpf olt, %16, %13 : vector<128x128xf32>
    %18 = arith.extui %17 : vector<128x128xi1> to vector<128x128xi32>
    %19 = arith.sitofp %18 : vector<128x128xi32> to vector<128x128xf32>
    %20 = arith.truncf %19 : vector<128x128xf32> to vector<128x128xbf16>
    %cst_12 = arith.constant dense<0.000000e+00> : vector<128x128xf32>
    %21 = tpu.matmul %20, %1, %cst_12 {dimension_numbers = #tpu.dot_dimension_numbers<[1], [0], [0], [1], [0, 0, 1, 1], [], []>} : vector<128x128xbf16>, vector<128x128xbf16>, vector<128x128xf32> -> vector<128x128xf32>
    %22 = vector.broadcast %4 : vector<1x128xf32> to vector<128x128xf32>
    %23 = arith.addf %21, %22 : vector<128x128xf32>
    %24 = arith.negf %23 : vector<128x128xf32>
    %25 = math.exp %24 : vector<128x128xf32>
    %cst_13 = arith.constant 1.000000e+00 : f32
    %26 = vector.broadcast %cst_13 : f32 to vector<128x128xf32>
    %27 = arith.addf %26, %25 : vector<128x128xf32>
    %28 = arith.divf %26, %27 : vector<128x128xf32>
    %29 = arith.index_cast %c0_i32 : i32 to index
    %c0_14 = arith.constant 0 : index
    %c0_15 = arith.constant 0 : index
    %30 = vector.load %arg7[%29, %c0_14, %c0_15] : memref<3x128x128xf32, #tpu.memory_space<vmem>>, vector<1x128x128xf32>
    %31 = vector.shape_cast %30 : vector<1x128x128xf32> to vector<128x128xf32>
    %32 = arith.cmpf olt, %31, %28 : vector<128x128xf32>
    %33 = arith.extui %32 : vector<128x128xi1> to vector<128x128xi32>
    %34 = arith.sitofp %33 : vector<128x128xi32> to vector<128x128xf32>
    %35 = arith.truncf %34 : vector<128x128xf32> to vector<128x128xbf16>
    %cst_16 = arith.constant dense<0.000000e+00> : vector<128x128xf32>
    %36 = tpu.matmul %35, %2, %cst_16 {dimension_numbers = #tpu.dot_dimension_numbers<[1], [0], [0], [1], [0, 0, 1, 1], [], []>} : vector<128x128xbf16>, vector<128x128xbf16>, vector<128x128xf32> -> vector<128x128xf32>
    %37 = vector.broadcast %3 : vector<1x128xf32> to vector<128x128xf32>
    %38 = arith.addf %36, %37 : vector<128x128xf32>
    %c1_i32 = arith.constant 1 : i32
    %39 = arith.negf %38 : vector<128x128xf32>
    %40 = math.exp %39 : vector<128x128xf32>
    %cst_17 = arith.constant 1.000000e+00 : f32
    %41 = vector.broadcast %cst_17 : f32 to vector<128x128xf32>
    %42 = arith.addf %41, %40 : vector<128x128xf32>
    %43 = arith.divf %41, %42 : vector<128x128xf32>
    %44 = arith.index_cast %c1_i32 : i32 to index
    %c0_18 = arith.constant 0 : index
    %c0_19 = arith.constant 0 : index
    %45 = vector.load %arg6[%44, %c0_18, %c0_19] : memref<3x128x128xf32, #tpu.memory_space<vmem>>, vector<1x128x128xf32>
    %46 = vector.shape_cast %45 : vector<1x128x128xf32> to vector<128x128xf32>
    %47 = arith.cmpf olt, %46, %43 : vector<128x128xf32>
    %48 = arith.extui %47 : vector<128x128xi1> to vector<128x128xi32>
    %49 = arith.sitofp %48 : vector<128x128xi32> to vector<128x128xf32>
    %50 = arith.truncf %49 : vector<128x128xf32> to vector<128x128xbf16>
    %cst_20 = arith.constant dense<0.000000e+00> : vector<128x128xf32>
    %51 = tpu.matmul %50, %1, %cst_20 {dimension_numbers = #tpu.dot_dimension_numbers<[1], [0], [0], [1], [0, 0, 1, 1], [], []>} : vector<128x128xbf16>, vector<128x128xbf16>, vector<128x128xf32> -> vector<128x128xf32>
    %52 = vector.broadcast %4 : vector<1x128xf32> to vector<128x128xf32>
    %53 = arith.addf %51, %52 : vector<128x128xf32>
    %54 = arith.negf %53 : vector<128x128xf32>
    %55 = math.exp %54 : vector<128x128xf32>
    %cst_21 = arith.constant 1.000000e+00 : f32
    %56 = vector.broadcast %cst_21 : f32 to vector<128x128xf32>
    %57 = arith.addf %56, %55 : vector<128x128xf32>
    %58 = arith.divf %56, %57 : vector<128x128xf32>
    %59 = arith.index_cast %c1_i32 : i32 to index
    %c0_22 = arith.constant 0 : index
    %c0_23 = arith.constant 0 : index
    %60 = vector.load %arg7[%59, %c0_22, %c0_23] : memref<3x128x128xf32, #tpu.memory_space<vmem>>, vector<1x128x128xf32>
    %61 = vector.shape_cast %60 : vector<1x128x128xf32> to vector<128x128xf32>
    %62 = arith.cmpf olt, %61, %58 : vector<128x128xf32>
    %63 = arith.extui %62 : vector<128x128xi1> to vector<128x128xi32>
    %64 = arith.sitofp %63 : vector<128x128xi32> to vector<128x128xf32>
    %65 = arith.truncf %64 : vector<128x128xf32> to vector<128x128xbf16>
    %cst_24 = arith.constant dense<0.000000e+00> : vector<128x128xf32>
    %66 = tpu.matmul %65, %2, %cst_24 {dimension_numbers = #tpu.dot_dimension_numbers<[1], [0], [0], [1], [0, 0, 1, 1], [], []>} : vector<128x128xbf16>, vector<128x128xbf16>, vector<128x128xf32> -> vector<128x128xf32>
    %67 = vector.broadcast %3 : vector<1x128xf32> to vector<128x128xf32>
    %68 = arith.addf %66, %67 : vector<128x128xf32>
    %c2_i32 = arith.constant 2 : i32
    %69 = arith.negf %68 : vector<128x128xf32>
    %70 = math.exp %69 : vector<128x128xf32>
    %cst_25 = arith.constant 1.000000e+00 : f32
    %71 = vector.broadcast %cst_25 : f32 to vector<128x128xf32>
    %72 = arith.addf %71, %70 : vector<128x128xf32>
    %73 = arith.divf %71, %72 : vector<128x128xf32>
    %74 = arith.index_cast %c2_i32 : i32 to index
    %c0_26 = arith.constant 0 : index
    %c0_27 = arith.constant 0 : index
    %75 = vector.load %arg6[%74, %c0_26, %c0_27] : memref<3x128x128xf32, #tpu.memory_space<vmem>>, vector<1x128x128xf32>
    %76 = vector.shape_cast %75 : vector<1x128x128xf32> to vector<128x128xf32>
    %77 = arith.cmpf olt, %76, %73 : vector<128x128xf32>
    %78 = arith.extui %77 : vector<128x128xi1> to vector<128x128xi32>
    %79 = arith.sitofp %78 : vector<128x128xi32> to vector<128x128xf32>
    %80 = arith.truncf %79 : vector<128x128xf32> to vector<128x128xbf16>
    %cst_28 = arith.constant dense<0.000000e+00> : vector<128x128xf32>
    %81 = tpu.matmul %80, %1, %cst_28 {dimension_numbers = #tpu.dot_dimension_numbers<[1], [0], [0], [1], [0, 0, 1, 1], [], []>} : vector<128x128xbf16>, vector<128x128xbf16>, vector<128x128xf32> -> vector<128x128xf32>
    %82 = vector.broadcast %4 : vector<1x128xf32> to vector<128x128xf32>
    %83 = arith.addf %81, %82 : vector<128x128xf32>
    %84 = arith.negf %83 : vector<128x128xf32>
    %85 = math.exp %84 : vector<128x128xf32>
    %cst_29 = arith.constant 1.000000e+00 : f32
    %86 = vector.broadcast %cst_29 : f32 to vector<128x128xf32>
    %87 = arith.addf %86, %85 : vector<128x128xf32>
    %88 = arith.divf %86, %87 : vector<128x128xf32>
    %89 = arith.index_cast %c2_i32 : i32 to index
    %c0_30 = arith.constant 0 : index
    %c0_31 = arith.constant 0 : index
    %90 = vector.load %arg7[%89, %c0_30, %c0_31] : memref<3x128x128xf32, #tpu.memory_space<vmem>>, vector<1x128x128xf32>
    %91 = vector.shape_cast %90 : vector<1x128x128xf32> to vector<128x128xf32>
    %92 = arith.cmpf olt, %91, %88 : vector<128x128xf32>
    %93 = arith.extui %92 : vector<128x128xi1> to vector<128x128xi32>
    %94 = arith.sitofp %93 : vector<128x128xi32> to vector<128x128xf32>
    %95 = arith.truncf %94 : vector<128x128xf32> to vector<128x128xbf16>
    %cst_32 = arith.constant dense<0.000000e+00> : vector<128x128xf32>
    %96 = tpu.matmul %95, %2, %cst_32 {dimension_numbers = #tpu.dot_dimension_numbers<[1], [0], [0], [1], [0, 0, 1, 1], [], []>} : vector<128x128xbf16>, vector<128x128xbf16>, vector<128x128xf32> -> vector<128x128xf32>
    %97 = vector.broadcast %3 : vector<1x128xf32> to vector<128x128xf32>
    %98 = arith.addf %96, %97 : vector<128x128xf32>
    %c3_i32 = arith.constant 3 : i32
    %cst_33 = arith.constant 0.000000e+00 : f32
    %99 = vector.broadcast %cst_33 : f32 to vector<128x128xf32>
    %100 = arith.maximumf %8, %99 : vector<128x128xf32>
    %101 = math.absf %8 : vector<128x128xf32>
    %cst_34 = arith.constant 0.000000e+00 : f32
    %102 = vector.broadcast %cst_34 : f32 to vector<128x128xf32>
    %103 = arith.subf %102, %101 : vector<128x128xf32>
    %104 = math.exp %103 : vector<128x128xf32>
    %105 = math.log1p %104 : vector<128x128xf32>
    %106 = arith.addf %100, %105 : vector<128x128xf32>
    %cst_35 = arith.constant dense<0.000000e+00> : vector<128xf32>
    %107 = vector.multi_reduction <add>, %106, %cst_35 [1] : vector<128x128xf32> to vector<128xf32>
    %108 = vector.shape_cast %107 : vector<128xf32> to vector<128x1xf32>
    %109 = vector.broadcast %4 : vector<1x128xf32> to vector<128x128xf32>
    %110 = arith.mulf %0, %109 : vector<128x128xf32>
    %cst_36 = arith.constant dense<0.000000e+00> : vector<128xf32>
    %111 = vector.multi_reduction <add>, %110, %cst_36 [1] : vector<128x128xf32> to vector<128xf32>
    %112 = vector.shape_cast %111 : vector<128xf32> to vector<128x1xf32>
    %cst_37 = arith.constant 0.000000e+00 : f32
    %113 = vector.broadcast %cst_37 : f32 to vector<128x1xf32>
    %114 = arith.subf %113, %108 : vector<128x1xf32>
    %115 = arith.subf %114, %112 : vector<128x1xf32>
    %cst_38 = arith.constant 0.000000e+00 : f32
    %116 = vector.broadcast %cst_38 : f32 to vector<128x128xf32>
    %117 = arith.maximumf %98, %116 : vector<128x128xf32>
    %118 = math.absf %98 : vector<128x128xf32>
    %cst_39 = arith.constant 0.000000e+00 : f32
    %119 = vector.broadcast %cst_39 : f32 to vector<128x128xf32>
    %120 = arith.subf %119, %118 : vector<128x128xf32>
    %121 = math.exp %120 : vector<128x128xf32>
    %122 = math.log1p %121 : vector<128x128xf32>
    %123 = arith.addf %117, %122 : vector<128x128xf32>
    %cst_40 = arith.constant dense<0.000000e+00> : vector<128xf32>
    %124 = vector.multi_reduction <add>, %123, %cst_40 [1] : vector<128x128xf32> to vector<128xf32>
    %125 = vector.shape_cast %124 : vector<128xf32> to vector<128x1xf32>
    %126 = vector.broadcast %4 : vector<1x128xf32> to vector<128x128xf32>
    %127 = arith.mulf %94, %126 : vector<128x128xf32>
    %cst_41 = arith.constant dense<0.000000e+00> : vector<128xf32>
    %128 = vector.multi_reduction <add>, %127, %cst_41 [1] : vector<128x128xf32> to vector<128xf32>
    %129 = vector.shape_cast %128 : vector<128xf32> to vector<128x1xf32>
    %cst_42 = arith.constant 0.000000e+00 : f32
    %130 = vector.broadcast %cst_42 : f32 to vector<128x1xf32>
    %131 = arith.subf %130, %125 : vector<128x1xf32>
    %132 = arith.subf %131, %129 : vector<128x1xf32>
    %133 = arith.subf %115, %132 : vector<128x1xf32>
    %134 = vector.shape_cast %133 : vector<128x1xf32> to vector<1x128x1xf32>
    %cst_43 = arith.constant dense<0.000000e+00> : vector<1xf32>
    %135 = vector.multi_reduction <add>, %134, %cst_43 [1, 2] : vector<1x128x1xf32> to vector<1xf32>
    %136 = vector.shape_cast %135 : vector<1xf32> to vector<1x1x1xf32>
    %137 = vector.extract %136[0, 0, 0] : f32 from vector<1x1x1xf32>
    %138 = vector.broadcast %137 : f32 to vector<1x1xf32>
    %139 = vector.shape_cast %138 : vector<1x1xf32> to vector<1x1xf32>
    %140 = vector.broadcast %139 : vector<1x1xf32> to vector<8x128xf32>
    %c0_44 = arith.constant 0 : index
    %c0_45 = arith.constant 0 : index
    %141 = vector.load %arg8[%c0_44, %c0_45] : memref<8x128xf32, #tpu.memory_space<vmem>>, vector<8x128xf32>
    tpu.vector_store %arg8[%c0_44, %c0_45], %140 {strides = array<i32>} : memref<8x128xf32, #tpu.memory_space<vmem>>, vector<8x128xf32>,
    return
  }
  func.func @transform_0(%arg0: i32) -> (i32, i32) {
    %c0_i32 = arith.constant 0 : i32
    %c0_i32_0 = arith.constant 0 : i32
    return %arg0, %c0_i32 : i32, i32
  }
  func.func @transform_1(%arg0: i32) -> (i32, i32) {
    %c0_i32 = arith.constant 0 : i32
    %c0_i32_0 = arith.constant 0 : i32
    %c0_i32_1 = arith.constant 0 : i32
    return %c0_i32, %c0_i32_0 : i32, i32
  }
  func.func @transform_2(%arg0: i32) -> (i32, i32) {
    %c0_i32 = arith.constant 0 : i32
    %c0_i32_0 = arith.constant 0 : i32
    %c0_i32_1 = arith.constant 0 : i32
    return %c0_i32, %c0_i32_0 : i32, i32
  }
  func.func @transform_3(%arg0: i32) -> (i32, i32) {
    %c0_i32 = arith.constant 0 : i32
    %c0_i32_0 = arith.constant 0 : i32
    %c0_i32_1 = arith.constant 0 : i32
    return %c0_i32, %c0_i32_0 : i32, i32
  }
  func.func @transform_4(%arg0: i32) -> (i32, i32) {
    %c0_i32 = arith.constant 0 : i32
    %c0_i32_0 = arith.constant 0 : i32
    %c0_i32_1 = arith.constant 0 : i32
    return %c0_i32, %c0_i32_0 : i32, i32
  }
  func.func @transform_5(%arg0: i32) -> (i32, i32, i32) {
    %c0_i32 = arith.constant 0 : i32
    %c0_i32_0 = arith.constant 0 : i32
    %c0_i32_1 = arith.constant 0 : i32
    return %c0_i32, %arg0, %c0_i32_0 : i32, i32, i32
  }
  func.func @transform_6(%arg0: i32) -> (i32, i32, i32) {
    %c0_i32 = arith.constant 0 : i32
    %c0_i32_0 = arith.constant 0 : i32
    %c0_i32_1 = arith.constant 0 : i32
    return %c0_i32, %arg0, %c0_i32_0 : i32, i32, i32
  }
  func.func @transform_7(%arg0: i32) -> (i32, i32) {
    %c0_i32 = arith.constant 0 : i32
    %c0_i32_0 = arith.constant 0 : i32
    return %arg0, %c0_i32 : i32, i32
  }
}

</mosaic_0001>

<llo_original>
// kernel: rbm_forward.3
$region0: #{rbm_forward.3}
  #allocation0 [shape = 'u32[]', space=smem, size = 0x4, offset = 0x4, fixed_abs, tag = 'smem constant byte address 0x4 - core index']
  #allocation1 [shape = 'u32[144,128]{1,0:T(1,128)}', space=vmem, size = 0x12000, scoped, tag = 'internal scratch']
  %s0 = inlined_call_operand.vmem [shape: f32[256,128], index: 0, kind: input, shape index: {}]
  %s1 = inlined_call_operand.vmem [shape: bf16[128,128], index: 1, kind: input, shape index: {}]
  %s2 = inlined_call_operand.vmem [shape: bf16[128,128], index: 2, kind: input, shape index: {}]
  %s3 = inlined_call_operand.vmem [shape: f32[1,128], index: 3, kind: input, shape index: {}]
  %s4 = inlined_call_operand.vmem [shape: f32[1,128], index: 4, kind: input, shape index: {}]
  %s5 = inlined_call_operand.vmem [shape: f32[3,256,128], index: 5, kind: input, shape index: {}]
  %s6 = inlined_call_operand.vmem [shape: f32[3,256,128], index: 6, kind: input, shape index: {}]
  %s7 = inlined_call_operand.vmem [shape: f32[16,128], index: 7, kind: output, shape index: {}]
  %s8 = sld [smem:[#allocation0]]
  $region137: #{rbm_forward.3} parent=0
    _
  %s10 = ssub.s32 1, %s8
  %s11 = scalar_select 0, %s10, %s8
  $region1: #{rbm_forward.3} parent=0
    #allocation2 [shape = 'u8[393216]{0}', space=vmem, size = 0x60000, scoped, tag = 'input window, operand 5']
    #allocation3 [shape = 'u8[393216]{0}', space=vmem, size = 0x60000, scoped, tag = 'input window, operand 6']
    loop: start=0, step=1, limit=4
    $region2: #{rbm_forward.3} parent=1 // loop_pre_header
      _
    $region3: #{rbm_forward.3} parent=1 // loop_header
      %s13 = sphi 0, %s17
      %p14 = scmp.ge.s32.totalorder %s13, 4
      %s23 = sphi 0, %s25
      %s26 = sphi 0, %s23
      %s27 = sphi 0, %s26
      %s43 = sphi 0, %s27
      %s47 = sphi 0, %s47
      %s49 = sphi 0, %s47
      %s50 = sphi 0, %s49
      %s64 = sphi 0, %s50
      %s68 = sphi 0, %s68
      %s70 = sphi 0, %s68
      %s71 = sphi 0, %s70
      %s85 = sphi 0, %s71
      %s89 = sphi 0, %s89
      %s91 = sphi 0, %s89
      %s92 = sphi 0, %s91
      %s106 = sphi 0, %s92
      %s110 = sphi 0, %s110
      %s112 = sphi 0, %s110
      %s113 = sphi 0, %s112
      %s127 = sphi 0, %s113
      %s133 = sphi 0, %s135
      %s136 = sphi 0, %s133
      %s137 = sphi 0, %s136
      %s153 = sphi 0, %s137
      %s159 = sphi 0, %s161
      %s162 = sphi 0, %s159
      %s163 = sphi 0, %s162
      %s179 = sphi 0, %s163
      %s185 = sphi 0, %s187
      %s188 = sphi 0, %s185
      %s189 = sphi 0, %s188
      %s205 = sphi 0, %s189
    $region4: #{rbm_forward.3} parent=1 // loop_header_branch
      %16 = sbr.rel (%p14) target = $region8
    $region5: #{rbm_forward.3} parent=1 // loop_body
      %s18 = ssub.s32 %s13, 1
      %s19 = ssub.s32 %s13, 2
      %s20 = sadd.s32 %s13, 1
      %s21 = ssub.s32 %s13, %s20
      %p22 = scmp.eq.s32.totalorder %s21, 0
      %s24 = sadd.s32 %s23, 1
      %s25 = scalar_select %p22, %s23, %s24
      %p28 = pneg %p22
      %p29 = scmp.eq.s32.totalorder %s13, 1
      %p30 = por %p28, %p29
      %p31 = scmp.ne.s32.totalorder %s23, %s26
      %p32 = scmp.eq.s32.totalorder %s13, 0
      %p33 = por %p31, %p32
      %p34 = scmp.ne.s32.totalorder %s23, %s26
      %p35 = scmp.eq.s32.totalorder %s18, 1
      %p36 = por %p34, %p35
      %p37 = scmp.ne.s32.totalorder %s26, %s27
      %p38 = scmp.eq.s32.totalorder %s18, 0
      %p39 = por %p37, %p38
      %p40 = scmp.ne.s32.totalorder %s26, %s27
      %p41 = scmp.eq.s32.totalorder %s19, 1
      %p42 = por %p40, %p41
      %p44 = scmp.ne.s32.totalorder %s27, %s43
      %p45 = scmp.eq.s32.totalorder %s19, 0
      %p46 = por %p44, %p45
      %s48 = sadd.s32 %s47, 1
      %p51 = scmp.eq.s32.totalorder %s13, 1
      %p52 = scmp.ne.s32.totalorder %s47, %s49
      %p53 = scmp.eq.s32.totalorder %s13, 0
      %p54 = por %p52, %p53
      %p55 = scmp.ne.s32.totalorder %s47, %s49
      %p56 = scmp.eq.s32.totalorder %s18, 1
      %p57 = por %p55, %p56
      %p58 = scmp.ne.s32.totalorder %s49, %s50
      %p59 = scmp.eq.s32.totalorder %s18, 0
      %p60 = por %p58, %p59
      %p61 = scmp.ne.s32.totalorder %s49, %s50
      %p62 = scmp.eq.s32.totalorder %s19, 1
      %p63 = por %p61, %p62
      %p65 = scmp.ne.s32.totalorder %s50, %s64
      %p66 = scmp.eq.s32.totalorder %s19, 0
      %p67 = por %p65, %p66
      %s69 = sadd.s32 %s68, 1
      %p72 = scmp.eq.s32.totalorder %s13, 1
      %p73 = scmp.ne.s32.totalorder %s68, %s70
      %p74 = scmp.eq.s32.totalorder %s13, 0
      %p75 = por %p73, %p74
      %p76 = scmp.ne.s32.totalorder %s68, %s70
      %p77 = scmp.eq.s32.totalorder %s18, 1
      %p78 = por %p76, %p77
      %p79 = scmp.ne.s32.totalorder %s70, %s71
      %p80 = scmp.eq.s32.totalorder %s18, 0
      %p81 = por %p79, %p80
      %p82 = scmp.ne.s32.totalorder %s70, %s71
      %p83 = scmp.eq.s32.totalorder %s19, 1
      %p84 = por %p82, %p83
      %p86 = scmp.ne.s32.totalorder %s71, %s85
      %p87 = scmp.eq.s32.totalorder %s19, 0
      %p88 = por %p86, %p87
      %s90 = sadd.s32 %s89, 1
      %p93 = scmp.eq.s32.totalorder %s13, 1
      %p94 = scmp.ne.s32.totalorder %s89, %s91
      %p95 = scmp.eq.s32.totalorder %s13, 0
      %p96 = por %p94, %p95
      %p97 = scmp.ne.s32.totalorder %s89, %s91
      %p98 = scmp.eq.s32.totalorder %s18, 1
      %p99 = por %p97, %p98
      %p100 = scmp.ne.s32.totalorder %s91, %s92
      %p101 = scmp.eq.s32.totalorder %s18, 0
      %p102 = por %p100, %p101
      %p103 = scmp.ne.s32.totalorder %s91, %s92
      %p104 = scmp.eq.s32.totalorder %s19, 1
      %p105 = por %p103, %p104
      %p107 = scmp.ne.s32.totalorder %s92, %s106
      %p108 = scmp.eq.s32.totalorder %s19, 0
      %p109 = por %p107, %p108
      %s111 = sadd.s32 %s110, 1
      %p114 = scmp.eq.s32.totalorder %s13, 1
      %p115 = scmp.ne.s32.totalorder %s110, %s112
      %p116 = scmp.eq.s32.totalorder %s13, 0
      %p117 = por %p115, %p116
      %p118 = scmp.ne.s32.totalorder %s110, %s112
      %p119 = scmp.eq.s32.totalorder %s18, 1
      %p120 = por %p118, %p119
      %p121 = scmp.ne.s32.totalorder %s112, %s113
      %p122 = scmp.eq.s32.totalorder %s18, 0
      %p123 = por %p121, %p122
      %p124 = scmp.ne.s32.totalorder %s112, %s113
      %p125 = scmp.eq.s32.totalorder %s19, 1
      %p126 = por %p124, %p125
      %p128 = scmp.ne.s32.totalorder %s113, %s127
      %p129 = scmp.eq.s32.totalorder %s19, 0
      %p130 = por %p128, %p129
      %s131 = ssub.s32 %s13, %s20
      %p132 = scmp.eq.s32.totalorder %s131, 0
      %s134 = sadd.s32 %s133, 1
      %s135 = scalar_select %p132, %s133, %s134
      %p138 = pneg %p132
      %p139 = scmp.eq.s32.totalorder %s13, 1
      %p140 = por %p138, %p139
      %p141 = scmp.ne.s32.totalorder %s133, %s136
      %p142 = scmp.eq.s32.totalorder %s13, 0
      %p143 = por %p141, %p142
      %p144 = scmp.ne.s32.totalorder %s133, %s136
      %p145 = scmp.eq.s32.totalorder %s18, 1
      %p146 = por %p144, %p145
      %p147 = scmp.ne.s32.totalorder %s136, %s137
      %p148 = scmp.eq.s32.totalorder %s18, 0
      %p149 = por %p147, %p148
      %p150 = scmp.ne.s32.totalorder %s136, %s137
      %p151 = scmp.eq.s32.totalorder %s19, 1
      %p152 = por %p150, %p151
      %p154 = scmp.ne.s32.totalorder %s137, %s153
      %p155 = scmp.eq.s32.totalorder %s19, 0
      %p156 = por %p154, %p155
      %s157 = ssub.s32 %s13, %s20
      %p158 = scmp.eq.s32.totalorder %s157, 0
      %s160 = sadd.s32 %s159, 1
      %s161 = scalar_select %p158, %s159, %s160
      %p164 = pneg %p158
      %p165 = scmp.eq.s32.totalorder %s13, 1
      %p166 = por %p164, %p165
      %p167 = scmp.ne.s32.totalorder %s159, %s162
      %p168 = scmp.eq.s32.totalorder %s13, 0
      %p169 = por %p167, %p168
      %p170 = scmp.ne.s32.totalorder %s159, %s162
      %p171 = scmp.eq.s32.totalorder %s18, 1
      %p172 = por %p170, %p171
      %p173 = scmp.ne.s32.totalorder %s162, %s163
      %p174 = scmp.eq.s32.totalorder %s18, 0
      %p175 = por %p173, %p174
      %p176 = scmp.ne.s32.totalorder %s162, %s163
      %p177 = scmp.eq.s32.totalorder %s19, 1
      %p178 = por %p176, %p177
      %p180 = scmp.ne.s32.totalorder %s163, %s179
      %p181 = scmp.eq.s32.totalorder %s19, 0
      %p182 = por %p180, %p181
      %s183 = ssub.s32 %s13, %s20
      %p184 = scmp.eq.s32.totalorder %s183, 0
      %s186 = sadd.s32 %s185, 1
      %s187 = scalar_select %p184, %s185, %s186
      %p190 = pneg %p184
      %p191 = scmp.eq.s32.totalorder %s13, 1
      %p192 = por %p190, %p191
      %p193 = scmp.ne.s32.totalorder %s185, %s188
      %p194 = scmp.eq.s32.totalorder %s13, 0
      %p195 = por %p193, %p194
      %p196 = scmp.ne.s32.totalorder %s185, %s188
      %p197 = scmp.eq.s32.totalorder %s18, 1
      %p198 = por %p196, %p197
      %p199 = scmp.ne.s32.totalorder %s188, %s189
      %p200 = scmp.eq.s32.totalorder %s18, 0
      %p201 = por %p199, %p200
      %p202 = scmp.ne.s32.totalorder %s188, %s189
      %p203 = scmp.eq.s32.totalorder %s19, 1
      %p204 = por %p202, %p203
      %p206 = scmp.ne.s32.totalorder %s189, %s205
      %p207 = scmp.eq.s32.totalorder %s19, 0
      %p208 = por %p206, %p207
      %p209 = scmp.le.s32.totalorder 1, %s13
      %p210 = scmp.lt.s32.totalorder %s13, 3
      %p211 = pnand %p209, %p210
      %p212 = pneg %p211
      // Predicated region
      $region9: #{rbm_forward.3} parent=5 // pred_check
        _
      $region10: #{rbm_forward.3} parent=5 // pred_check_branch
        %214 = sbr.rel (%p211) target = $region12
      $region11: #{rbm_forward.3} parent=5 // pred_region
        %s215 = ssub.s32 %s13, 1
        // Predicated region
        $region13: #{rbm_forward.3} parent=11 // pred_check
          %p216 = pneg %p60
        $region14: #{rbm_forward.3} parent=11 // pred_check_branch
          %218 = sbr.rel (%p216) target = $region16
        $region15: #{rbm_forward.3} parent=11 // pred_region
          _
        $region16: #{rbm_forward.3} parent=11 // pred_fallthru
          _
        // Predicated region
        $region17: #{rbm_forward.3} parent=11 // pred_check
          %p219 = pneg %p81
        $region18: #{rbm_forward.3} parent=11 // pred_check_branch
          %221 = sbr.rel (%p219) target = $region20
        $region19: #{rbm_forward.3} parent=11 // pred_region
          _
        $region20: #{rbm_forward.3} parent=11 // pred_fallthru
          _
        // Predicated region
        $region21: #{rbm_forward.3} parent=11 // pred_check
          %p222 = pneg %p102
        $region22: #{rbm_forward.3} parent=11 // pred_check_branch
          %224 = sbr.rel (%p222) target = $region24
        $region23: #{rbm_forward.3} parent=11 // pred_region
          _
        $region24: #{rbm_forward.3} parent=11 // pred_fallthru
          _
        // Predicated region
        $region25: #{rbm_forward.3} parent=11 // pred_check
          %p225 = pneg %p123
        $region26: #{rbm_forward.3} parent=11 // pred_check_branch
          %227 = sbr.rel (%p225) target = $region28
        $region27: #{rbm_forward.3} parent=11 // pred_region
          _
        $region28: #{rbm_forward.3} parent=11 // pred_fallthru
          _
      $region12: #{rbm_forward.3} parent=5 // pred_fallthru
        _
      %p228 = scmp.lt.s32.totalorder %s13, 2
      // Predicated region
      $region29: #{rbm_forward.3} parent=5 // pred_check
        %p229 = pneg %p228
      $region30: #{rbm_forward.3} parent=5 // pred_check_branch
        %231 = sbr.rel (%p229) target = $region32
      $region31: #{rbm_forward.3} parent=5 // pred_region
        // Predicated region
        $region33: #{rbm_forward.3} parent=31 // pred_check
          %p232 = pneg %p33
        $region34: #{rbm_forward.3} parent=31 // pred_check_branch
          %234 = sbr.rel (%p232) target = $region36
        $region35: #{rbm_forward.3} parent=31 // pred_region
          %s235 = smul.u32 16, %s13
          %p236 = scmp.lt.s32.totalorder %s235, 31
          %s237 = scalar_select %p236, %s235, 31
          %s238 = smul.addr %s237, 8
          %s239 = scalar_lea.vmem %s0, %s238
          %s240 = smul.u32 16, %s13
        $region36: #{rbm_forward.3} parent=31 // pred_fallthru
          _
        // Predicated region
        $region37: #{rbm_forward.3} parent=31 // pred_check
          %p241 = pneg %p143
        $region38: #{rbm_forward.3} parent=31 // pred_check_branch
          %243 = sbr.rel (%p241) target = $region40
        $region39: #{rbm_forward.3} parent=31 // pred_region
          %s244 = sand.u32 %s133, 1
          %s245 = sand.u32 %s133, 1
          %s246 = smul.addr %s245, 384
          %s247 = scalar_lea.vmem [#allocation2], %s246
          %s248 = smul.u32 16, %s13
          %s249 = smul.addr %s248, 8
          %s250 = scalar_lea.vmem %s5, %s249
          // Predicated region
          $region41: #{rbm_forward.3} parent=39 // pred_check
            _
          $region42: #{rbm_forward.3} parent=39 // pred_check_branch
            %252 = sbr.rel (0) target = $region44
          $region43: #{rbm_forward.3} parent=39 // pred_region
            // Predicated region
            $region45: #{rbm_forward.3} parent=43 // pred_check
              _
            $region46: #{rbm_forward.3} parent=43 // pred_check_branch
              %254 = sbr.rel (0) target = $region48
            $region47: #{rbm_forward.3} parent=43 // pred_region
              // Predicated region
              $region60: #{rbm_forward.3} parent=47 // pred_check
                _
              $region61: #{rbm_forward.3} parent=47 // pred_check_branch
                %364 = sbr.rel (0) target = $region63
              $region62: #{rbm_forward.3} parent=47 // pred_region
                loop: start=0, step=1, limit=1
                $region64: #{rbm_forward.3} parent=62 // loop_pre_header
                  _
                $region65: #{rbm_forward.3} parent=62 // loop_header
                  %s366 = sphi 0, %s370
                  %p367 = scmp.ge.s32.totalorder %s366, 1
                  %s371 = sphi %s250, %s250
                  %s372 = sphi %s247, %s247
                $region66: #{rbm_forward.3} parent=62 // loop_header_branch
                  %369 = sbr.rel (%p367) target = $region70
                $region67: #{rbm_forward.3} parent=62 // loop_body
                  %v373 = vld [vmem:[%s371] sm:$0xff]
                  %374 = vst [vmem:[%s372] sm:$0xff] %v373
                  %v375 = vld [vmem:[%s371 + $0x8] sm:$0xff]
                  %376 = vst [vmem:[%s372 + $0x8] sm:$0xff] %v375
                  %v377 = vld [vmem:[%s371 + $0x10] sm:$0xff]
                  %378 = vst [vmem:[%s372 + $0x10] sm:$0xff] %v377
                  %v379 = vld [vmem:[%s371 + $0x18] sm:$0xff]
                  %380 = vst [vmem:[%s372 + $0x18] sm:$0xff] %v379
                  %v381 = vld [vmem:[%s371 + $0x20] sm:$0xff]
                  %382 = vst [vmem:[%s372 + $0x20] sm:$0xff] %v381
                  %v383 = vld [vmem:[%s371 + $0x28] sm:$0xff]
                  %384 = vst [vmem:[%s372 + $0x28] sm:$0xff] %v383
                  %v385 = vld [vmem:[%s371 + $0x30] sm:$0xff]
                  %386 = vst [vmem:[%s372 + $0x30] sm:$0xff] %v385
                  %v387 = vld [vmem:[%s371 + $0x38] sm:$0xff]
                  %388 = vst [vmem:[%s372 + $0x38] sm:$0xff] %v387
                  %v389 = vld [vmem:[%s371 + $0x40] sm:$0xff]
                  %390 = vst [vmem:[%s372 + $0x40] sm:$0xff] %v389
                  %v391 = vld [vmem:[%s371 + $0x48] sm:$0xff]
                  %392 = vst [vmem:[%s372 + $0x48] sm:$0xff] %v391
                  %v393 = vld [vmem:[%s371 + $0x50] sm:$0xff]
                  %394 = vst [vmem:[%s372 + $0x50] sm:$0xff] %v393
                  %v395 = vld [vmem:[%s371 + $0x58] sm:$0xff]
                  %396 = vst [vmem:[%s372 + $0x58] sm:$0xff] %v395
                  %v397 = vld [vmem:[%s371 + $0x60] sm:$0xff]
                  %398 = vst [vmem:[%s372 + $0x60] sm:$0xff] %v397
                  %v399 = vld [vmem:[%s371 + $0x68] sm:$0xff]
                  %400 = vst [vmem:[%s372 + $0x68] sm:$0xff] %v399
                  %v401 = vld [vmem:[%s371 + $0x70] sm:$0xff]
                  %402 = vst [vmem:[%s372 + $0x70] sm:$0xff] %v401
                  %v403 = vld [vmem:[%s371 + $0x78] sm:$0xff]
                  %404 = vst [vmem:[%s372 + $0x78] sm:$0xff] %v403
                  %v405 = vld [vmem:[%s371 + $0x100] sm:$0xff]
                  %406 = vst [vmem:[%s372 + $0x80] sm:$0xff] %v405
                  %v407 = vld [vmem:[%s371 + $0x108] sm:$0xff]
                  %408 = vst [vmem:[%s372 + $0x88] sm:$0xff] %v407
                  %v409 = vld [vmem:[%s371 + $0x110] sm:$0xff]
                  %410 = vst [vmem:[%s372 + $0x90] sm:$0xff] %v409
                  %v411 = vld [vmem:[%s371 + $0x118] sm:$0xff]
                  %412 = vst [vmem:[%s372 + $0x98] sm:$0xff] %v411
                  %v413 = vld [vmem:[%s371 + $0x120] sm:$0xff]
                  %414 = vst [vmem:[%s372 + $0xa0] sm:$0xff] %v413
                  %v415 = vld [vmem:[%s371 + $0x128] sm:$0xff]
                  %416 = vst [vmem:[%s372 + $0xa8] sm:$0xff] %v415
                  %v417 = vld [vmem:[%s371 + $0x130] sm:$0xff]
                  %418 = vst [vmem:[%s372 + $0xb0] sm:$0xff] %v417
                  %v419 = vld [vmem:[%s371 + $0x138] sm:$0xff]
                  %420 = vst [vmem:[%s372 + $0xb8] sm:$0xff] %v419
                  %v421 = vld [vmem:[%s371 + $0x140] sm:$0xff]
                  %422 = vst [vmem:[%s372 + $0xc0] sm:$0xff] %v421
                  %v423 = vld [vmem:[%s371 + $0x148] sm:$0xff]
                  %424 = vst [vmem:[%s372 + $0xc8] sm:$0xff] %v423
                  %v425 = vld [vmem:[%s371 + $0x150] sm:$0xff]
                  %426 = vst [vmem:[%s372 + $0xd0] sm:$0xff] %v425
                  %v427 = vld [vmem:[%s371 + $0x158] sm:$0xff]
                  %428 = vst [vmem:[%s372 + $0xd8] sm:$0xff] %v427
                  %v429 = vld [vmem:[%s371 + $0x160] sm:$0xff]
                  %430 = vst [vmem:[%s372 + $0xe0] sm:$0xff] %v429
                  %v431 = vld [vmem:[%s371 + $0x168] sm:$0xff]
                  %432 = vst [vmem:[%s372 + $0xe8] sm:$0xff] %v431
                  %v433 = vld [vmem:[%s371 + $0x170] sm:$0xff]
                  %434 = vst [vmem:[%s372 + $0xf0] sm:$0xff] %v433
                  %v435 = vld [vmem:[%s371 + $0x178] sm:$0xff]
                  %436 = vst [vmem:[%s372 + $0xf8] sm:$0xff] %v435
                  %v437 = vld [vmem:[%s371 + $0x200] sm:$0xff]
                  %438 = vst [vmem:[%s372 + $0x100] sm:$0xff] %v437
                  %v439 = vld [vmem:[%s371 + $0x208] sm:$0xff]
                  %440 = vst [vmem:[%s372 + $0x108] sm:$0xff] %v439
                  %v441 = vld [vmem:[%s371 + $0x210] sm:$0xff]
                  %442 = vst [vmem:[%s372 + $0x110] sm:$0xff] %v441
                  %v443 = vld [vmem:[%s371 + $0x218] sm:$0xff]
                  %444 = vst [vmem:[%s372 + $0x118] sm:$0xff] %v443
                  %v445 = vld [vmem:[%s371 + $0x220] sm:$0xff]
                  %446 = vst [vmem:[%s372 + $0x120] sm:$0xff] %v445
                  %v447 = vld [vmem:[%s371 + $0x228] sm:$0xff]
                  %448 = vst [vmem:[%s372 + $0x128] sm:$0xff] %v447
                  %v449 = vld [vmem:[%s371 + $0x230] sm:$0xff]
                  %450 = vst [vmem:[%s372 + $0x130] sm:$0xff] %v449
                  %v451 = vld [vmem:[%s371 + $0x238] sm:$0xff]
                  %452 = vst [vmem:[%s372 + $0x138] sm:$0xff] %v451
                  %v453 = vld [vmem:[%s371 + $0x240] sm:$0xff]
                  %454 = vst [vmem:[%s372 + $0x140] sm:$0xff] %v453
                  %v455 = vld [vmem:[%s371 + $0x248] sm:$0xff]
                  %456 = vst [vmem:[%s372 + $0x148] sm:$0xff] %v455
                  %v457 = vld [vmem:[%s371 + $0x250] sm:$0xff]
                  %458 = vst [vmem:[%s372 + $0x150] sm:$0xff] %v457
                  %v459 = vld [vmem:[%s371 + $0x258] sm:$0xff]
                  %460 = vst [vmem:[%s372 + $0x158] sm:$0xff] %v459
                  %v461 = vld [vmem:[%s371 + $0x260] sm:$0xff]
                  %462 = vst [vmem:[%s372 + $0x160] sm:$0xff] %v461
                  %v463 = vld [vmem:[%s371 + $0x268] sm:$0xff]
                  %464 = vst [vmem:[%s372 + $0x168] sm:$0xff] %v463
                  %v465 = vld [vmem:[%s371 + $0x270] sm:$0xff]
                  %466 = vst [vmem:[%s372 + $0x170] sm:$0xff] %v465
                  %v467 = vld [vmem:[%s371 + $0x278] sm:$0xff]
                  %468 = vst [vmem:[%s372 + $0x178] sm:$0xff] %v467
                $region68: #{rbm_forward.3} parent=62 // loop_footer
                  %s370 = sadd.s32 1, %s366
                $region69: #{rbm_forward.3} parent=62 // loop_footer_branch
                  %365 = sbr.rel target = $region65
                $region70: #{rbm_forward.3} parent=62 // loop_exit
                  _
              $region63: #{rbm_forward.3} parent=47 // pred_fallthru
                _
              // Predicated region
              $region71: #{rbm_forward.3} parent=47 // pred_check
                _
              $region72: #{rbm_forward.3} parent=47 // pred_check_branch
                %470 = sbr.rel target = $region74
              $region73: #{rbm_forward.3} parent=47 // pred_region
                _
              $region74: #{rbm_forward.3} parent=47 // pred_fallthru
                _
            $region48: #{rbm_forward.3} parent=43 // pred_fallthru
              _
            // Predicated region
            $region49: #{rbm_forward.3} parent=43 // pred_check
              _
            $region50: #{rbm_forward.3} parent=43 // pred_check_branch
              %256 = sbr.rel target = $region52
            $region51: #{rbm_forward.3} parent=43 // pred_region
              %s258 = ssub.s32 256, 1
              loop: start=0, step=1, limit=1
              $region53: #{rbm_forward.3} parent=51 // loop_pre_header
                _
              $region54: #{rbm_forward.3} parent=51 // loop_header
                %s260 = sphi 0, %s264
                %p261 = scmp.ge.s32.totalorder %s260, 1
                %s265 = sphi %s250, %s250
                %s266 = sphi %s247, %s247
              $region55: #{rbm_forward.3} parent=51 // loop_header_branch
                %263 = sbr.rel (%p261) target = $region59
              $region56: #{rbm_forward.3} parent=51 // loop_body
                %v267 = vld [vmem:[%s265] sm:%s258]
                %268 = vst [vmem:[%s266] sm:%s258] %v267
                %v269 = vld [vmem:[%s265 + $0x8] sm:%s258]
                %270 = vst [vmem:[%s266 + $0x8] sm:%s258] %v269
                %v271 = vld [vmem:[%s265 + $0x10] sm:%s258]
                %272 = vst [vmem:[%s266 + $0x10] sm:%s258] %v271
                %v273 = vld [vmem:[%s265 + $0x18] sm:%s258]
                %274 = vst [vmem:[%s266 + $0x18] sm:%s258] %v273
                %v275 = vld [vmem:[%s265 + $0x20] sm:%s258]
                %276 = vst [vmem:[%s266 + $0x20] sm:%s258] %v275
                %v277 = vld [vmem:[%s265 + $0x28] sm:%s258]
                %278 = vst [vmem:[%s266 + $0x28] sm:%s258] %v277
                %v279 = vld [vmem:[%s265 + $0x30] sm:%s258]
                %280 = vst [vmem:[%s266 + $0x30] sm:%s258] %v279
                %v281 = vld [vmem:[%s265 + $0x38] sm:%s258]
                %282 = vst [vmem:[%s266 + $0x38] sm:%s258] %v281
                %v283 = vld [vmem:[%s265 + $0x40] sm:%s258]
                %284 = vst [vmem:[%s266 + $0x40] sm:%s258] %v283
                %v285 = vld [vmem:[%s265 + $0x48] sm:%s258]
                %286 = vst [vmem:[%s266 + $0x48] sm:%s258] %v285
                %v287 = vld [vmem:[%s265 + $0x50] sm:%s258]
                %288 = vst [vmem:[%s266 + $0x50] sm:%s258] %v287
                %v289 = vld [vmem:[%s265 + $0x58] sm:%s258]
                %290 = vst [vmem:[%s266 + $0x58] sm:%s258] %v289
                %v291 = vld [vmem:[%s265 + $0x60] sm:%s258]
                %292 = vst [vmem:[%s266 + $0x60] sm:%s258] %v291
                %v293 = vld [vmem:[%s265 + $0x68] sm:%s258]
                %294 = vst [vmem:[%s266 + $0x68] sm:%s258] %v293
                %v295 = vld [vmem:[%s265 + $0x70] sm:%s258]
                %296 = vst [vmem:[%s266 + $0x70] sm:%s258] %v295
                %v297 = vld [vmem:[%s265 + $0x78] sm:%s258]
                %298 = vst [vmem:[%s266 + $0x78] sm:%s258] %v297
                %v299 = vld [vmem:[%s265 + $0x100] sm:%s258]
                %300 = vst [vmem:[%s266 + $0x80] sm:%s258] %v299
                %v301 = vld [vmem:[%s265 + $0x108] sm:%s258]
                %302 = vst [vmem:[%s266 + $0x88] sm:%s258] %v301
                %v303 = vld [vmem:[%s265 + $0x110] sm:%s258]
                %304 = vst [vmem:[%s266 + $0x90] sm:%s258] %v303
                %v305 = vld [vmem:[%s265 + $0x118] sm:%s258]
                %306 = vst [vmem:[%s266 + $0x98] sm:%s258] %v305
                %v307 = vld [vmem:[%s265 + $0x120] sm:%s258]
                %308 = vst [vmem:[%s266 + $0xa0] sm:%s258] %v307
                %v309 = vld [vmem:[%s265 + $0x128] sm:%s258]
                %310 = vst [vmem:[%s266 + $0xa8] sm:%s258] %v309
                %v311 = vld [vmem:[%s265 + $0x130] sm:%s258]
                %312 = vst [vmem:[%s266 + $0xb0] sm:%s258] %v311
                %v313 = vld [vmem:[%s265 + $0x138] sm:%s258]
                %314 = vst [vmem:[%s266 + $0xb8] sm:%s258] %v313
                %v315 = vld [vmem:[%s265 + $0x140] sm:%s258]
                %316 = vst [vmem:[%s266 + $0xc0] sm:%s258] %v315
                %v317 = vld [vmem:[%s265 + $0x148] sm:%s258]
                %318 = vst [vmem:[%s266 + $0xc8] sm:%s258] %v317
                %v319 = vld [vmem:[%s265 + $0x150] sm:%s258]
                %320 = vst [vmem:[%s266 + $0xd0] sm:%s258] %v319
                %v321 = vld [vmem:[%s265 + $0x158] sm:%s258]
                %322 = vst [vmem:[%s266 + $0xd8] sm:%s258] %v321
                %v323 = vld [vmem:[%s265 + $0x160] sm:%s258]
                %324 = vst [vmem:[%s266 + $0xe0] sm:%s258] %v323
                %v325 = vld [vmem:[%s265 + $0x168] sm:%s258]
                %326 = vst [vmem:[%s266 + $0xe8] sm:%s258] %v325
                %v327 = vld [vmem:[%s265 + $0x170] sm:%s258]
                %328 = vst [vmem:[%s266 + $0xf0] sm:%s258] %v327
                %v329 = vld [vmem:[%s265 + $0x178] sm:%s258]
                %330 = vst [vmem:[%s266 + $0xf8] sm:%s258] %v329
                %v331 = vld [vmem:[%s265 + $0x200] sm:%s258]
                %332 = vst [vmem:[%s266 + $0x100] sm:%s258] %v331
                %v333 = vld [vmem:[%s265 + $0x208] sm:%s258]
                %334 = vst [vmem:[%s266 + $0x108] sm:%s258] %v333
                %v335 = vld [vmem:[%s265 + $0x210] sm:%s258]
                %336 = vst [vmem:[%s266 + $0x110] sm:%s258] %v335
                %v337 = vld [vmem:[%s265 + $0x218] sm:%s258]
                %338 = vst [vmem:[%s266 + $0x118] sm:%s258] %v337
                %v339 = vld [vmem:[%s265 + $0x220] sm:%s258]
                %340 = vst [vmem:[%s266 + $0x120] sm:%s258] %v339
                %v341 = vld [vmem:[%s265 + $0x228] sm:%s258]
                %342 = vst [vmem:[%s266 + $0x128] sm:%s258] %v341
                %v343 = vld [vmem:[%s265 + $0x230] sm:%s258]
                %344 = vst [vmem:[%s266 + $0x130] sm:%s258] %v343
                %v345 = vld [vmem:[%s265 + $0x238] sm:%s258]
                %346 = vst [vmem:[%s266 + $0x138] sm:%s258] %v345
                %v347 = vld [vmem:[%s265 + $0x240] sm:%s258]
                %348 = vst [vmem:[%s266 + $0x140] sm:%s258] %v347
                %v349 = vld [vmem:[%s265 + $0x248] sm:%s258]
                %350 = vst [vmem:[%s266 + $0x148] sm:%s258] %v349
                %v351 = vld [vmem:[%s265 + $0x250] sm:%s258]
                %352 = vst [vmem:[%s266 + $0x150] sm:%s258] %v351
                %v353 = vld [vmem:[%s265 + $0x258] sm:%s258]
                %354 = vst [vmem:[%s266 + $0x158] sm:%s258] %v353
                %v355 = vld [vmem:[%s265 + $0x260] sm:%s258]
                %356 = vst [vmem:[%s266 + $0x160] sm:%s258] %v355
                %v357 = vld [vmem:[%s265 + $0x268] sm:%s258]
                %358 = vst [vmem:[%s266 + $0x168] sm:%s258] %v357
                %v359 = vld [vmem:[%s265 + $0x270] sm:%s258]
                %360 = vst [vmem:[%s266 + $0x170] sm:%s258] %v359
                %v361 = vld [vmem:[%s265 + $0x278] sm:%s258]
                %362 = vst [vmem:[%s266 + $0x178] sm:%s258] %v361
              $region57: #{rbm_forward.3} parent=51 // loop_footer
                %s264 = sadd.s32 1, %s260
              $region58: #{rbm_forward.3} parent=51 // loop_footer_branch
                %259 = sbr.rel target = $region54
              $region59: #{rbm_forward.3} parent=51 // loop_exit
                _
            $region52: #{rbm_forward.3} parent=43 // pred_fallthru
              _
          $region44: #{rbm_forward.3} parent=39 // pred_fallthru
            _
          %471 = vnop
        $region40: #{rbm_forward.3} parent=31 // pred_fallthru
          _
        // Predicated region
        $region75: #{rbm_forward.3} parent=31 // pred_check
          %p472 = pneg %p169
        $region76: #{rbm_forward.3} parent=31 // pred_check_branch
          %474 = sbr.rel (%p472) target = $region78
        $region77: #{rbm_forward.3} parent=31 // pred_region
          %s475 = sand.u32 %s159, 1
          %s476 = sand.u32 %s159, 1
          %s477 = smul.addr %s476, 384
          %s478 = scalar_lea.vmem [#allocation3], %s477
          %s479 = smul.u32 16, %s13
          %s480 = smul.addr %s479, 8
          %s481 = scalar_lea.vmem %s6, %s480
          // Predicated region
          $region79: #{rbm_forward.3} parent=77 // pred_check
            _
          $region80: #{rbm_forward.3} parent=77 // pred_check_branch
            %483 = sbr.rel (0) target = $region82
          $region81: #{rbm_forward.3} parent=77 // pred_region
            // Predicated region
            $region83: #{rbm_forward.3} parent=81 // pred_check
              _
            $region84: #{rbm_forward.3} parent=81 // pred_check_branch
              %485 = sbr.rel (0) target = $region86
            $region85: #{rbm_forward.3} parent=81 // pred_region
              // Predicated region
              $region98: #{rbm_forward.3} parent=85 // pred_check
                _
              $region99: #{rbm_forward.3} parent=85 // pred_check_branch
                %595 = sbr.rel (0) target = $region101
              $region100: #{rbm_forward.3} parent=85 // pred_region
                loop: start=0, step=1, limit=1
                $region102: #{rbm_forward.3} parent=100 // loop_pre_header
                  _
                $region103: #{rbm_forward.3} parent=100 // loop_header
                  %s597 = sphi 0, %s601
                  %p598 = scmp.ge.s32.totalorder %s597, 1
                  %s602 = sphi %s481, %s481
                  %s603 = sphi %s478, %s478
                $region104: #{rbm_forward.3} parent=100 // loop_header_branch
                  %600 = sbr.rel (%p598) target = $region108
                $region105: #{rbm_forward.3} parent=100 // loop_body
                  %v604 = vld [vmem:[%s602] sm:$0xff]
                  %605 = vst [vmem:[%s603] sm:$0xff] %v604
                  %v606 = vld [vmem:[%s602 + $0x8] sm:$0xff]
                  %607 = vst [vmem:[%s603 + $0x8] sm:$0xff] %v606
                  %v608 = vld [vmem:[%s602 + $0x10] sm:$0xff]
                  %609 = vst [vmem:[%s603 + $0x10] sm:$0xff] %v608
                  %v610 = vld [vmem:[%s602 + $0x18] sm:$0xff]
                  %611 = vst [vmem:[%s603 + $0x18] sm:$0xff] %v610
                  %v612 = vld [vmem:[%s602 + $0x20] sm:$0xff]
                  %613 = vst [vmem:[%s603 + $0x20] sm:$0xff] %v612
                  %v614 = vld [vmem:[%s602 + $0x28] sm:$0xff]
                  %615 = vst [vmem:[%s603 + $0x28] sm:$0xff] %v614
                  %v616 = vld [vmem:[%s602 + $0x30] sm:$0xff]
                  %617 = vst [vmem:[%s603 + $0x30] sm:$0xff] %v616
                  %v618 = vld [vmem:[%s602 + $0x38] sm:$0xff]
                  %619 = vst [vmem:[%s603 + $0x38] sm:$0xff] %v618
                  %v620 = vld [vmem:[%s602 + $0x40] sm:$0xff]
                  %621 = vst [vmem:[%s603 + $0x40] sm:$0xff] %v620
                  %v622 = vld [vmem:[%s602 + $0x48] sm:$0xff]
                  %623 = vst [vmem:[%s603 + $0x48] sm:$0xff] %v622
                  %v624 = vld [vmem:[%s602 + $0x50] sm:$0xff]
                  %625 = vst [vmem:[%s603 + $0x50] sm:$0xff] %v624
                  %v626 = vld [vmem:[%s602 + $0x58] sm:$0xff]
                  %627 = vst [vmem:[%s603 + $0x58] sm:$0xff] %v626
                  %v628 = vld [vmem:[%s602 + $0x60] sm:$0xff]
                  %629 = vst [vmem:[%s603 + $0x60] sm:$0xff] %v628
                  %v630 = vld [vmem:[%s602 + $0x68] sm:$0xff]
                  %631 = vst [vmem:[%s603 + $0x68] sm:$0xff] %v630
                  %v632 = vld [vmem:[%s602 + $0x70] sm:$0xff]
                  %633 = vst [vmem:[%s603 + $0x70] sm:$0xff] %v632
                  %v634 = vld [vmem:[%s602 + $0x78] sm:$0xff]
                  %635 = vst [vmem:[%s603 + $0x78] sm:$0xff] %v634
                  %v636 = vld [vmem:[%s602 + $0x100] sm:$0xff]
                  %637 = vst [vmem:[%s603 + $0x80] sm:$0xff] %v636
                  %v638 = vld [vmem:[%s602 + $0x108] sm:$0xff]
                  %639 = vst [vmem:[%s603 + $0x88] sm:$0xff] %v638
                  %v640 = vld [vmem:[%s602 + $0x110] sm:$0xff]
                  %641 = vst [vmem:[%s603 + $0x90] sm:$0xff] %v640
                  %v642 = vld [vmem:[%s602 + $0x118] sm:$0xff]
                  %643 = vst [vmem:[%s603 + $0x98] sm:$0xff] %v642
                  %v644 = vld [vmem:[%s602 + $0x120] sm:$0xff]
                  %645 = vst [vmem:[%s603 + $0xa0] sm:$0xff] %v644
                  %v646 = vld [vmem:[%s602 + $0x128] sm:$0xff]
                  %647 = vst [vmem:[%s603 + $0xa8] sm:$0xff] %v646
                  %v648 = vld [vmem:[%s602 + $0x130] sm:$0xff]
                  %649 = vst [vmem:[%s603 + $0xb0] sm:$0xff] %v648
                  %v650 = vld [vmem:[%s602 + $0x138] sm:$0xff]
                  %651 = vst [vmem:[%s603 + $0xb8] sm:$0xff] %v650
                  %v652 = vld [vmem:[%s602 + $0x140] sm:$0xff]
                  %653 = vst [vmem:[%s603 + $0xc0] sm:$0xff] %v652
                  %v654 = vld [vmem:[%s602 + $0x148] sm:$0xff]
                  %655 = vst [vmem:[%s603 + $0xc8] sm:$0xff] %v654
                  %v656 = vld [vmem:[%s602 + $0x150] sm:$0xff]
                  %657 = vst [vmem:[%s603 + $0xd0] sm:$0xff] %v656
                  %v658 = vld [vmem:[%s602 + $0x158] sm:$0xff]
                  %659 = vst [vmem:[%s603 + $0xd8] sm:$0xff] %v658
                  %v660 = vld [vmem:[%s602 + $0x160] sm:$0xff]
                  %661 = vst [vmem:[%s603 + $0xe0] sm:$0xff] %v660
                  %v662 = vld [vmem:[%s602 + $0x168] sm:$0xff]
                  %663 = vst [vmem:[%s603 + $0xe8] sm:$0xff] %v662
                  %v664 = vld [vmem:[%s602 + $0x170] sm:$0xff]
                  %665 = vst [vmem:[%s603 + $0xf0] sm:$0xff] %v664
                  %v666 = vld [vmem:[%s602 + $0x178] sm:$0xff]
                  %667 = vst [vmem:[%s603 + $0xf8] sm:$0xff] %v666
                  %v668 = vld [vmem:[%s602 + $0x200] sm:$0xff]
                  %669 = vst [vmem:[%s603 + $0x100] sm:$0xff] %v668
                  %v670 = vld [vmem:[%s602 + $0x208] sm:$0xff]
                  %671 = vst [vmem:[%s603 + $0x108] sm:$0xff] %v670
                  %v672 = vld [vmem:[%s602 + $0x210] sm:$0xff]
                  %673 = vst [vmem:[%s603 + $0x110] sm:$0xff] %v672
                  %v674 = vld [vmem:[%s602 + $0x218] sm:$0xff]
                  %675 = vst [vmem:[%s603 + $0x118] sm:$0xff] %v674
                  %v676 = vld [vmem:[%s602 + $0x220] sm:$0xff]
                  %677 = vst [vmem:[%s603 + $0x120] sm:$0xff] %v676
                  %v678 = vld [vmem:[%s602 + $0x228] sm:$0xff]
                  %679 = vst [vmem:[%s603 + $0x128] sm:$0xff] %v678
                  %v680 = vld [vmem:[%s602 + $0x230] sm:$0xff]
                  %681 = vst [vmem:[%s603 + $0x130] sm:$0xff] %v680
                  %v682 = vld [vmem:[%s602 + $0x238] sm:$0xff]
                  %683 = vst [vmem:[%s603 + $0x138] sm:$0xff] %v682
                  %v684 = vld [vmem:[%s602 + $0x240] sm:$0xff]
                  %685 = vst [vmem:[%s603 + $0x140] sm:$0xff] %v684
                  %v686 = vld [vmem:[%s602 + $0x248] sm:$0xff]
                  %687 = vst [vmem:[%s603 + $0x148] sm:$0xff] %v686
                  %v688 = vld [vmem:[%s602 + $0x250] sm:$0xff]
                  %689 = vst [vmem:[%s603 + $0x150] sm:$0xff] %v688
                  %v690 = vld [vmem:[%s602 + $0x258] sm:$0xff]
                  %691 = vst [vmem:[%s603 + $0x158] sm:$0xff] %v690
                  %v692 = vld [vmem:[%s602 + $0x260] sm:$0xff]
                  %693 = vst [vmem:[%s603 + $0x160] sm:$0xff] %v692
                  %v694 = vld [vmem:[%s602 + $0x268] sm:$0xff]
                  %695 = vst [vmem:[%s603 + $0x168] sm:$0xff] %v694
                  %v696 = vld [vmem:[%s602 + $0x270] sm:$0xff]
                  %697 = vst [vmem:[%s603 + $0x170] sm:$0xff] %v696
                  %v698 = vld [vmem:[%s602 + $0x278] sm:$0xff]
                  %699 = vst [vmem:[%s603 + $0x178] sm:$0xff] %v698
                $region106: #{rbm_forward.3} parent=100 // loop_footer
                  %s601 = sadd.s32 1, %s597
                $region107: #{rbm_forward.3} parent=100 // loop_footer_branch
                  %596 = sbr.rel target = $region103
                $region108: #{rbm_forward.3} parent=100 // loop_exit
                  _
              $region101: #{rbm_forward.3} parent=85 // pred_fallthru
                _
              // Predicated region
              $region109: #{rbm_forward.3} parent=85 // pred_check
                _
              $region110: #{rbm_forward.3} parent=85 // pred_check_branch
                %701 = sbr.rel target = $region112
              $region111: #{rbm_forward.3} parent=85 // pred_region
                _
              $region112: #{rbm_forward.3} parent=85 // pred_fallthru
                _
            $region86: #{rbm_forward.3} parent=81 // pred_fallthru
              _
            // Predicated region
            $region87: #{rbm_forward.3} parent=81 // pred_check
              _
            $region88: #{rbm_forward.3} parent=81 // pred_check_branch
              %487 = sbr.rel target = $region90
            $region89: #{rbm_forward.3} parent=81 // pred_region
              %s489 = ssub.s32 256, 1
              loop: start=0, step=1, limit=1
              $region91: #{rbm_forward.3} parent=89 // loop_pre_header
                _
              $region92: #{rbm_forward.3} parent=89 // loop_header
                %s491 = sphi 0, %s495
                %p492 = scmp.ge.s32.totalorder %s491, 1
                %s496 = sphi %s481, %s481
                %s497 = sphi %s478, %s478
              $region93: #{rbm_forward.3} parent=89 // loop_header_branch
                %494 = sbr.rel (%p492) target = $region97
              $region94: #{rbm_forward.3} parent=89 // loop_body
                %v498 = vld [vmem:[%s496] sm:%s489]
                %499 = vst [vmem:[%s497] sm:%s489] %v498
                %v500 = vld [vmem:[%s496 + $0x8] sm:%s489]
                %501 = vst [vmem:[%s497 + $0x8] sm:%s489] %v500
                %v502 = vld [vmem:[%s496 + $0x10] sm:%s489]
                %503 = vst [vmem:[%s497 + $0x10] sm:%s489] %v502
                %v504 = vld [vmem:[%s496 + $0x18] sm:%s489]
                %505 = vst [vmem:[%s497 + $0x18] sm:%s489] %v504
                %v506 = vld [vmem:[%s496 + $0x20] sm:%s489]
                %507 = vst [vmem:[%s497 + $0x20] sm:%s489] %v506
                %v508 = vld [vmem:[%s496 + $0x28] sm:%s489]
                %509 = vst [vmem:[%s497 + $0x28] sm:%s489] %v508
                %v510 = vld [vmem:[%s496 + $0x30] sm:%s489]
                %511 = vst [vmem:[%s497 + $0x30] sm:%s489] %v510
                %v512 = vld [vmem:[%s496 + $0x38] sm:%s489]
                %513 = vst [vmem:[%s497 + $0x38] sm:%s489] %v512
                %v514 = vld [vmem:[%s496 + $0x40] sm:%s489]
                %515 = vst [vmem:[%s497 + $0x40] sm:%s489] %v514
                %v516 = vld [vmem:[%s496 + $0x48] sm:%s489]
                %517 = vst [vmem:[%s497 + $0x48] sm:%s489] %v516
                %v518 = vld [vmem:[%s496 + $0x50] sm:%s489]
                %519 = vst [vmem:[%s497 + $0x50] sm:%s489] %v518
                %v520 = vld [vmem:[%s496 + $0x58] sm:%s489]
                %521 = vst [vmem:[%s497 + $0x58] sm:%s489] %v520
                %v522 = vld [vmem:[%s496 + $0x60] sm:%s489]
                %523 = vst [vmem:[%s497 + $0x60] sm:%s489] %v522
                %v524 = vld [vmem:[%s496 + $0x68] sm:%s489]
                %525 = vst [vmem:[%s497 + $0x68] sm:%s489] %v524
                %v526 = vld [vmem:[%s496 + $0x70] sm:%s489]
                %527 = vst [vmem:[%s497 + $0x70] sm:%s489] %v526
                %v528 = vld [vmem:[%s496 + $0x78] sm:%s489]
                %529 = vst [vmem:[%s497 + $0x78] sm:%s489] %v528
                %v530 = vld [vmem:[%s496 + $0x100] sm:%s489]
                %531 = vst [vmem:[%s497 + $0x80] sm:%s489] %v530
                %v532 = vld [vmem:[%s496 + $0x108] sm:%s489]
                %533 = vst [vmem:[%s497 + $0x88] sm:%s489] %v532
                %v534 = vld [vmem:[%s496 + $0x110] sm:%s489]
                %535 = vst [vmem:[%s497 + $0x90] sm:%s489] %v534
                %v536 = vld [vmem:[%s496 + $0x118] sm:%s489]
                %537 = vst [vmem:[%s497 + $0x98] sm:%s489] %v536
                %v538 = vld [vmem:[%s496 + $0x120] sm:%s489]
                %539 = vst [vmem:[%s497 + $0xa0] sm:%s489] %v538
                %v540 = vld [vmem:[%s496 + $0x128] sm:%s489]
                %541 = vst [vmem:[%s497 + $0xa8] sm:%s489] %v540
                %v542 = vld [vmem:[%s496 + $0x130] sm:%s489]
                %543 = vst [vmem:[%s497 + $0xb0] sm:%s489] %v542
                %v544 = vld [vmem:[%s496 + $0x138] sm:%s489]
                %545 = vst [vmem:[%s497 + $0xb8] sm:%s489] %v544
                %v546 = vld [vmem:[%s496 + $0x140] sm:%s489]
                %547 = vst [vmem:[%s497 + $0xc0] sm:%s489] %v546
                %v548 = vld [vmem:[%s496 + $0x148] sm:%s489]
                %549 = vst [vmem:[%s497 + $0xc8] sm:%s489] %v548
                %v550 = vld [vmem:[%s496 + $0x150] sm:%s489]
                %551 = vst [vmem:[%s497 + $0xd0] sm:%s489] %v550
                %v552 = vld [vmem:[%s496 + $0x158] sm:%s489]
                %553 = vst [vmem:[%s497 + $0xd8] sm:%s489] %v552
                %v554 = vld [vmem:[%s496 + $0x160] sm:%s489]
                %555 = vst [vmem:[%s497 + $0xe0] sm:%s489] %v554
                %v556 = vld [vmem:[%s496 + $0x168] sm:%s489]
                %557 = vst [vmem:[%s497 + $0xe8] sm:%s489] %v556
                %v558 = vld [vmem:[%s496 + $0x170] sm:%s489]
                %559 = vst [vmem:[%s497 + $0xf0] sm:%s489] %v558
                %v560 = vld [vmem:[%s496 + $0x178] sm:%s489]
                %561 = vst [vmem:[%s497 + $0xf8] sm:%s489] %v560
                %v562 = vld [vmem:[%s496 + $0x200] sm:%s489]
                %563 = vst [vmem:[%s497 + $0x100] sm:%s489] %v562
                %v564 = vld [vmem:[%s496 + $0x208] sm:%s489]
                %565 = vst [vmem:[%s497 + $0x108] sm:%s489] %v564
                %v566 = vld [vmem:[%s496 + $0x210] sm:%s489]
                %567 = vst [vmem:[%s497 + $0x110] sm:%s489] %v566
                %v568 = vld [vmem:[%s496 + $0x218] sm:%s489]
                %569 = vst [vmem:[%s497 + $0x118] sm:%s489] %v568
                %v570 = vld [vmem:[%s496 + $0x220] sm:%s489]
                %571 = vst [vmem:[%s497 + $0x120] sm:%s489] %v570
                %v572 = vld [vmem:[%s496 + $0x228] sm:%s489]
                %573 = vst [vmem:[%s497 + $0x128] sm:%s489] %v572
                %v574 = vld [vmem:[%s496 + $0x230] sm:%s489]
                %575 = vst [vmem:[%s497 + $0x130] sm:%s489] %v574
                %v576 = vld [vmem:[%s496 + $0x238] sm:%s489]
                %577 = vst [vmem:[%s497 + $0x138] sm:%s489] %v576
                %v578 = vld [vmem:[%s496 + $0x240] sm:%s489]
                %579 = vst [vmem:[%s497 + $0x140] sm:%s489] %v578
                %v580 = vld [vmem:[%s496 + $0x248] sm:%s489]
                %581 = vst [vmem:[%s497 + $0x148] sm:%s489] %v580
                %v582 = vld [vmem:[%s496 + $0x250] sm:%s489]
                %583 = vst [vmem:[%s497 + $0x150] sm:%s489] %v582
                %v584 = vld [vmem:[%s496 + $0x258] sm:%s489]
                %585 = vst [vmem:[%s497 + $0x158] sm:%s489] %v584
                %v586 = vld [vmem:[%s496 + $0x260] sm:%s489]
                %587 = vst [vmem:[%s497 + $0x160] sm:%s489] %v586
                %v588 = vld [vmem:[%s496 + $0x268] sm:%s489]
                %589 = vst [vmem:[%s497 + $0x168] sm:%s489] %v588
                %v590 = vld [vmem:[%s496 + $0x270] sm:%s489]
                %591 = vst [vmem:[%s497 + $0x170] sm:%s489] %v590
                %v592 = vld [vmem:[%s496 + $0x278] sm:%s489]
                %593 = vst [vmem:[%s497 + $0x178] sm:%s489] %v592
              $region95: #{rbm_forward.3} parent=89 // loop_footer
                %s495 = sadd.s32 1, %s491
              $region96: #{rbm_forward.3} parent=89 // loop_footer_branch
                %490 = sbr.rel target = $region92
              $region97: #{rbm_forward.3} parent=89 // loop_exit
                _
            $region90: #{rbm_forward.3} parent=81 // pred_fallthru
              _
          $region82: #{rbm_forward.3} parent=77 // pred_fallthru
            _
          %702 = vnop
        $region78: #{rbm_forward.3} parent=31 // pred_fallthru
          _
      $region32: #{rbm_forward.3} parent=5 // pred_fallthru
        _
      %p703 = scmp.le.s32.totalorder 1, %s13
      %p704 = scmp.lt.s32.totalorder %s13, 3
      %p705 = pnand %p703, %p704
      %p706 = pneg %p705
      // Predicated region
      $region113: #{rbm_forward.3} parent=5 // pred_check
        _
      $region114: #{rbm_forward.3} parent=5 // pred_check_branch
        %708 = sbr.rel (%p705) target = $region116
      $region115: #{rbm_forward.3} parent=5 // pred_region
        %s709 = ssub.s32 %s13, 1
        %s710 = sand.u32 %s136, 1
        %s711 = sand.u32 %s136, 1
        %s712 = smul.addr %s711, 384
        %s713 = scalar_lea.vmem [#allocation2], %s712
        // Predicated region
        $region117: #{rbm_forward.3} parent=115 // pred_check
          %p714 = pneg %p149
        $region118: #{rbm_forward.3} parent=115 // pred_check_branch
          %716 = sbr.rel (%p714) target = $region120
        $region119: #{rbm_forward.3} parent=115 // pred_region
          _
        $region120: #{rbm_forward.3} parent=115 // pred_fallthru
          _
        %s717 = sand.u32 %s162, 1
        %s718 = sand.u32 %s162, 1
        %s719 = smul.addr %s718, 384
        %s720 = scalar_lea.vmem [#allocation3], %s719
        // Predicated region
        $region121: #{rbm_forward.3} parent=115 // pred_check
          %p721 = pneg %p175
        $region122: #{rbm_forward.3} parent=115 // pred_check_branch
          %723 = sbr.rel (%p721) target = $region124
        $region123: #{rbm_forward.3} parent=115 // pred_region
          _
        $region124: #{rbm_forward.3} parent=115 // pred_fallthru
          _
        %s724 = smul.u32 16, %s18
        %p725 = scmp.lt.s32.totalorder %s724, 31
        %s726 = scalar_select %p725, %s724, 31
        %s727 = smul.addr %s726, 8
        %s728 = scalar_lea.vmem %s0, %s727
        %p729 = pneg %p39
        %p730 = pneg %p36
        %p731 = pneg %p60
        %p732 = pneg %p57
        %p733 = pneg %p81
        %p734 = pneg %p78
        %p735 = pneg %p102
        %p736 = pneg %p99
        %p737 = pneg %p123
        %p738 = pneg %p120
        %s739 = sand.u32 %s136, 1
        %s740 = sand.u32 %s136, 1
        %s741 = smul.addr %s740, 384
        %s742 = scalar_lea.vmem [#allocation2], %s741
        %p743 = pneg %p149
        %p744 = pneg %p146
        %s745 = sand.u32 %s162, 1
        %s746 = sand.u32 %s162, 1
        %s747 = smul.addr %s746, 384
        %s748 = scalar_lea.vmem [#allocation3], %s747
        %p749 = pneg %p175
        %p750 = pneg %p172
        %p751 = pneg %p201
        %p752 = pneg %p198
        %p753 = scmp.lt.s32.totalorder %s18, 1
        %s754 = scalar_select %p753, %s18, 1
        %s755 = smul.addr %s754, 8
        %s756 = scalar_lea.vmem %s7, %s755
        %s757 = smul.u32 16, %s18
        %p758 = scmp.lt.s32.totalorder %s757, 31
        %s759 = scalar_select %p758, %s757, 31
        %s760 = smul.addr %s759, 8
        %s761 = scalar_lea.vmem %s0, %s760
        %s762 = smul.u32 16, %s18
        %s763 = smul.u32 16, %s18
        %s764 = smul.u32 16, %s18
        %p765 = scmp.lt.s32.totalorder %s18, 1
        %s766 = scalar_select %p765, %s18, 1
        %s767 = smul.addr %s766, 8
        %s768 = scalar_lea.vmem %s7, %s767
        %v770 = vld [vmem:[%s761] sm:$0xff]
        %v771 = vld [vmem:[%s761 + $0x8] sm:$0xff]
        %v772 = vld [vmem:[%s761 + $0x10] sm:$0xff]
        %v773 = vld [vmem:[%s761 + $0x18] sm:$0xff]
        %v774 = vld [vmem:[%s761 + $0x20] sm:$0xff]
        %v775 = vld [vmem:[%s761 + $0x28] sm:$0xff]
        %v776 = vld [vmem:[%s761 + $0x30] sm:$0xff]
        %v777 = vld [vmem:[%s761 + $0x38] sm:$0xff]
        %v778 = vld [vmem:[%s761 + $0x40] sm:$0xff]
        %v779 = vld [vmem:[%s761 + $0x48] sm:$0xff]
        %v780 = vld [vmem:[%s761 + $0x50] sm:$0xff]
        %v781 = vld [vmem:[%s761 + $0x58] sm:$0xff]
        %v782 = vld [vmem:[%s761 + $0x60] sm:$0xff]
        %v783 = vld [vmem:[%s761 + $0x68] sm:$0xff]
        %v784 = vld [vmem:[%s761 + $0x70] sm:$0xff]
        %v785 = vld [vmem:[%s761 + $0x78] sm:$0xff]
        %v786 = vld [vmem:[%s1] sm:$0xf]
        %v787 = vld [vmem:[%s1 + $0x4] sm:$0xf]
        %v788 = vld [vmem:[%s1 + $0x8] sm:$0xf]
        %v789 = vld [vmem:[%s1 + $0xc] sm:$0xf]
        %v790 = vld [vmem:[%s1 + $0x10] sm:$0xf]
        %v791 = vld [vmem:[%s1 + $0x14] sm:$0xf]
        %v792 = vld [vmem:[%s1 + $0x18] sm:$0xf]
        %v793 = vld [vmem:[%s1 + $0x1c] sm:$0xf]
        %v794 = vld [vmem:[%s1 + $0x20] sm:$0xf]
        %v795 = vld [vmem:[%s1 + $0x24] sm:$0xf]
        %v796 = vld [vmem:[%s1 + $0x28] sm:$0xf]
        %v797 = vld [vmem:[%s1 + $0x2c] sm:$0xf]
        %v798 = vld [vmem:[%s1 + $0x30] sm:$0xf]
        %v799 = vld [vmem:[%s1 + $0x34] sm:$0xf]
        %v800 = vld [vmem:[%s1 + $0x38] sm:$0xf]
        %v801 = vld [vmem:[%s1 + $0x3c] sm:$0xf]
        %v802 = vld [vmem:[%s2] sm:$0xf]
        %v803 = vld [vmem:[%s2 + $0x4] sm:$0xf]
        %v804 = vld [vmem:[%s2 + $0x8] sm:$0xf]
        %v805 = vld [vmem:[%s2 + $0xc] sm:$0xf]
        %v806 = vld [vmem:[%s2 + $0x10] sm:$0xf]
        %v807 = vld [vmem:[%s2 + $0x14] sm:$0xf]
        %v808 = vld [vmem:[%s2 + $0x18] sm:$0xf]
        %v809 = vld [vmem:[%s2 + $0x1c] sm:$0xf]
        %v810 = vld [vmem:[%s2 + $0x20] sm:$0xf]
        %v811 = vld [vmem:[%s2 + $0x24] sm:$0xf]
        %v812 = vld [vmem:[%s2 + $0x28] sm:$0xf]
        %v813 = vld [vmem:[%s2 + $0x2c] sm:$0xf]
        %v814 = vld [vmem:[%s2 + $0x30] sm:$0xf]
        %v815 = vld [vmem:[%s2 + $0x34] sm:$0xf]
        %v816 = vld [vmem:[%s2 + $0x38] sm:$0xf]
        %v817 = vld [vmem:[%s2 + $0x3c] sm:$0xf]
        %v818 = vld [vmem:[%s3] sm:$0x1]
        %v819 = vld [vmem:[%s4] sm:$0x1]
        %v820 = vpack.c.bf16 %v771, %v770
        %v821 = vpack.c.bf16 %v773, %v772
        %v822 = vpack.c.bf16 %v775, %v774
        %v823 = vpack.c.bf16 %v777, %v776
        %v824 = vpack.c.bf16 %v779, %v778
        %v825 = vpack.c.bf16 %v781, %v780
        %v826 = vpack.c.bf16 %v783, %v782
        %v827 = vpack.c.bf16 %v785, %v784
        %v829 = vlaneseq
        %v830 = vshrl.u32 %v829, 7
        %v831 = vsub.s32 0, %v830
        %v832 = vrot.slane %v818, %v831
        %v850 = vunpack.c.l.b16 %v802
        %v851 = vunpack.c.l.b16 %v803
        %v852 = vunpack.c.l.b16 %v804
        %v853 = vunpack.c.l.b16 %v805
        %v854 = vunpack.c.l.b16 %v806
        %v855 = vunpack.c.l.b16 %v807
        %v856 = vunpack.c.l.b16 %v808
        %v857 = vunpack.c.l.b16 %v809
        %v858 = vunpack.c.l.b16 %v810
        %v859 = vunpack.c.l.b16 %v811
        %v860 = vunpack.c.l.b16 %v812
        %v861 = vunpack.c.l.b16 %v813
        %v862 = vunpack.c.l.b16 %v814
        %v863 = vunpack.c.l.b16 %v815
        %v864 = vunpack.c.l.b16 %v816
        %v865 = vunpack.c.l.b16 %v817
        %v866 = vpack.c.b16 %v851, %v850
        %v867 = vpack.c.b16 %v853, %v852
        %v868 = vpack.c.b16 %v855, %v854
        %v869 = vpack.c.b16 %v857, %v856
        %v870 = vpack.c.b16 %v859, %v858
        %v871 = vpack.c.b16 %v861, %v860
        %v872 = vpack.c.b16 %v863, %v862
        %v873 = vpack.c.b16 %v865, %v864
        %882 = vmatprep.subr.bf16.mxu0 0
        %883 = vmatpush1.bf16.msra.mxu0 %v873
        %884 = vmatprep.subr.bf16.mxu0 0
        %885 = vmatpush1.bf16.msra.mxu0 %v872
        %886 = vmatprep.subr.bf16.mxu0 0
        %887 = vmatpush1.bf16.msra.mxu0 %v871
        %888 = vmatprep.subr.bf16.mxu0 0
        %889 = vmatpush1.bf16.msra.mxu0 %v870
        %890 = vmatprep.subr.bf16.mxu0 0
        %891 = vmatpush1.bf16.msra.mxu0 %v869
        %892 = vmatprep.subr.bf16.mxu0 0
        %893 = vmatpush1.bf16.msra.mxu0 %v868
        %894 = vmatprep.subr.bf16.mxu0 0
        %895 = vmatpush1.bf16.msra.mxu0 %v867
        %896 = vmatprep.subr.bf16.mxu0 0
        %897 = vmatpush1.bf16.msra.mxu0 %v866
        %898 = vmatprep.subr.bf16.mxu0 0
        %899 = vmatpush2.bf16.msra.mxu0 0
        %900 = vmatprep.subr.bf16.mxu0 0
        %901 = vmatpush2.bf16.msra.mxu0 0
        %902 = vmatprep.subr.bf16.mxu0 0
        %903 = vmatpush2.bf16.msra.mxu0 0
        %904 = vmatprep.subr.bf16.mxu0 0
        %905 = vmatpush2.bf16.msra.mxu0 0
        %906 = vmatprep.subr.bf16.mxu0 0
        %907 = vmatpush2.bf16.msra.mxu0 0
        %908 = vmatprep.subr.bf16.mxu0 0
        %909 = vmatpush2.bf16.msra.mxu0 0
        %910 = vmatprep.subr.bf16.mxu0 0
        %911 = vmatpush2.bf16.msra.mxu0 0
        %912 = vmatprep.subr.bf16.mxu0 0
        %913 = vmatpush2.bf16.msra.mxu0 0
        %914 = vmatprep.mubr.bf16.mxu0 0
        %915 = vmatmul.mubr.bf16.gmra.mxu0 %v820
        %v916 = vpop.f32.mrf.mxu0
        %v917 = vadd.f32 %v832, %v916
        %v918 = vpop.f32.mrf.mxu0
        %v919 = vpop.f32.mrf.mxu0
        %v920 = vadd.f32 %v832, %v919
        %v921 = vpop.f32.mrf.mxu0
        %922 = vmatprep.mubr.bf16.mxu0 0
        %923 = vmatmul.mubr.bf16.gmra.mxu0 %v821
        %v924 = vpop.f32.mrf.mxu0
        %v925 = vadd.f32 %v832, %v924
        %v926 = vpop.f32.mrf.mxu0
        %v927 = vpop.f32.mrf.mxu0
        %v928 = vadd.f32 %v832, %v927
        %v929 = vpop.f32.mrf.mxu0
        %930 = vmatprep.mubr.bf16.mxu0 0
        %931 = vmatmul.mubr.bf16.gmra.mxu0 %v822
        %v932 = vpop.f32.mrf.mxu0
        %v933 = vadd.f32 %v832, %v932
        %v934 = vpop.f32.mrf.mxu0
        %v935 = vpop.f32.mrf.mxu0
        %v936 = vadd.f32 %v832, %v935
        %v937 = vpop.f32.mrf.mxu0
        %938 = vmatprep.mubr.bf16.mxu0 0
        %939 = vmatmul.mubr.bf16.gmra.mxu0 %v823
        %v940 = vpop.f32.mrf.mxu0
        %v941 = vadd.f32 %v832, %v940
        %v942 = vpop.f32.mrf.mxu0
        %v943 = vpop.f32.mrf.mxu0
        %v944 = vadd.f32 %v832, %v943
        %v945 = vpop.f32.mrf.mxu0
        %946 = vmatprep.mubr.bf16.mxu0 0
        %947 = vmatmul.mubr.bf16.gmra.mxu0 %v824
        %v948 = vpop.f32.mrf.mxu0
        %v949 = vadd.f32 %v832, %v948
        %v950 = vpop.f32.mrf.mxu0
        %v951 = vpop.f32.mrf.mxu0
        %v952 = vadd.f32 %v832, %v951
        %v953 = vpop.f32.mrf.mxu0
        %954 = vmatprep.mubr.bf16.mxu0 0
        %955 = vmatmul.mubr.bf16.gmra.mxu0 %v825
        %v956 = vpop.f32.mrf.mxu0
        %v957 = vadd.f32 %v832, %v956
        %v958 = vpop.f32.mrf.mxu0
        %v959 = vpop.f32.mrf.mxu0
        %v960 = vadd.f32 %v832, %v959
        %v961 = vpop.f32.mrf.mxu0
        %962 = vmatprep.mubr.bf16.mxu0 0
        %963 = vmatmul.mubr.bf16.gmra.mxu0 %v826
        %v964 = vpop.f32.mrf.mxu0
        %v965 = vadd.f32 %v832, %v964
        %v966 = vpop.f32.mrf.mxu0
        %v967 = vpop.f32.mrf.mxu0
        %v968 = vadd.f32 %v832, %v967
        %v969 = vpop.f32.mrf.mxu0
        %970 = vmatprep.mubr.bf16.mxu0 0
        %971 = vmatmul.mubr.bf16.gmra.mxu0 %v827
        %v972 = vpop.f32.mrf.mxu0
        %v973 = vadd.f32 %v832, %v972
        %v974 = vpop.f32.mrf.mxu0
        %v975 = vpop.f32.mrf.mxu0
        %v976 = vadd.f32 %v832, %v975
        %v977 = vpop.f32.mrf.mxu0
        %978 = vdwg.mxu0
        %v979 = vxor.u32 %v917, 2147483648
        %v980 = vxor.u32 %v920, 2147483648
        %v981 = vxor.u32 %v925, 2147483648
        %v982 = vxor.u32 %v928, 2147483648
        %v983 = vxor.u32 %v933, 2147483648
        %v984 = vxor.u32 %v936, 2147483648
        %v985 = vxor.u32 %v941, 2147483648
        %v986 = vxor.u32 %v944, 2147483648
        %v987 = vxor.u32 %v949, 2147483648
        %v988 = vxor.u32 %v952, 2147483648
        %v989 = vxor.u32 %v957, 2147483648
        %v990 = vxor.u32 %v960, 2147483648
        %v991 = vxor.u32 %v965, 2147483648
        %v992 = vxor.u32 %v968, 2147483648
        %v993 = vxor.u32 %v973, 2147483648
        %v994 = vxor.u32 %v976, 2147483648
        %v995 = vmul.f32 %v979, 1.442695
        %v996 = vpow.pop %v995
        %v997 = vmul.f32 %v980, 1.442695
        %v998 = vpow.pop %v997
        %v999 = vmul.f32 %v981, 1.442695
        %v1000 = vpow.pop %v999
        %v1001 = vmul.f32 %v982, 1.442695
        %v1002 = vpow.pop %v1001
        %v1003 = vmul.f32 %v983, 1.442695
        %v1004 = vpow.pop %v1003
        %v1005 = vmul.f32 %v984, 1.442695
        %v1006 = vpow.pop %v1005
        %v1007 = vmul.f32 %v985, 1.442695
        %v1008 = vpow.pop %v1007
        %v1009 = vmul.f32 %v986, 1.442695
        %v1010 = vpow.pop %v1009
        %v1011 = vmul.f32 %v987, 1.442695
        %v1012 = vpow.pop %v1011
        %v1013 = vmul.f32 %v988, 1.442695
        %v1014 = vpow.pop %v1013
        %v1015 = vmul.f32 %v989, 1.442695
        %v1016 = vpow.pop %v1015
        %v1017 = vmul.f32 %v990, 1.442695
        %v1018 = vpow.pop %v1017
        %v1019 = vmul.f32 %v991, 1.442695
        %v1020 = vpow.pop %v1019
        %v1021 = vmul.f32 %v992, 1.442695
        %v1022 = vpow.pop %v1021
        %v1023 = vmul.f32 %v993, 1.442695
        %v1024 = vpow.pop %v1023
        %v1025 = vmul.f32 %v994, 1.442695
        %v1026 = vpow.pop %v1025
        %v1027 = vadd.f32 %v996, 1.0
        %v1028 = vadd.f32 %v998, 1.0
        %v1029 = vadd.f32 %v1000, 1.0
        %v1030 = vadd.f32 %v1002, 1.0
        %v1031 = vadd.f32 %v1004, 1.0
        %v1032 = vadd.f32 %v1006, 1.0
        %v1033 = vadd.f32 %v1008, 1.0
        %v1034 = vadd.f32 %v1010, 1.0
        %v1035 = vadd.f32 %v1012, 1.0
        %v1036 = vadd.f32 %v1014, 1.0
        %v1037 = vadd.f32 %v1016, 1.0
        %v1038 = vadd.f32 %v1018, 1.0
        %v1039 = vadd.f32 %v1020, 1.0
        %v1040 = vadd.f32 %v1022, 1.0
        %v1041 = vadd.f32 %v1024, 1.0
        %v1042 = vadd.f32 %v1026, 1.0
        %v1043 = vrcp.pop %v1027
        %v1044 = vmul.f32 1.0, %v1043
        %v1045 = vrcp.pop %v1028
        %v1046 = vmul.f32 1.0, %v1045
        %v1047 = vrcp.pop %v1029
        %v1048 = vmul.f32 1.0, %v1047
        %v1049 = vrcp.pop %v1030
        %v1050 = vmul.f32 1.0, %v1049
        %v1051 = vrcp.pop %v1031
        %v1052 = vmul.f32 1.0, %v1051
        %v1053 = vrcp.pop %v1032
        %v1054 = vmul.f32 1.0, %v1053
        %v1055 = vrcp.pop %v1033
        %v1056 = vmul.f32 1.0, %v1055
        %v1057 = vrcp.pop %v1034
        %v1058 = vmul.f32 1.0, %v1057
        %v1059 = vrcp.pop %v1035
        %v1060 = vmul.f32 1.0, %v1059
        %v1061 = vrcp.pop %v1036
        %v1062 = vmul.f32 1.0, %v1061
        %v1063 = vrcp.pop %v1037
        %v1064 = vmul.f32 1.0, %v1063
        %v1065 = vrcp.pop %v1038
        %v1066 = vmul.f32 1.0, %v1065
        %v1067 = vrcp.pop %v1039
        %v1068 = vmul.f32 1.0, %v1067
        %v1069 = vrcp.pop %v1040
        %v1070 = vmul.f32 1.0, %v1069
        %v1071 = vrcp.pop %v1041
        %v1072 = vmul.f32 1.0, %v1071
        %v1073 = vrcp.pop %v1042
        %v1074 = vmul.f32 1.0, %v1073
        %v1075 = vld [vmem:[%s713] sm:$0xff]
        %v1076 = vld [vmem:[%s713 + $0x8] sm:$0xff]
        %v1077 = vld [vmem:[%s713 + $0x10] sm:$0xff]
        %v1078 = vld [vmem:[%s713 + $0x18] sm:$0xff]
        %v1079 = vld [vmem:[%s713 + $0x20] sm:$0xff]
        %v1080 = vld [vmem:[%s713 + $0x28] sm:$0xff]
        %v1081 = vld [vmem:[%s713 + $0x30] sm:$0xff]
        %v1082 = vld [vmem:[%s713 + $0x38] sm:$0xff]
        %v1083 = vld [vmem:[%s713 + $0x40] sm:$0xff]
        %v1084 = vld [vmem:[%s713 + $0x48] sm:$0xff]
        %v1085 = vld [vmem:[%s713 + $0x50] sm:$0xff]
        %v1086 = vld [vmem:[%s713 + $0x58] sm:$0xff]
        %v1087 = vld [vmem:[%s713 + $0x60] sm:$0xff]
        %v1088 = vld [vmem:[%s713 + $0x68] sm:$0xff]
        %v1089 = vld [vmem:[%s713 + $0x70] sm:$0xff]
        %v1090 = vld [vmem:[%s713 + $0x78] sm:$0xff]
        %vm1091 = vcmp.lt.f32.partialorder %v1075, %v1044
        %vm1092 = vcmp.lt.f32.partialorder %v1076, %v1046
        %vm1093 = vcmp.lt.f32.partialorder %v1077, %v1048
        %vm1094 = vcmp.lt.f32.partialorder %v1078, %v1050
        %vm1095 = vcmp.lt.f32.partialorder %v1079, %v1052
        %vm1096 = vcmp.lt.f32.partialorder %v1080, %v1054
        %vm1097 = vcmp.lt.f32.partialorder %v1081, %v1056
        %vm1098 = vcmp.lt.f32.partialorder %v1082, %v1058
        %vm1099 = vcmp.lt.f32.partialorder %v1083, %v1060
        %vm1100 = vcmp.lt.f32.partialorder %v1084, %v1062
        %vm1101 = vcmp.lt.f32.partialorder %v1085, %v1064
        %vm1102 = vcmp.lt.f32.partialorder %v1086, %v1066
        %vm1103 = vcmp.lt.f32.partialorder %v1087, %v1068
        %vm1104 = vcmp.lt.f32.partialorder %v1088, %v1070
        %vm1105 = vcmp.lt.f32.partialorder %v1089, %v1072
        %vm1106 = vcmp.lt.f32.partialorder %v1090, %v1074
        %v1107 = vsel %vm1091, 1, 0
        %v1108 = vsel %vm1092, 1, 0
        %v1109 = vsel %vm1093, 1, 0
        %v1110 = vsel %vm1094, 1, 0
        %v1111 = vsel %vm1095, 1, 0
        %v1112 = vsel %vm1096, 1, 0
        %v1113 = vsel %vm1097, 1, 0
        %v1114 = vsel %vm1098, 1, 0
        %v1115 = vsel %vm1099, 1, 0
        %v1116 = vsel %vm1100, 1, 0
        %v1117 = vsel %vm1101, 1, 0
        %v1118 = vsel %vm1102, 1, 0
        %v1119 = vsel %vm1103, 1, 0
        %v1120 = vsel %vm1104, 1, 0
        %v1121 = vsel %vm1105, 1, 0
        %v1122 = vsel %vm1106, 1, 0
        %v1123 = vcvt.s32.f32 %v1107
        %v1124 = vcvt.s32.f32 %v1108
        %v1125 = vcvt.s32.f32 %v1109
        %v1126 = vcvt.s32.f32 %v1110
        %v1127 = vcvt.s32.f32 %v1111
        %v1128 = vcvt.s32.f32 %v1112
        %v1129 = vcvt.s32.f32 %v1113
        %v1130 = vcvt.s32.f32 %v1114
        %v1131 = vcvt.s32.f32 %v1115
        %v1132 = vcvt.s32.f32 %v1116
        %v1133 = vcvt.s32.f32 %v1117
        %v1134 = vcvt.s32.f32 %v1118
        %v1135 = vcvt.s32.f32 %v1119
        %v1136 = vcvt.s32.f32 %v1120
        %v1137 = vcvt.s32.f32 %v1121
        %v1138 = vcvt.s32.f32 %v1122
        %v1139 = vpack.c.bf16 %v1124, %v1123
        %v1140 = vpack.c.bf16 %v1126, %v1125
        %v1141 = vpack.c.bf16 %v1128, %v1127
        %v1142 = vpack.c.bf16 %v1130, %v1129
        %v1143 = vpack.c.bf16 %v1132, %v1131
        %v1144 = vpack.c.bf16 %v1134, %v1133
        %v1145 = vpack.c.bf16 %v1136, %v1135
        %v1146 = vpack.c.bf16 %v1138, %v1137
        %v1148 = vlaneseq
        %v1149 = vshrl.u32 %v1148, 7
        %v1150 = vsub.s32 0, %v1149
        %v1151 = vrot.slane %v819, %v1150
        %v1169 = vunpack.c.l.b16 %v786
        %v1170 = vunpack.c.l.b16 %v787
        %v1171 = vunpack.c.l.b16 %v788
        %v1172 = vunpack.c.l.b16 %v789
        %v1173 = vunpack.c.l.b16 %v790
        %v1174 = vunpack.c.l.b16 %v791
        %v1175 = vunpack.c.l.b16 %v792
        %v1176 = vunpack.c.l.b16 %v793
        %v1177 = vunpack.c.l.b16 %v794
        %v1178 = vunpack.c.l.b16 %v795
        %v1179 = vunpack.c.l.b16 %v796
        %v1180 = vunpack.c.l.b16 %v797
        %v1181 = vunpack.c.l.b16 %v798
        %v1182 = vunpack.c.l.b16 %v799
        %v1183 = vunpack.c.l.b16 %v800
        %v1184 = vunpack.c.l.b16 %v801
        %v1185 = vpack.c.b16 %v1170, %v1169
        %v1186 = vpack.c.b16 %v1172, %v1171
        %v1187 = vpack.c.b16 %v1174, %v1173
        %v1188 = vpack.c.b16 %v1176, %v1175
        %v1189 = vpack.c.b16 %v1178, %v1177
        %v1190 = vpack.c.b16 %v1180, %v1179
        %v1191 = vpack.c.b16 %v1182, %v1181
        %v1192 = vpack.c.b16 %v1184, %v1183
        %1201 = vmatprep.subr.bf16.mxu0 0
        %1202 = vmatpush1.bf16.msra.mxu0 %v1192
        %1203 = vmatprep.subr.bf16.mxu0 0
        %1204 = vmatpush1.bf16.msra.mxu0 %v1191
        %1205 = vmatprep.subr.bf16.mxu0 0
        %1206 = vmatpush1.bf16.msra.mxu0 %v1190
        %1207 = vmatprep.subr.bf16.mxu0 0
        %1208 = vmatpush1.bf16.msra.mxu0 %v1189
        %1209 = vmatprep.subr.bf16.mxu0 0
        %1210 = vmatpush1.bf16.msra.mxu0 %v1188
        %1211 = vmatprep.subr.bf16.mxu0 0
        %1212 = vmatpush1.bf16.msra.mxu0 %v1187
        %1213 = vmatprep.subr.bf16.mxu0 0
        %1214 = vmatpush1.bf16.msra.mxu0 %v1186
        %1215 = vmatprep.subr.bf16.mxu0 0
        %1216 = vmatpush1.bf16.msra.mxu0 %v1185
        %1217 = vmatprep.subr.bf16.mxu0 0
        %1218 = vmatpush2.bf16.msra.mxu0 0
        %1219 = vmatprep.subr.bf16.mxu0 0
        %1220 = vmatpush2.bf16.msra.mxu0 0
        %1221 = vmatprep.subr.bf16.mxu0 0
        %1222 = vmatpush2.bf16.msra.mxu0 0
        %1223 = vmatprep.subr.bf16.mxu0 0
        %1224 = vmatpush2.bf16.msra.mxu0 0
        %1225 = vmatprep.subr.bf16.mxu0 0
        %1226 = vmatpush2.bf16.msra.mxu0 0
        %1227 = vmatprep.subr.bf16.mxu0 0
        %1228 = vmatpush2.bf16.msra.mxu0 0
        %1229 = vmatprep.subr.bf16.mxu0 0
        %1230 = vmatpush2.bf16.msra.mxu0 0
        %1231 = vmatprep.subr.bf16.mxu0 0
        %1232 = vmatpush2.bf16.msra.mxu0 0
        %1233 = vmatprep.mubr.bf16.mxu0 0
        %1234 = vmatmul.mubr.bf16.gmra.mxu0 %v1139
        %v1235 = vpop.f32.mrf.mxu0
        %v1236 = vadd.f32 %v1151, %v1235
        %v1237 = vpop.f32.mrf.mxu0
        %v1238 = vpop.f32.mrf.mxu0
        %v1239 = vadd.f32 %v1151, %v1238
        %v1240 = vpop.f32.mrf.mxu0
        %1241 = vmatprep.mubr.bf16.mxu0 0
        %1242 = vmatmul.mubr.bf16.gmra.mxu0 %v1140
        %v1243 = vpop.f32.mrf.mxu0
        %v1244 = vadd.f32 %v1151, %v1243
        %v1245 = vpop.f32.mrf.mxu0
        %v1246 = vpop.f32.mrf.mxu0
        %v1247 = vadd.f32 %v1151, %v1246
        %v1248 = vpop.f32.mrf.mxu0
        %1249 = vmatprep.mubr.bf16.mxu0 0
        %1250 = vmatmul.mubr.bf16.gmra.mxu0 %v1141
        %v1251 = vpop.f32.mrf.mxu0
        %v1252 = vadd.f32 %v1151, %v1251
        %v1253 = vpop.f32.mrf.mxu0
        %v1254 = vpop.f32.mrf.mxu0
        %v1255 = vadd.f32 %v1151, %v1254
        %v1256 = vpop.f32.mrf.mxu0
        %1257 = vmatprep.mubr.bf16.mxu0 0
        %1258 = vmatmul.mubr.bf16.gmra.mxu0 %v1142
        %v1259 = vpop.f32.mrf.mxu0
        %v1260 = vadd.f32 %v1151, %v1259
        %v1261 = vpop.f32.mrf.mxu0
        %v1262 = vpop.f32.mrf.mxu0
        %v1263 = vadd.f32 %v1151, %v1262
        %v1264 = vpop.f32.mrf.mxu0
        %1265 = vmatprep.mubr.bf16.mxu0 0
        %1266 = vmatmul.mubr.bf16.gmra.mxu0 %v1143
        %v1267 = vpop.f32.mrf.mxu0
        %v1268 = vadd.f32 %v1151, %v1267
        %v1269 = vpop.f32.mrf.mxu0
        %v1270 = vpop.f32.mrf.mxu0
        %v1271 = vadd.f32 %v1151, %v1270
        %v1272 = vpop.f32.mrf.mxu0
        %1273 = vmatprep.mubr.bf16.mxu0 0
        %1274 = vmatmul.mubr.bf16.gmra.mxu0 %v1144
        %v1275 = vpop.f32.mrf.mxu0
        %v1276 = vadd.f32 %v1151, %v1275
        %v1277 = vpop.f32.mrf.mxu0
        %v1278 = vpop.f32.mrf.mxu0
        %v1279 = vadd.f32 %v1151, %v1278
        %v1280 = vpop.f32.mrf.mxu0
        %1281 = vmatprep.mubr.bf16.mxu0 0
        %1282 = vmatmul.mubr.bf16.gmra.mxu0 %v1145
        %v1283 = vpop.f32.mrf.mxu0
        %v1284 = vadd.f32 %v1151, %v1283
        %v1285 = vpop.f32.mrf.mxu0
        %v1286 = vpop.f32.mrf.mxu0
        %v1287 = vadd.f32 %v1151, %v1286
        %v1288 = vpop.f32.mrf.mxu0
        %1289 = vmatprep.mubr.bf16.mxu0 0
        %1290 = vmatmul.mubr.bf16.gmra.mxu0 %v1146
        %v1291 = vpop.f32.mrf.mxu0
        %v1292 = vadd.f32 %v1151, %v1291
        %v1293 = vpop.f32.mrf.mxu0
        %v1294 = vpop.f32.mrf.mxu0
        %v1295 = vadd.f32 %v1151, %v1294
        %v1296 = vpop.f32.mrf.mxu0
        %1297 = vdwg.mxu0
        %v1298 = vxor.u32 %v1236, 2147483648
        %v1299 = vxor.u32 %v1239, 2147483648
        %v1300 = vxor.u32 %v1244, 2147483648
        %v1301 = vxor.u32 %v1247, 2147483648
        %v1302 = vxor.u32 %v1252, 2147483648
        %v1303 = vxor.u32 %v1255, 2147483648
        %v1304 = vxor.u32 %v1260, 2147483648
        %v1305 = vxor.u32 %v1263, 2147483648
        %v1306 = vxor.u32 %v1268, 2147483648
        %v1307 = vxor.u32 %v1271, 2147483648
        %v1308 = vxor.u32 %v1276, 2147483648
        %v1309 = vxor.u32 %v1279, 2147483648
        %v1310 = vxor.u32 %v1284, 2147483648
        %v1311 = vxor.u32 %v1287, 2147483648
        %v1312 = vxor.u32 %v1292, 2147483648
        %v1313 = vxor.u32 %v1295, 2147483648
        %v1314 = vmul.f32 %v1298, 1.442695
        %v1315 = vpow.pop %v1314
        %v1316 = vmul.f32 %v1299, 1.442695
        %v1317 = vpow.pop %v1316
        %v1318 = vmul.f32 %v1300, 1.442695
        %v1319 = vpow.pop %v1318
        %v1320 = vmul.f32 %v1301, 1.442695
        %v1321 = vpow.pop %v1320
        %v1322 = vmul.f32 %v1302, 1.442695
        %v1323 = vpow.pop %v1322
        %v1324 = vmul.f32 %v1303, 1.442695
        %v1325 = vpow.pop %v1324
        %v1326 = vmul.f32 %v1304, 1.442695
        %v1327 = vpow.pop %v1326
        %v1328 = vmul.f32 %v1305, 1.442695
        %v1329 = vpow.pop %v1328
        %v1330 = vmul.f32 %v1306, 1.442695
        %v1331 = vpow.pop %v1330
        %v1332 = vmul.f32 %v1307, 1.442695
        %v1333 = vpow.pop %v1332
        %v1334 = vmul.f32 %v1308, 1.442695
        %v1335 = vpow.pop %v1334
        %v1336 = vmul.f32 %v1309, 1.442695
        %v1337 = vpow.pop %v1336
        %v1338 = vmul.f32 %v1310, 1.442695
        %v1339 = vpow.pop %v1338
        %v1340 = vmul.f32 %v1311, 1.442695
        %v1341 = vpow.pop %v1340
        %v1342 = vmul.f32 %v1312, 1.442695
        %v1343 = vpow.pop %v1342
        %v1344 = vmul.f32 %v1313, 1.442695
        %v1345 = vpow.pop %v1344
        %v1346 = vadd.f32 %v1315, 1.0
        %v1347 = vadd.f32 %v1317, 1.0
        %v1348 = vadd.f32 %v1319, 1.0
        %v1349 = vadd.f32 %v1321, 1.0
        %v1350 = vadd.f32 %v1323, 1.0
        %v1351 = vadd.f32 %v1325, 1.0
        %v1352 = vadd.f32 %v1327, 1.0
        %v1353 = vadd.f32 %v1329, 1.0
        %v1354 = vadd.f32 %v1331, 1.0
        %v1355 = vadd.f32 %v1333, 1.0
        %v1356 = vadd.f32 %v1335, 1.0
        %v1357 = vadd.f32 %v1337, 1.0
        %v1358 = vadd.f32 %v1339, 1.0
        %v1359 = vadd.f32 %v1341, 1.0
        %v1360 = vadd.f32 %v1343, 1.0
        %v1361 = vadd.f32 %v1345, 1.0
        %v1362 = vrcp.pop %v1346
        %v1363 = vmul.f32 1.0, %v1362
        %v1364 = vrcp.pop %v1347
        %v1365 = vmul.f32 1.0, %v1364
        %v1366 = vrcp.pop %v1348
        %v1367 = vmul.f32 1.0, %v1366
        %v1368 = vrcp.pop %v1349
        %v1369 = vmul.f32 1.0, %v1368
        %v1370 = vrcp.pop %v1350
        %v1371 = vmul.f32 1.0, %v1370
        %v1372 = vrcp.pop %v1351
        %v1373 = vmul.f32 1.0, %v1372
        %v1374 = vrcp.pop %v1352
        %v1375 = vmul.f32 1.0, %v1374
        %v1376 = vrcp.pop %v1353
        %v1377 = vmul.f32 1.0, %v1376
        %v1378 = vrcp.pop %v1354
        %v1379 = vmul.f32 1.0, %v1378
        %v1380 = vrcp.pop %v1355
        %v1381 = vmul.f32 1.0, %v1380
        %v1382 = vrcp.pop %v1356
        %v1383 = vmul.f32 1.0, %v1382
        %v1384 = vrcp.pop %v1357
        %v1385 = vmul.f32 1.0, %v1384
        %v1386 = vrcp.pop %v1358
        %v1387 = vmul.f32 1.0, %v1386
        %v1388 = vrcp.pop %v1359
        %v1389 = vmul.f32 1.0, %v1388
        %v1390 = vrcp.pop %v1360
        %v1391 = vmul.f32 1.0, %v1390
        %v1392 = vrcp.pop %v1361
        %v1393 = vmul.f32 1.0, %v1392
        %v1394 = vld [vmem:[%s720] sm:$0xff]
        %v1395 = vld [vmem:[%s720 + $0x8] sm:$0xff]
        %v1396 = vld [vmem:[%s720 + $0x10] sm:$0xff]
        %v1397 = vld [vmem:[%s720 + $0x18] sm:$0xff]
        %v1398 = vld [vmem:[%s720 + $0x20] sm:$0xff]
        %v1399 = vld [vmem:[%s720 + $0x28] sm:$0xff]
        %v1400 = vld [vmem:[%s720 + $0x30] sm:$0xff]
        %v1401 = vld [vmem:[%s720 + $0x38] sm:$0xff]
        %v1402 = vld [vmem:[%s720 + $0x40] sm:$0xff]
        %v1403 = vld [vmem:[%s720 + $0x48] sm:$0xff]
        %v1404 = vld [vmem:[%s720 + $0x50] sm:$0xff]
        %v1405 = vld [vmem:[%s720 + $0x58] sm:$0xff]
        %v1406 = vld [vmem:[%s720 + $0x60] sm:$0xff]
        %v1407 = vld [vmem:[%s720 + $0x68] sm:$0xff]
        %v1408 = vld [vmem:[%s720 + $0x70] sm:$0xff]
        %v1409 = vld [vmem:[%s720 + $0x78] sm:$0xff]
        %vm1410 = vcmp.lt.f32.partialorder %v1394, %v1363
        %vm1411 = vcmp.lt.f32.partialorder %v1395, %v1365
        %vm1412 = vcmp.lt.f32.partialorder %v1396, %v1367
        %vm1413 = vcmp.lt.f32.partialorder %v1397, %v1369
        %vm1414 = vcmp.lt.f32.partialorder %v1398, %v1371
        %vm1415 = vcmp.lt.f32.partialorder %v1399, %v1373
        %vm1416 = vcmp.lt.f32.partialorder %v1400, %v1375
        %vm1417 = vcmp.lt.f32.partialorder %v1401, %v1377
        %vm1418 = vcmp.lt.f32.partialorder %v1402, %v1379
        %vm1419 = vcmp.lt.f32.partialorder %v1403, %v1381
        %vm1420 = vcmp.lt.f32.partialorder %v1404, %v1383
        %vm1421 = vcmp.lt.f32.partialorder %v1405, %v1385
        %vm1422 = vcmp.lt.f32.partialorder %v1406, %v1387
        %vm1423 = vcmp.lt.f32.partialorder %v1407, %v1389
        %vm1424 = vcmp.lt.f32.partialorder %v1408, %v1391
        %vm1425 = vcmp.lt.f32.partialorder %v1409, %v1393
        %v1426 = vsel %vm1410, 1, 0
        %v1427 = vsel %vm1411, 1, 0
        %v1428 = vsel %vm1412, 1, 0
        %v1429 = vsel %vm1413, 1, 0
        %v1430 = vsel %vm1414, 1, 0
        %v1431 = vsel %vm1415, 1, 0
        %v1432 = vsel %vm1416, 1, 0
        %v1433 = vsel %vm1417, 1, 0
        %v1434 = vsel %vm1418, 1, 0
        %v1435 = vsel %vm1419, 1, 0
        %v1436 = vsel %vm1420, 1, 0
        %v1437 = vsel %vm1421, 1, 0
        %v1438 = vsel %vm1422, 1, 0
        %v1439 = vsel %vm1423, 1, 0
        %v1440 = vsel %vm1424, 1, 0
        %v1441 = vsel %vm1425, 1, 0
        %v1442 = vcvt.s32.f32 %v1426
        %v1443 = vcvt.s32.f32 %v1427
        %v1444 = vcvt.s32.f32 %v1428
        %v1445 = vcvt.s32.f32 %v1429
        %v1446 = vcvt.s32.f32 %v1430
        %v1447 = vcvt.s32.f32 %v1431
        %v1448 = vcvt.s32.f32 %v1432
        %v1449 = vcvt.s32.f32 %v1433
        %v1450 = vcvt.s32.f32 %v1434
        %v1451 = vcvt.s32.f32 %v1435
        %v1452 = vcvt.s32.f32 %v1436
        %v1453 = vcvt.s32.f32 %v1437
        %v1454 = vcvt.s32.f32 %v1438
        %v1455 = vcvt.s32.f32 %v1439
        %v1456 = vcvt.s32.f32 %v1440
        %v1457 = vcvt.s32.f32 %v1441
        %v1458 = vpack.c.bf16 %v1443, %v1442
        %v1459 = vpack.c.bf16 %v1445, %v1444
        %v1460 = vpack.c.bf16 %v1447, %v1446
        %v1461 = vpack.c.bf16 %v1449, %v1448
        %v1462 = vpack.c.bf16 %v1451, %v1450
        %v1463 = vpack.c.bf16 %v1453, %v1452
        %v1464 = vpack.c.bf16 %v1455, %v1454
        %v1465 = vpack.c.bf16 %v1457, %v1456
        %1466 = vmatprep.subr.bf16.mxu0 0
        %1467 = vmatpush1.bf16.msra.mxu0 %v873
        %1468 = vmatprep.subr.bf16.mxu0 0
        %1469 = vmatpush1.bf16.msra.mxu0 %v872
        %1470 = vmatprep.subr.bf16.mxu0 0
        %1471 = vmatpush1.bf16.msra.mxu0 %v871
        %1472 = vmatprep.subr.bf16.mxu0 0
        %1473 = vmatpush1.bf16.msra.mxu0 %v870
        %1474 = vmatprep.subr.bf16.mxu0 0
        %1475 = vmatpush1.bf16.msra.mxu0 %v869
        %1476 = vmatprep.subr.bf16.mxu0 0
        %1477 = vmatpush1.bf16.msra.mxu0 %v868
        %1478 = vmatprep.subr.bf16.mxu0 0
        %1479 = vmatpush1.bf16.msra.mxu0 %v867
        %1480 = vmatprep.subr.bf16.mxu0 0
        %1481 = vmatpush1.bf16.msra.mxu0 %v866
        %1482 = vmatprep.subr.bf16.mxu0 0
        %1483 = vmatpush2.bf16.msra.mxu0 0
        %1484 = vmatprep.subr.bf16.mxu0 0
        %1485 = vmatpush2.bf16.msra.mxu0 0
        %1486 = vmatprep.subr.bf16.mxu0 0
        %1487 = vmatpush2.bf16.msra.mxu0 0
        %1488 = vmatprep.subr.bf16.mxu0 0
        %1489 = vmatpush2.bf16.msra.mxu0 0
        %1490 = vmatprep.subr.bf16.mxu0 0
        %1491 = vmatpush2.bf16.msra.mxu0 0
        %1492 = vmatprep.subr.bf16.mxu0 0
        %1493 = vmatpush2.bf16.msra.mxu0 0
        %1494 = vmatprep.subr.bf16.mxu0 0
        %1495 = vmatpush2.bf16.msra.mxu0 0
        %1496 = vmatprep.subr.bf16.mxu0 0
        %1497 = vmatpush2.bf16.msra.mxu0 0
        %1498 = vmatprep.mubr.bf16.mxu0 0
        %1499 = vmatmul.mubr.bf16.gmra.mxu0 %v1458
        %v1500 = vpop.f32.mrf.mxu0
        %v1501 = vadd.f32 %v832, %v1500
        %v1502 = vpop.f32.mrf.mxu0
        %v1503 = vpop.f32.mrf.mxu0
        %v1504 = vadd.f32 %v832, %v1503
        %v1505 = vpop.f32.mrf.mxu0
        %1506 = vmatprep.mubr.bf16.mxu0 0
        %1507 = vmatmul.mubr.bf16.gmra.mxu0 %v1459
        %v1508 = vpop.f32.mrf.mxu0
        %v1509 = vadd.f32 %v832, %v1508
        %v1510 = vpop.f32.mrf.mxu0
        %v1511 = vpop.f32.mrf.mxu0
        %v1512 = vadd.f32 %v832, %v1511
        %v1513 = vpop.f32.mrf.mxu0
        %1514 = vmatprep.mubr.bf16.mxu0 0
        %1515 = vmatmul.mubr.bf16.gmra.mxu0 %v1460
        %v1516 = vpop.f32.mrf.mxu0
        %v1517 = vadd.f32 %v832, %v1516
        %v1518 = vpop.f32.mrf.mxu0
        %v1519 = vpop.f32.mrf.mxu0
        %v1520 = vadd.f32 %v832, %v1519
        %v1521 = vpop.f32.mrf.mxu0
        %1522 = vmatprep.mubr.bf16.mxu0 0
        %1523 = vmatmul.mubr.bf16.gmra.mxu0 %v1461
        %v1524 = vpop.f32.mrf.mxu0
        %v1525 = vadd.f32 %v832, %v1524
        %v1526 = vpop.f32.mrf.mxu0
        %v1527 = vpop.f32.mrf.mxu0
        %v1528 = vadd.f32 %v832, %v1527
        %v1529 = vpop.f32.mrf.mxu0
        %1530 = vmatprep.mubr.bf16.mxu0 0
        %1531 = vmatmul.mubr.bf16.gmra.mxu0 %v1462
        %v1532 = vpop.f32.mrf.mxu0
        %v1533 = vadd.f32 %v832, %v1532
        %v1534 = vpop.f32.mrf.mxu0
        %v1535 = vpop.f32.mrf.mxu0
        %v1536 = vadd.f32 %v832, %v1535
        %v1537 = vpop.f32.mrf.mxu0
        %1538 = vmatprep.mubr.bf16.mxu0 0
        %1539 = vmatmul.mubr.bf16.gmra.mxu0 %v1463
        %v1540 = vpop.f32.mrf.mxu0
        %v1541 = vadd.f32 %v832, %v1540
        %v1542 = vpop.f32.mrf.mxu0
        %v1543 = vpop.f32.mrf.mxu0
        %v1544 = vadd.f32 %v832, %v1543
        %v1545 = vpop.f32.mrf.mxu0
        %1546 = vmatprep.mubr.bf16.mxu0 0
        %1547 = vmatmul.mubr.bf16.gmra.mxu0 %v1464
        %v1548 = vpop.f32.mrf.mxu0
        %v1549 = vadd.f32 %v832, %v1548
        %v1550 = vpop.f32.mrf.mxu0
        %v1551 = vpop.f32.mrf.mxu0
        %v1552 = vadd.f32 %v832, %v1551
        %v1553 = vpop.f32.mrf.mxu0
        %1554 = vmatprep.mubr.bf16.mxu0 0
        %1555 = vmatmul.mubr.bf16.gmra.mxu0 %v1465
        %v1556 = vpop.f32.mrf.mxu0
        %v1557 = vadd.f32 %v832, %v1556
        %v1558 = vpop.f32.mrf.mxu0
        %v1559 = vpop.f32.mrf.mxu0
        %v1560 = vadd.f32 %v832, %v1559
        %v1561 = vpop.f32.mrf.mxu0
        %1562 = vdwg.mxu0
        %v1563 = vxor.u32 %v1501, 2147483648
        %v1564 = vxor.u32 %v1504, 2147483648
        %v1565 = vxor.u32 %v1509, 2147483648
        %v1566 = vxor.u32 %v1512, 2147483648
        %v1567 = vxor.u32 %v1517, 2147483648
        %v1568 = vxor.u32 %v1520, 2147483648
        %v1569 = vxor.u32 %v1525, 2147483648
        %v1570 = vxor.u32 %v1528, 2147483648
        %v1571 = vxor.u32 %v1533, 2147483648
        %v1572 = vxor.u32 %v1536, 2147483648
        %v1573 = vxor.u32 %v1541, 2147483648
        %v1574 = vxor.u32 %v1544, 2147483648
        %v1575 = vxor.u32 %v1549, 2147483648
        %v1576 = vxor.u32 %v1552, 2147483648
        %v1577 = vxor.u32 %v1557, 2147483648
        %v1578 = vxor.u32 %v1560, 2147483648
        %v1579 = vmul.f32 %v1563, 1.442695
        %v1580 = vpow.pop %v1579
        %v1581 = vmul.f32 %v1564, 1.442695
        %v1582 = vpow.pop %v1581
        %v1583 = vmul.f32 %v1565, 1.442695
        %v1584 = vpow.pop %v1583
        %v1585 = vmul.f32 %v1566, 1.442695
        %v1586 = vpow.pop %v1585
        %v1587 = vmul.f32 %v1567, 1.442695
        %v1588 = vpow.pop %v1587
        %v1589 = vmul.f32 %v1568, 1.442695
        %v1590 = vpow.pop %v1589
        %v1591 = vmul.f32 %v1569, 1.442695
        %v1592 = vpow.pop %v1591
        %v1593 = vmul.f32 %v1570, 1.442695
        %v1594 = vpow.pop %v1593
        %v1595 = vmul.f32 %v1571, 1.442695
        %v1596 = vpow.pop %v1595
        %v1597 = vmul.f32 %v1572, 1.442695
        %v1598 = vpow.pop %v1597
        %v1599 = vmul.f32 %v1573, 1.442695
        %v1600 = vpow.pop %v1599
        %v1601 = vmul.f32 %v1574, 1.442695
        %v1602 = vpow.pop %v1601
        %v1603 = vmul.f32 %v1575, 1.442695
        %v1604 = vpow.pop %v1603
        %v1605 = vmul.f32 %v1576, 1.442695
        %v1606 = vpow.pop %v1605
        %v1607 = vmul.f32 %v1577, 1.442695
        %v1608 = vpow.pop %v1607
        %v1609 = vmul.f32 %v1578, 1.442695
        %v1610 = vpow.pop %v1609
        %v1611 = vadd.f32 %v1580, 1.0
        %v1612 = vadd.f32 %v1582, 1.0
        %v1613 = vadd.f32 %v1584, 1.0
        %v1614 = vadd.f32 %v1586, 1.0
        %v1615 = vadd.f32 %v1588, 1.0
        %v1616 = vadd.f32 %v1590, 1.0
        %v1617 = vadd.f32 %v1592, 1.0
        %v1618 = vadd.f32 %v1594, 1.0
        %v1619 = vadd.f32 %v1596, 1.0
        %v1620 = vadd.f32 %v1598, 1.0
        %v1621 = vadd.f32 %v1600, 1.0
        %v1622 = vadd.f32 %v1602, 1.0
        %v1623 = vadd.f32 %v1604, 1.0
        %v1624 = vadd.f32 %v1606, 1.0
        %v1625 = vadd.f32 %v1608, 1.0
        %v1626 = vadd.f32 %v1610, 1.0
        %v1627 = vrcp.pop %v1611
        %v1628 = vmul.f32 1.0, %v1627
        %v1629 = vrcp.pop %v1612
        %v1630 = vmul.f32 1.0, %v1629
        %v1631 = vrcp.pop %v1613
        %v1632 = vmul.f32 1.0, %v1631
        %v1633 = vrcp.pop %v1614
        %v1634 = vmul.f32 1.0, %v1633
        %v1635 = vrcp.pop %v1615
        %v1636 = vmul.f32 1.0, %v1635
        %v1637 = vrcp.pop %v1616
        %v1638 = vmul.f32 1.0, %v1637
        %v1639 = vrcp.pop %v1617
        %v1640 = vmul.f32 1.0, %v1639
        %v1641 = vrcp.pop %v1618
        %v1642 = vmul.f32 1.0, %v1641
        %v1643 = vrcp.pop %v1619
        %v1644 = vmul.f32 1.0, %v1643
        %v1645 = vrcp.pop %v1620
        %v1646 = vmul.f32 1.0, %v1645
        %v1647 = vrcp.pop %v1621
        %v1648 = vmul.f32 1.0, %v1647
        %v1649 = vrcp.pop %v1622
        %v1650 = vmul.f32 1.0, %v1649
        %v1651 = vrcp.pop %v1623
        %v1652 = vmul.f32 1.0, %v1651
        %v1653 = vrcp.pop %v1624
        %v1654 = vmul.f32 1.0, %v1653
        %v1655 = vrcp.pop %v1625
        %v1656 = vmul.f32 1.0, %v1655
        %v1657 = vrcp.pop %v1626
        %v1658 = vmul.f32 1.0, %v1657
        %s1659 = scalar_lea.vmem %s713, 128 [#allocation2]
        %v1660 = vld [vmem:[%s1659] sm:$0xff]
        %v1661 = vld [vmem:[%s1659 + $0x8] sm:$0xff]
        %v1662 = vld [vmem:[%s1659 + $0x10] sm:$0xff]
        %v1663 = vld [vmem:[%s1659 + $0x18] sm:$0xff]
        %v1664 = vld [vmem:[%s1659 + $0x20] sm:$0xff]
        %v1665 = vld [vmem:[%s1659 + $0x28] sm:$0xff]
        %v1666 = vld [vmem:[%s1659 + $0x30] sm:$0xff]
        %v1667 = vld [vmem:[%s1659 + $0x38] sm:$0xff]
        %v1668 = vld [vmem:[%s1659 + $0x40] sm:$0xff]
        %v1669 = vld [vmem:[%s1659 + $0x48] sm:$0xff]
        %v1670 = vld [vmem:[%s1659 + $0x50] sm:$0xff]
        %v1671 = vld [vmem:[%s1659 + $0x58] sm:$0xff]
        %v1672 = vld [vmem:[%s1659 + $0x60] sm:$0xff]
        %v1673 = vld [vmem:[%s1659 + $0x68] sm:$0xff]
        %v1674 = vld [vmem:[%s1659 + $0x70] sm:$0xff]
        %v1675 = vld [vmem:[%s1659 + $0x78] sm:$0xff]
        %vm1676 = vcmp.lt.f32.partialorder %v1660, %v1628
        %vm1677 = vcmp.lt.f32.partialorder %v1661, %v1630
        %vm1678 = vcmp.lt.f32.partialorder %v1662, %v1632
        %vm1679 = vcmp.lt.f32.partialorder %v1663, %v1634
        %vm1680 = vcmp.lt.f32.partialorder %v1664, %v1636
        %vm1681 = vcmp.lt.f32.partialorder %v1665, %v1638
        %vm1682 = vcmp.lt.f32.partialorder %v1666, %v1640
        %vm1683 = vcmp.lt.f32.partialorder %v1667, %v1642
        %vm1684 = vcmp.lt.f32.partialorder %v1668, %v1644
        %vm1685 = vcmp.lt.f32.partialorder %v1669, %v1646
        %vm1686 = vcmp.lt.f32.partialorder %v1670, %v1648
        %vm1687 = vcmp.lt.f32.partialorder %v1671, %v1650
        %vm1688 = vcmp.lt.f32.partialorder %v1672, %v1652
        %vm1689 = vcmp.lt.f32.partialorder %v1673, %v1654
        %vm1690 = vcmp.lt.f32.partialorder %v1674, %v1656
        %vm1691 = vcmp.lt.f32.partialorder %v1675, %v1658
        %v1692 = vsel %vm1676, 1, 0
        %v1693 = vsel %vm1677, 1, 0
        %v1694 = vsel %vm1678, 1, 0
        %v1695 = vsel %vm1679, 1, 0
        %v1696 = vsel %vm1680, 1, 0
        %v1697 = vsel %vm1681, 1, 0
        %v1698 = vsel %vm1682, 1, 0
        %v1699 = vsel %vm1683, 1, 0
        %v1700 = vsel %vm1684, 1, 0
        %v1701 = vsel %vm1685, 1, 0
        %v1702 = vsel %vm1686, 1, 0
        %v1703 = vsel %vm1687, 1, 0
        %v1704 = vsel %vm1688, 1, 0
        %v1705 = vsel %vm1689, 1, 0
        %v1706 = vsel %vm1690, 1, 0
        %v1707 = vsel %vm1691, 1, 0
        %v1708 = vcvt.s32.f32 %v1692
        %v1709 = vcvt.s32.f32 %v1693
        %v1710 = vcvt.s32.f32 %v1694
        %v1711 = vcvt.s32.f32 %v1695
        %v1712 = vcvt.s32.f32 %v1696
        %v1713 = vcvt.s32.f32 %v1697
        %v1714 = vcvt.s32.f32 %v1698
        %v1715 = vcvt.s32.f32 %v1699
        %v1716 = vcvt.s32.f32 %v1700
        %v1717 = vcvt.s32.f32 %v1701
        %v1718 = vcvt.s32.f32 %v1702
        %v1719 = vcvt.s32.f32 %v1703
        %v1720 = vcvt.s32.f32 %v1704
        %v1721 = vcvt.s32.f32 %v1705
        %v1722 = vcvt.s32.f32 %v1706
        %v1723 = vcvt.s32.f32 %v1707
        %v1724 = vpack.c.bf16 %v1709, %v1708
        %v1725 = vpack.c.bf16 %v1711, %v1710
        %v1726 = vpack.c.bf16 %v1713, %v1712
        %v1727 = vpack.c.bf16 %v1715, %v1714
        %v1728 = vpack.c.bf16 %v1717, %v1716
        %v1729 = vpack.c.bf16 %v1719, %v1718
        %v1730 = vpack.c.bf16 %v1721, %v1720
        %v1731 = vpack.c.bf16 %v1723, %v1722
        %1732 = vmatprep.subr.bf16.mxu0 0
        %1733 = vmatpush1.bf16.msra.mxu0 %v1192
        %1734 = vmatprep.subr.bf16.mxu0 0
        %1735 = vmatpush1.bf16.msra.mxu0 %v1191
        %1736 = vmatprep.subr.bf16.mxu0 0
        %1737 = vmatpush1.bf16.msra.mxu0 %v1190
        %1738 = vmatprep.subr.bf16.mxu0 0
        %1739 = vmatpush1.bf16.msra.mxu0 %v1189
        %1740 = vmatprep.subr.bf16.mxu0 0
        %1741 = vmatpush1.bf16.msra.mxu0 %v1188
        %1742 = vmatprep.subr.bf16.mxu0 0
        %1743 = vmatpush1.bf16.msra.mxu0 %v1187
        %1744 = vmatprep.subr.bf16.mxu0 0
        %1745 = vmatpush1.bf16.msra.mxu0 %v1186
        %1746 = vmatprep.subr.bf16.mxu0 0
        %1747 = vmatpush1.bf16.msra.mxu0 %v1185
        %1748 = vmatprep.subr.bf16.mxu0 0
        %1749 = vmatpush2.bf16.msra.mxu0 0
        %1750 = vmatprep.subr.bf16.mxu0 0
        %1751 = vmatpush2.bf16.msra.mxu0 0
        %1752 = vmatprep.subr.bf16.mxu0 0
        %1753 = vmatpush2.bf16.msra.mxu0 0
        %1754 = vmatprep.subr.bf16.mxu0 0
        %1755 = vmatpush2.bf16.msra.mxu0 0
        %1756 = vmatprep.subr.bf16.mxu0 0
        %1757 = vmatpush2.bf16.msra.mxu0 0
        %1758 = vmatprep.subr.bf16.mxu0 0
        %1759 = vmatpush2.bf16.msra.mxu0 0
        %1760 = vmatprep.subr.bf16.mxu0 0
        %1761 = vmatpush2.bf16.msra.mxu0 0
        %1762 = vmatprep.subr.bf16.mxu0 0
        %1763 = vmatpush2.bf16.msra.mxu0 0
        %1764 = vmatprep.mubr.bf16.mxu0 0
        %1765 = vmatmul.mubr.bf16.gmra.mxu0 %v1724
        %v1766 = vpop.f32.mrf.mxu0
        %v1767 = vadd.f32 %v1151, %v1766
        %v1768 = vpop.f32.mrf.mxu0
        %v1769 = vpop.f32.mrf.mxu0
        %v1770 = vadd.f32 %v1151, %v1769
        %v1771 = vpop.f32.mrf.mxu0
        %1772 = vmatprep.mubr.bf16.mxu0 0
        %1773 = vmatmul.mubr.bf16.gmra.mxu0 %v1725
        %v1774 = vpop.f32.mrf.mxu0
        %v1775 = vadd.f32 %v1151, %v1774
        %v1776 = vpop.f32.mrf.mxu0
        %v1777 = vpop.f32.mrf.mxu0
        %v1778 = vadd.f32 %v1151, %v1777
        %v1779 = vpop.f32.mrf.mxu0
        %1780 = vmatprep.mubr.bf16.mxu0 0
        %1781 = vmatmul.mubr.bf16.gmra.mxu0 %v1726
        %v1782 = vpop.f32.mrf.mxu0
        %v1783 = vadd.f32 %v1151, %v1782
        %v1784 = vpop.f32.mrf.mxu0
        %v1785 = vpop.f32.mrf.mxu0
        %v1786 = vadd.f32 %v1151, %v1785
        %v1787 = vpop.f32.mrf.mxu0
        %1788 = vmatprep.mubr.bf16.mxu0 0
        %1789 = vmatmul.mubr.bf16.gmra.mxu0 %v1727
        %v1790 = vpop.f32.mrf.mxu0
        %v1791 = vadd.f32 %v1151, %v1790
        %v1792 = vpop.f32.mrf.mxu0
        %v1793 = vpop.f32.mrf.mxu0
        %v1794 = vadd.f32 %v1151, %v1793
        %v1795 = vpop.f32.mrf.mxu0
        %1796 = vmatprep.mubr.bf16.mxu0 0
        %1797 = vmatmul.mubr.bf16.gmra.mxu0 %v1728
        %v1798 = vpop.f32.mrf.mxu0
        %v1799 = vadd.f32 %v1151, %v1798
        %v1800 = vpop.f32.mrf.mxu0
        %v1801 = vpop.f32.mrf.mxu0
        %v1802 = vadd.f32 %v1151, %v1801
        %v1803 = vpop.f32.mrf.mxu0
        %1804 = vmatprep.mubr.bf16.mxu0 0
        %1805 = vmatmul.mubr.bf16.gmra.mxu0 %v1729
        %v1806 = vpop.f32.mrf.mxu0
        %v1807 = vadd.f32 %v1151, %v1806
        %v1808 = vpop.f32.mrf.mxu0
        %v1809 = vpop.f32.mrf.mxu0
        %v1810 = vadd.f32 %v1151, %v1809
        %v1811 = vpop.f32.mrf.mxu0
        %1812 = vmatprep.mubr.bf16.mxu0 0
        %1813 = vmatmul.mubr.bf16.gmra.mxu0 %v1730
        %v1814 = vpop.f32.mrf.mxu0
        %v1815 = vadd.f32 %v1151, %v1814
        %v1816 = vpop.f32.mrf.mxu0
        %v1817 = vpop.f32.mrf.mxu0
        %v1818 = vadd.f32 %v1151, %v1817
        %v1819 = vpop.f32.mrf.mxu0
        %1820 = vmatprep.mubr.bf16.mxu0 0
        %1821 = vmatmul.mubr.bf16.gmra.mxu0 %v1731
        %v1822 = vpop.f32.mrf.mxu0
        %v1823 = vadd.f32 %v1151, %v1822
        %v1824 = vpop.f32.mrf.mxu0
        %v1825 = vpop.f32.mrf.mxu0
        %v1826 = vadd.f32 %v1151, %v1825
        %v1827 = vpop.f32.mrf.mxu0
        %1828 = vdwg.mxu0
        %v1829 = vxor.u32 %v1767, 2147483648
        %v1830 = vxor.u32 %v1770, 2147483648
        %v1831 = vxor.u32 %v1775, 2147483648
        %v1832 = vxor.u32 %v1778, 2147483648
        %v1833 = vxor.u32 %v1783, 2147483648
        %v1834 = vxor.u32 %v1786, 2147483648
        %v1835 = vxor.u32 %v1791, 2147483648
        %v1836 = vxor.u32 %v1794, 2147483648
        %v1837 = vxor.u32 %v1799, 2147483648
        %v1838 = vxor.u32 %v1802, 2147483648
        %v1839 = vxor.u32 %v1807, 2147483648
        %v1840 = vxor.u32 %v1810, 2147483648
        %v1841 = vxor.u32 %v1815, 2147483648
        %v1842 = vxor.u32 %v1818, 2147483648
        %v1843 = vxor.u32 %v1823, 2147483648
        %v1844 = vxor.u32 %v1826, 2147483648
        %v1845 = vmul.f32 %v1829, 1.442695
        %v1846 = vpow.pop %v1845
        %v1847 = vmul.f32 %v1830, 1.442695
        %v1848 = vpow.pop %v1847
        %v1849 = vmul.f32 %v1831, 1.442695
        %v1850 = vpow.pop %v1849
        %v1851 = vmul.f32 %v1832, 1.442695
        %v1852 = vpow.pop %v1851
        %v1853 = vmul.f32 %v1833, 1.442695
        %v1854 = vpow.pop %v1853
        %v1855 = vmul.f32 %v1834, 1.442695
        %v1856 = vpow.pop %v1855
        %v1857 = vmul.f32 %v1835, 1.442695
        %v1858 = vpow.pop %v1857
        %v1859 = vmul.f32 %v1836, 1.442695
        %v1860 = vpow.pop %v1859
        %v1861 = vmul.f32 %v1837, 1.442695
        %v1862 = vpow.pop %v1861
        %v1863 = vmul.f32 %v1838, 1.442695
        %v1864 = vpow.pop %v1863
        %v1865 = vmul.f32 %v1839, 1.442695
        %v1866 = vpow.pop %v1865
        %v1867 = vmul.f32 %v1840, 1.442695
        %v1868 = vpow.pop %v1867
        %v1869 = vmul.f32 %v1841, 1.442695
        %v1870 = vpow.pop %v1869
        %v1871 = vmul.f32 %v1842, 1.442695
        %v1872 = vpow.pop %v1871
        %v1873 = vmul.f32 %v1843, 1.442695
        %v1874 = vpow.pop %v1873
        %v1875 = vmul.f32 %v1844, 1.442695
        %v1876 = vpow.pop %v1875
        %v1877 = vadd.f32 %v1846, 1.0
        %v1878 = vadd.f32 %v1848, 1.0
        %v1879 = vadd.f32 %v1850, 1.0
        %v1880 = vadd.f32 %v1852, 1.0
        %v1881 = vadd.f32 %v1854, 1.0
        %v1882 = vadd.f32 %v1856, 1.0
        %v1883 = vadd.f32 %v1858, 1.0
        %v1884 = vadd.f32 %v1860, 1.0
        %v1885 = vadd.f32 %v1862, 1.0
        %v1886 = vadd.f32 %v1864, 1.0
        %v1887 = vadd.f32 %v1866, 1.0
        %v1888 = vadd.f32 %v1868, 1.0
        %v1889 = vadd.f32 %v1870, 1.0
        %v1890 = vadd.f32 %v1872, 1.0
        %v1891 = vadd.f32 %v1874, 1.0
        %v1892 = vadd.f32 %v1876, 1.0
        %v1893 = vrcp.pop %v1877
        %v1894 = vmul.f32 1.0, %v1893
        %v1895 = vrcp.pop %v1878
        %v1896 = vmul.f32 1.0, %v1895
        %v1897 = vrcp.pop %v1879
        %v1898 = vmul.f32 1.0, %v1897
        %v1899 = vrcp.pop %v1880
        %v1900 = vmul.f32 1.0, %v1899
        %v1901 = vrcp.pop %v1881
        %v1902 = vmul.f32 1.0, %v1901
        %v1903 = vrcp.pop %v1882
        %v1904 = vmul.f32 1.0, %v1903
        %v1905 = vrcp.pop %v1883
        %v1906 = vmul.f32 1.0, %v1905
        %v1907 = vrcp.pop %v1884
        %v1908 = vmul.f32 1.0, %v1907
        %v1909 = vrcp.pop %v1885
        %v1910 = vmul.f32 1.0, %v1909
        %v1911 = vrcp.pop %v1886
        %v1912 = vmul.f32 1.0, %v1911
        %v1913 = vrcp.pop %v1887
        %v1914 = vmul.f32 1.0, %v1913
        %v1915 = vrcp.pop %v1888
        %v1916 = vmul.f32 1.0, %v1915
        %v1917 = vrcp.pop %v1889
        %v1918 = vmul.f32 1.0, %v1917
        %v1919 = vrcp.pop %v1890
        %v1920 = vmul.f32 1.0, %v1919
        %v1921 = vrcp.pop %v1891
        %v1922 = vmul.f32 1.0, %v1921
        %v1923 = vrcp.pop %v1892
        %v1924 = vmul.f32 1.0, %v1923
        %s1925 = scalar_lea.vmem %s720, 128 [#allocation3]
        %v1926 = vld [vmem:[%s1925] sm:$0xff]
        %v1927 = vld [vmem:[%s1925 + $0x8] sm:$0xff]
        %v1928 = vld [vmem:[%s1925 + $0x10] sm:$0xff]
        %v1929 = vld [vmem:[%s1925 + $0x18] sm:$0xff]
        %v1930 = vld [vmem:[%s1925 + $0x20] sm:$0xff]
        %v1931 = vld [vmem:[%s1925 + $0x28] sm:$0xff]
        %v1932 = vld [vmem:[%s1925 + $0x30] sm:$0xff]
        %v1933 = vld [vmem:[%s1925 + $0x38] sm:$0xff]
        %v1934 = vld [vmem:[%s1925 + $0x40] sm:$0xff]
        %v1935 = vld [vmem:[%s1925 + $0x48] sm:$0xff]
        %v1936 = vld [vmem:[%s1925 + $0x50] sm:$0xff]
        %v1937 = vld [vmem:[%s1925 + $0x58] sm:$0xff]
        %v1938 = vld [vmem:[%s1925 + $0x60] sm:$0xff]
        %v1939 = vld [vmem:[%s1925 + $0x68] sm:$0xff]
        %v1940 = vld [vmem:[%s1925 + $0x70] sm:$0xff]
        %v1941 = vld [vmem:[%s1925 + $0x78] sm:$0xff]
        %vm1942 = vcmp.lt.f32.partialorder %v1926, %v1894
        %vm1943 = vcmp.lt.f32.partialorder %v1927, %v1896
        %vm1944 = vcmp.lt.f32.partialorder %v1928, %v1898
        %vm1945 = vcmp.lt.f32.partialorder %v1929, %v1900
        %vm1946 = vcmp.lt.f32.partialorder %v1930, %v1902
        %vm1947 = vcmp.lt.f32.partialorder %v1931, %v1904
        %vm1948 = vcmp.lt.f32.partialorder %v1932, %v1906
        %vm1949 = vcmp.lt.f32.partialorder %v1933, %v1908
        %vm1950 = vcmp.lt.f32.partialorder %v1934, %v1910
        %vm1951 = vcmp.lt.f32.partialorder %v1935, %v1912
        %vm1952 = vcmp.lt.f32.partialorder %v1936, %v1914
        %vm1953 = vcmp.lt.f32.partialorder %v1937, %v1916
        %vm1954 = vcmp.lt.f32.partialorder %v1938, %v1918
        %vm1955 = vcmp.lt.f32.partialorder %v1939, %v1920
        %vm1956 = vcmp.lt.f32.partialorder %v1940, %v1922
        %vm1957 = vcmp.lt.f32.partialorder %v1941, %v1924
        %v1958 = vsel %vm1942, 1, 0
        %v1959 = vsel %vm1943, 1, 0
        %v1960 = vsel %vm1944, 1, 0
        %v1961 = vsel %vm1945, 1, 0
        %v1962 = vsel %vm1946, 1, 0
        %v1963 = vsel %vm1947, 1, 0
        %v1964 = vsel %vm1948, 1, 0
        %v1965 = vsel %vm1949, 1, 0
        %v1966 = vsel %vm1950, 1, 0
        %v1967 = vsel %vm1951, 1, 0
        %v1968 = vsel %vm1952, 1, 0
        %v1969 = vsel %vm1953, 1, 0
        %v1970 = vsel %vm1954, 1, 0
        %v1971 = vsel %vm1955, 1, 0
        %v1972 = vsel %vm1956, 1, 0
        %v1973 = vsel %vm1957, 1, 0
        %v1974 = vcvt.s32.f32 %v1958
        %v1975 = vcvt.s32.f32 %v1959
        %v1976 = vcvt.s32.f32 %v1960
        %v1977 = vcvt.s32.f32 %v1961
        %v1978 = vcvt.s32.f32 %v1962
        %v1979 = vcvt.s32.f32 %v1963
        %v1980 = vcvt.s32.f32 %v1964
        %v1981 = vcvt.s32.f32 %v1965
        %v1982 = vcvt.s32.f32 %v1966
        %v1983 = vcvt.s32.f32 %v1967
        %v1984 = vcvt.s32.f32 %v1968
        %v1985 = vcvt.s32.f32 %v1969
        %v1986 = vcvt.s32.f32 %v1970
        %v1987 = vcvt.s32.f32 %v1971
        %v1988 = vcvt.s32.f32 %v1972
        %v1989 = vcvt.s32.f32 %v1973
        %v1990 = vpack.c.bf16 %v1975, %v1974
        %v1991 = vpack.c.bf16 %v1977, %v1976
        %v1992 = vpack.c.bf16 %v1979, %v1978
        %v1993 = vpack.c.bf16 %v1981, %v1980
        %v1994 = vpack.c.bf16 %v1983, %v1982
        %v1995 = vpack.c.bf16 %v1985, %v1984
        %v1996 = vpack.c.bf16 %v1987, %v1986
        %v1997 = vpack.c.bf16 %v1989, %v1988
        %1998 = vmatprep.subr.bf16.mxu0 0
        %1999 = vmatpush1.bf16.msra.mxu0 %v873
        %2000 = vmatprep.subr.bf16.mxu0 0
        %2001 = vmatpush1.bf16.msra.mxu0 %v872
        %2002 = vmatprep.subr.bf16.mxu0 0
        %2003 = vmatpush1.bf16.msra.mxu0 %v871
        %2004 = vmatprep.subr.bf16.mxu0 0
        %2005 = vmatpush1.bf16.msra.mxu0 %v870
        %2006 = vmatprep.subr.bf16.mxu0 0
        %2007 = vmatpush1.bf16.msra.mxu0 %v869
        %2008 = vmatprep.subr.bf16.mxu0 0
        %2009 = vmatpush1.bf16.msra.mxu0 %v868
        %2010 = vmatprep.subr.bf16.mxu0 0
        %2011 = vmatpush1.bf16.msra.mxu0 %v867
        %2012 = vmatprep.subr.bf16.mxu0 0
        %2013 = vmatpush1.bf16.msra.mxu0 %v866
        %2014 = vmatprep.subr.bf16.mxu0 0
        %2015 = vmatpush2.bf16.msra.mxu0 0
        %2016 = vmatprep.subr.bf16.mxu0 0
        %2017 = vmatpush2.bf16.msra.mxu0 0
        %2018 = vmatprep.subr.bf16.mxu0 0
        %2019 = vmatpush2.bf16.msra.mxu0 0
        %2020 = vmatprep.subr.bf16.mxu0 0
        %2021 = vmatpush2.bf16.msra.mxu0 0
        %2022 = vmatprep.subr.bf16.mxu0 0
        %2023 = vmatpush2.bf16.msra.mxu0 0
        %2024 = vmatprep.subr.bf16.mxu0 0
        %2025 = vmatpush2.bf16.msra.mxu0 0
        %2026 = vmatprep.subr.bf16.mxu0 0
        %2027 = vmatpush2.bf16.msra.mxu0 0
        %2028 = vmatprep.subr.bf16.mxu0 0
        %2029 = vmatpush2.bf16.msra.mxu0 0
        %2030 = vmatprep.mubr.bf16.mxu0 0
        %2031 = vmatmul.mubr.bf16.gmra.mxu0 %v1990
        %v2032 = vpop.f32.mrf.mxu0
        %v2033 = vadd.f32 %v832, %v2032
        %v2034 = vpop.f32.mrf.mxu0
        %v2035 = vpop.f32.mrf.mxu0
        %v2036 = vadd.f32 %v832, %v2035
        %v2037 = vpop.f32.mrf.mxu0
        %2038 = vmatprep.mubr.bf16.mxu0 0
        %2039 = vmatmul.mubr.bf16.gmra.mxu0 %v1991
        %v2040 = vpop.f32.mrf.mxu0
        %v2041 = vadd.f32 %v832, %v2040
        %v2042 = vpop.f32.mrf.mxu0
        %v2043 = vpop.f32.mrf.mxu0
        %v2044 = vadd.f32 %v832, %v2043
        %v2045 = vpop.f32.mrf.mxu0
        %2046 = vmatprep.mubr.bf16.mxu0 0
        %2047 = vmatmul.mubr.bf16.gmra.mxu0 %v1992
        %v2048 = vpop.f32.mrf.mxu0
        %v2049 = vadd.f32 %v832, %v2048
        %v2050 = vpop.f32.mrf.mxu0
        %v2051 = vpop.f32.mrf.mxu0
        %v2052 = vadd.f32 %v832, %v2051
        %v2053 = vpop.f32.mrf.mxu0
        %2054 = vmatprep.mubr.bf16.mxu0 0
        %2055 = vmatmul.mubr.bf16.gmra.mxu0 %v1993
        %v2056 = vpop.f32.mrf.mxu0
        %v2057 = vadd.f32 %v832, %v2056
        %v2058 = vpop.f32.mrf.mxu0
        %v2059 = vpop.f32.mrf.mxu0
        %v2060 = vadd.f32 %v832, %v2059
        %v2061 = vpop.f32.mrf.mxu0
        %2062 = vmatprep.mubr.bf16.mxu0 0
        %2063 = vmatmul.mubr.bf16.gmra.mxu0 %v1994
        %v2064 = vpop.f32.mrf.mxu0
        %v2065 = vadd.f32 %v832, %v2064
        %v2066 = vpop.f32.mrf.mxu0
        %v2067 = vpop.f32.mrf.mxu0
        %v2068 = vadd.f32 %v832, %v2067
        %v2069 = vpop.f32.mrf.mxu0
        %2070 = vmatprep.mubr.bf16.mxu0 0
        %2071 = vmatmul.mubr.bf16.gmra.mxu0 %v1995
        %v2072 = vpop.f32.mrf.mxu0
        %v2073 = vadd.f32 %v832, %v2072
        %v2074 = vpop.f32.mrf.mxu0
        %v2075 = vpop.f32.mrf.mxu0
        %v2076 = vadd.f32 %v832, %v2075
        %v2077 = vpop.f32.mrf.mxu0
        %2078 = vmatprep.mubr.bf16.mxu0 0
        %2079 = vmatmul.mubr.bf16.gmra.mxu0 %v1996
        %v2080 = vpop.f32.mrf.mxu0
        %v2081 = vadd.f32 %v832, %v2080
        %v2082 = vpop.f32.mrf.mxu0
        %v2083 = vpop.f32.mrf.mxu0
        %v2084 = vadd.f32 %v832, %v2083
        %v2085 = vpop.f32.mrf.mxu0
        %2086 = vmatprep.mubr.bf16.mxu0 0
        %2087 = vmatmul.mubr.bf16.gmra.mxu0 %v1997
        %v2088 = vpop.f32.mrf.mxu0
        %v2089 = vadd.f32 %v832, %v2088
        %v2090 = vpop.f32.mrf.mxu0
        %v2091 = vpop.f32.mrf.mxu0
        %v2092 = vadd.f32 %v832, %v2091
        %v2093 = vpop.f32.mrf.mxu0
        %2094 = vdwg.mxu0
        %v2095 = vxor.u32 %v2033, 2147483648
        %v2096 = vxor.u32 %v2036, 2147483648
        %v2097 = vxor.u32 %v2041, 2147483648
        %v2098 = vxor.u32 %v2044, 2147483648
        %v2099 = vxor.u32 %v2049, 2147483648
        %v2100 = vxor.u32 %v2052, 2147483648
        %v2101 = vxor.u32 %v2057, 2147483648
        %v2102 = vxor.u32 %v2060, 2147483648
        %v2103 = vxor.u32 %v2065, 2147483648
        %v2104 = vxor.u32 %v2068, 2147483648
        %v2105 = vxor.u32 %v2073, 2147483648
        %v2106 = vxor.u32 %v2076, 2147483648
        %v2107 = vxor.u32 %v2081, 2147483648
        %v2108 = vxor.u32 %v2084, 2147483648
        %v2109 = vxor.u32 %v2089, 2147483648
        %v2110 = vxor.u32 %v2092, 2147483648
        %v2111 = vmul.f32 %v2095, 1.442695
        %v2112 = vpow.pop %v2111
        %v2113 = vmul.f32 %v2096, 1.442695
        %v2114 = vpow.pop %v2113
        %v2115 = vmul.f32 %v2097, 1.442695
        %v2116 = vpow.pop %v2115
        %v2117 = vmul.f32 %v2098, 1.442695
        %v2118 = vpow.pop %v2117
        %v2119 = vmul.f32 %v2099, 1.442695
        %v2120 = vpow.pop %v2119
        %v2121 = vmul.f32 %v2100, 1.442695
        %v2122 = vpow.pop %v2121
        %v2123 = vmul.f32 %v2101, 1.442695
        %v2124 = vpow.pop %v2123
        %v2125 = vmul.f32 %v2102, 1.442695
        %v2126 = vpow.pop %v2125
        %v2127 = vmul.f32 %v2103, 1.442695
        %v2128 = vpow.pop %v2127
        %v2129 = vmul.f32 %v2104, 1.442695
        %v2130 = vpow.pop %v2129
        %v2131 = vmul.f32 %v2105, 1.442695
        %v2132 = vpow.pop %v2131
        %v2133 = vmul.f32 %v2106, 1.442695
        %v2134 = vpow.pop %v2133
        %v2135 = vmul.f32 %v2107, 1.442695
        %v2136 = vpow.pop %v2135
        %v2137 = vmul.f32 %v2108, 1.442695
        %v2138 = vpow.pop %v2137
        %v2139 = vmul.f32 %v2109, 1.442695
        %v2140 = vpow.pop %v2139
        %v2141 = vmul.f32 %v2110, 1.442695
        %v2142 = vpow.pop %v2141
        %v2143 = vadd.f32 %v2112, 1.0
        %v2144 = vadd.f32 %v2114, 1.0
        %v2145 = vadd.f32 %v2116, 1.0
        %v2146 = vadd.f32 %v2118, 1.0
        %v2147 = vadd.f32 %v2120, 1.0
        %v2148 = vadd.f32 %v2122, 1.0
        %v2149 = vadd.f32 %v2124, 1.0
        %v2150 = vadd.f32 %v2126, 1.0
        %v2151 = vadd.f32 %v2128, 1.0
        %v2152 = vadd.f32 %v2130, 1.0
        %v2153 = vadd.f32 %v2132, 1.0
        %v2154 = vadd.f32 %v2134, 1.0
        %v2155 = vadd.f32 %v2136, 1.0
        %v2156 = vadd.f32 %v2138, 1.0
        %v2157 = vadd.f32 %v2140, 1.0
        %v2158 = vadd.f32 %v2142, 1.0
        %v2159 = vrcp.pop %v2143
        %v2160 = vmul.f32 1.0, %v2159
        %v2161 = vrcp.pop %v2144
        %v2162 = vmul.f32 1.0, %v2161
        %v2163 = vrcp.pop %v2145
        %v2164 = vmul.f32 1.0, %v2163
        %v2165 = vrcp.pop %v2146
        %v2166 = vmul.f32 1.0, %v2165
        %v2167 = vrcp.pop %v2147
        %v2168 = vmul.f32 1.0, %v2167
        %v2169 = vrcp.pop %v2148
        %v2170 = vmul.f32 1.0, %v2169
        %v2171 = vrcp.pop %v2149
        %v2172 = vmul.f32 1.0, %v2171
        %v2173 = vrcp.pop %v2150
        %v2174 = vmul.f32 1.0, %v2173
        %v2175 = vrcp.pop %v2151
        %v2176 = vmul.f32 1.0, %v2175
        %v2177 = vrcp.pop %v2152
        %v2178 = vmul.f32 1.0, %v2177
        %v2179 = vrcp.pop %v2153
        %v2180 = vmul.f32 1.0, %v2179
        %v2181 = vrcp.pop %v2154
        %v2182 = vmul.f32 1.0, %v2181
        %v2183 = vrcp.pop %v2155
        %v2184 = vmul.f32 1.0, %v2183
        %v2185 = vrcp.pop %v2156
        %v2186 = vmul.f32 1.0, %v2185
        %v2187 = vrcp.pop %v2157
        %v2188 = vmul.f32 1.0, %v2187
        %v2189 = vrcp.pop %v2158
        %v2190 = vmul.f32 1.0, %v2189
        %s2191 = scalar_lea.vmem %s713, 256 [#allocation2]
        %v2192 = vld [vmem:[%s2191] sm:$0xff]
        %v2193 = vld [vmem:[%s2191 + $0x8] sm:$0xff]
        %v2194 = vld [vmem:[%s2191 + $0x10] sm:$0xff]
        %v2195 = vld [vmem:[%s2191 + $0x18] sm:$0xff]
        %v2196 = vld [vmem:[%s2191 + $0x20] sm:$0xff]
        %v2197 = vld [vmem:[%s2191 + $0x28] sm:$0xff]
        %v2198 = vld [vmem:[%s2191 + $0x30] sm:$0xff]
        %v2199 = vld [vmem:[%s2191 + $0x38] sm:$0xff]
        %v2200 = vld [vmem:[%s2191 + $0x40] sm:$0xff]
        %v2201 = vld [vmem:[%s2191 + $0x48] sm:$0xff]
        %v2202 = vld [vmem:[%s2191 + $0x50] sm:$0xff]
        %v2203 = vld [vmem:[%s2191 + $0x58] sm:$0xff]
        %v2204 = vld [vmem:[%s2191 + $0x60] sm:$0xff]
        %v2205 = vld [vmem:[%s2191 + $0x68] sm:$0xff]
        %v2206 = vld [vmem:[%s2191 + $0x70] sm:$0xff]
        %v2207 = vld [vmem:[%s2191 + $0x78] sm:$0xff]
        %vm2208 = vcmp.lt.f32.partialorder %v2192, %v2160
        %vm2209 = vcmp.lt.f32.partialorder %v2193, %v2162
        %vm2210 = vcmp.lt.f32.partialorder %v2194, %v2164
        %vm2211 = vcmp.lt.f32.partialorder %v2195, %v2166
        %vm2212 = vcmp.lt.f32.partialorder %v2196, %v2168
        %vm2213 = vcmp.lt.f32.partialorder %v2197, %v2170
        %vm2214 = vcmp.lt.f32.partialorder %v2198, %v2172
        %vm2215 = vcmp.lt.f32.partialorder %v2199, %v2174
        %vm2216 = vcmp.lt.f32.partialorder %v2200, %v2176
        %vm2217 = vcmp.lt.f32.partialorder %v2201, %v2178
        %vm2218 = vcmp.lt.f32.partialorder %v2202, %v2180
        %vm2219 = vcmp.lt.f32.partialorder %v2203, %v2182
        %vm2220 = vcmp.lt.f32.partialorder %v2204, %v2184
        %vm2221 = vcmp.lt.f32.partialorder %v2205, %v2186
        %vm2222 = vcmp.lt.f32.partialorder %v2206, %v2188
        %vm2223 = vcmp.lt.f32.partialorder %v2207, %v2190
        %v2224 = vsel %vm2208, 1, 0
        %v2225 = vsel %vm2209, 1, 0
        %v2226 = vsel %vm2210, 1, 0
        %v2227 = vsel %vm2211, 1, 0
        %v2228 = vsel %vm2212, 1, 0
        %v2229 = vsel %vm2213, 1, 0
        %v2230 = vsel %vm2214, 1, 0
        %v2231 = vsel %vm2215, 1, 0
        %v2232 = vsel %vm2216, 1, 0
        %v2233 = vsel %vm2217, 1, 0
        %v2234 = vsel %vm2218, 1, 0
        %v2235 = vsel %vm2219, 1, 0
        %v2236 = vsel %vm2220, 1, 0
        %v2237 = vsel %vm2221, 1, 0
        %v2238 = vsel %vm2222, 1, 0
        %v2239 = vsel %vm2223, 1, 0
        %v2240 = vcvt.s32.f32 %v2224
        %v2241 = vcvt.s32.f32 %v2225
        %v2242 = vcvt.s32.f32 %v2226
        %v2243 = vcvt.s32.f32 %v2227
        %v2244 = vcvt.s32.f32 %v2228
        %v2245 = vcvt.s32.f32 %v2229
        %v2246 = vcvt.s32.f32 %v2230
        %v2247 = vcvt.s32.f32 %v2231
        %v2248 = vcvt.s32.f32 %v2232
        %v2249 = vcvt.s32.f32 %v2233
        %v2250 = vcvt.s32.f32 %v2234
        %v2251 = vcvt.s32.f32 %v2235
        %v2252 = vcvt.s32.f32 %v2236
        %v2253 = vcvt.s32.f32 %v2237
        %v2254 = vcvt.s32.f32 %v2238
        %v2255 = vcvt.s32.f32 %v2239
        %v2256 = vpack.c.bf16 %v2241, %v2240
        %v2257 = vpack.c.bf16 %v2243, %v2242
        %v2258 = vpack.c.bf16 %v2245, %v2244
        %v2259 = vpack.c.bf16 %v2247, %v2246
        %v2260 = vpack.c.bf16 %v2249, %v2248
        %v2261 = vpack.c.bf16 %v2251, %v2250
        %v2262 = vpack.c.bf16 %v2253, %v2252
        %v2263 = vpack.c.bf16 %v2255, %v2254
        %2264 = vmatprep.subr.bf16.mxu0 0
        %2265 = vmatpush1.bf16.msra.mxu0 %v1192
        %2266 = vmatprep.subr.bf16.mxu0 0
        %2267 = vmatpush1.bf16.msra.mxu0 %v1191
        %2268 = vmatprep.subr.bf16.mxu0 0
        %2269 = vmatpush1.bf16.msra.mxu0 %v1190
        %2270 = vmatprep.subr.bf16.mxu0 0
        %2271 = vmatpush1.bf16.msra.mxu0 %v1189
        %2272 = vmatprep.subr.bf16.mxu0 0
        %2273 = vmatpush1.bf16.msra.mxu0 %v1188
        %2274 = vmatprep.subr.bf16.mxu0 0
        %2275 = vmatpush1.bf16.msra.mxu0 %v1187
        %2276 = vmatprep.subr.bf16.mxu0 0
        %2277 = vmatpush1.bf16.msra.mxu0 %v1186
        %2278 = vmatprep.subr.bf16.mxu0 0
        %2279 = vmatpush1.bf16.msra.mxu0 %v1185
        %2280 = vmatprep.subr.bf16.mxu0 0
        %2281 = vmatpush2.bf16.msra.mxu0 0
        %2282 = vmatprep.subr.bf16.mxu0 0
        %2283 = vmatpush2.bf16.msra.mxu0 0
        %2284 = vmatprep.subr.bf16.mxu0 0
        %2285 = vmatpush2.bf16.msra.mxu0 0
        %2286 = vmatprep.subr.bf16.mxu0 0
        %2287 = vmatpush2.bf16.msra.mxu0 0
        %2288 = vmatprep.subr.bf16.mxu0 0
        %2289 = vmatpush2.bf16.msra.mxu0 0
        %2290 = vmatprep.subr.bf16.mxu0 0
        %2291 = vmatpush2.bf16.msra.mxu0 0
        %2292 = vmatprep.subr.bf16.mxu0 0
        %2293 = vmatpush2.bf16.msra.mxu0 0
        %2294 = vmatprep.subr.bf16.mxu0 0
        %2295 = vmatpush2.bf16.msra.mxu0 0
        %2296 = vmatprep.mubr.bf16.mxu0 0
        %2297 = vmatmul.mubr.bf16.gmra.mxu0 %v2256
        %v2298 = vpop.f32.mrf.mxu0
        %v2299 = vadd.f32 %v1151, %v2298
        %v2300 = vpop.f32.mrf.mxu0
        %v2301 = vpop.f32.mrf.mxu0
        %v2302 = vadd.f32 %v1151, %v2301
        %v2303 = vpop.f32.mrf.mxu0
        %2304 = vmatprep.mubr.bf16.mxu0 0
        %2305 = vmatmul.mubr.bf16.gmra.mxu0 %v2257
        %v2306 = vpop.f32.mrf.mxu0
        %v2307 = vadd.f32 %v1151, %v2306
        %v2308 = vpop.f32.mrf.mxu0
        %v2309 = vpop.f32.mrf.mxu0
        %v2310 = vadd.f32 %v1151, %v2309
        %v2311 = vpop.f32.mrf.mxu0
        %2312 = vmatprep.mubr.bf16.mxu0 0
        %2313 = vmatmul.mubr.bf16.gmra.mxu0 %v2258
        %v2314 = vpop.f32.mrf.mxu0
        %v2315 = vadd.f32 %v1151, %v2314
        %v2316 = vpop.f32.mrf.mxu0
        %v2317 = vpop.f32.mrf.mxu0
        %v2318 = vadd.f32 %v1151, %v2317
        %v2319 = vpop.f32.mrf.mxu0
        %2320 = vmatprep.mubr.bf16.mxu0 0
        %2321 = vmatmul.mubr.bf16.gmra.mxu0 %v2259
        %v2322 = vpop.f32.mrf.mxu0
        %v2323 = vadd.f32 %v1151, %v2322
        %v2324 = vpop.f32.mrf.mxu0
        %v2325 = vpop.f32.mrf.mxu0
        %v2326 = vadd.f32 %v1151, %v2325
        %v2327 = vpop.f32.mrf.mxu0
        %2328 = vmatprep.mubr.bf16.mxu0 0
        %2329 = vmatmul.mubr.bf16.gmra.mxu0 %v2260
        %v2330 = vpop.f32.mrf.mxu0
        %v2331 = vadd.f32 %v1151, %v2330
        %v2332 = vpop.f32.mrf.mxu0
        %v2333 = vpop.f32.mrf.mxu0
        %v2334 = vadd.f32 %v1151, %v2333
        %v2335 = vpop.f32.mrf.mxu0
        %2336 = vmatprep.mubr.bf16.mxu0 0
        %2337 = vmatmul.mubr.bf16.gmra.mxu0 %v2261
        %v2338 = vpop.f32.mrf.mxu0
        %v2339 = vadd.f32 %v1151, %v2338
        %v2340 = vpop.f32.mrf.mxu0
        %v2341 = vpop.f32.mrf.mxu0
        %v2342 = vadd.f32 %v1151, %v2341
        %v2343 = vpop.f32.mrf.mxu0
        %2344 = vmatprep.mubr.bf16.mxu0 0
        %2345 = vmatmul.mubr.bf16.gmra.mxu0 %v2262
        %v2346 = vpop.f32.mrf.mxu0
        %v2347 = vadd.f32 %v1151, %v2346
        %v2348 = vpop.f32.mrf.mxu0
        %v2349 = vpop.f32.mrf.mxu0
        %v2350 = vadd.f32 %v1151, %v2349
        %v2351 = vpop.f32.mrf.mxu0
        %2352 = vmatprep.mubr.bf16.mxu0 0
        %2353 = vmatmul.mubr.bf16.gmra.mxu0 %v2263
        %v2354 = vpop.f32.mrf.mxu0
        %v2355 = vadd.f32 %v1151, %v2354
        %v2356 = vpop.f32.mrf.mxu0
        %v2357 = vpop.f32.mrf.mxu0
        %v2358 = vadd.f32 %v1151, %v2357
        %v2359 = vpop.f32.mrf.mxu0
        %2360 = vdwg.mxu0
        %v2361 = vxor.u32 %v2299, 2147483648
        %v2362 = vxor.u32 %v2302, 2147483648
        %v2363 = vxor.u32 %v2307, 2147483648
        %v2364 = vxor.u32 %v2310, 2147483648
        %v2365 = vxor.u32 %v2315, 2147483648
        %v2366 = vxor.u32 %v2318, 2147483648
        %v2367 = vxor.u32 %v2323, 2147483648
        %v2368 = vxor.u32 %v2326, 2147483648
        %v2369 = vxor.u32 %v2331, 2147483648
        %v2370 = vxor.u32 %v2334, 2147483648
        %v2371 = vxor.u32 %v2339, 2147483648
        %v2372 = vxor.u32 %v2342, 2147483648
        %v2373 = vxor.u32 %v2347, 2147483648
        %v2374 = vxor.u32 %v2350, 2147483648
        %v2375 = vxor.u32 %v2355, 2147483648
        %v2376 = vxor.u32 %v2358, 2147483648
        %v2377 = vmul.f32 %v2361, 1.442695
        %v2378 = vpow.pop %v2377
        %v2379 = vmul.f32 %v2362, 1.442695
        %v2380 = vpow.pop %v2379
        %v2381 = vmul.f32 %v2363, 1.442695
        %v2382 = vpow.pop %v2381
        %v2383 = vmul.f32 %v2364, 1.442695
        %v2384 = vpow.pop %v2383
        %v2385 = vmul.f32 %v2365, 1.442695
        %v2386 = vpow.pop %v2385
        %v2387 = vmul.f32 %v2366, 1.442695
        %v2388 = vpow.pop %v2387
        %v2389 = vmul.f32 %v2367, 1.442695
        %v2390 = vpow.pop %v2389
        %v2391 = vmul.f32 %v2368, 1.442695
        %v2392 = vpow.pop %v2391
        %v2393 = vmul.f32 %v2369, 1.442695
        %v2394 = vpow.pop %v2393
        %v2395 = vmul.f32 %v2370, 1.442695
        %v2396 = vpow.pop %v2395
        %v2397 = vmul.f32 %v2371, 1.442695
        %v2398 = vpow.pop %v2397
        %v2399 = vmul.f32 %v2372, 1.442695
        %v2400 = vpow.pop %v2399
        %v2401 = vmul.f32 %v2373, 1.442695
        %v2402 = vpow.pop %v2401
        %v2403 = vmul.f32 %v2374, 1.442695
        %v2404 = vpow.pop %v2403
        %v2405 = vmul.f32 %v2375, 1.442695
        %v2406 = vpow.pop %v2405
        %v2407 = vmul.f32 %v2376, 1.442695
        %v2408 = vpow.pop %v2407
        %v2409 = vadd.f32 %v2378, 1.0
        %v2410 = vadd.f32 %v2380, 1.0
        %v2411 = vadd.f32 %v2382, 1.0
        %v2412 = vadd.f32 %v2384, 1.0
        %v2413 = vadd.f32 %v2386, 1.0
        %v2414 = vadd.f32 %v2388, 1.0
        %v2415 = vadd.f32 %v2390, 1.0
        %v2416 = vadd.f32 %v2392, 1.0
        %v2417 = vadd.f32 %v2394, 1.0
        %v2418 = vadd.f32 %v2396, 1.0
        %v2419 = vadd.f32 %v2398, 1.0
        %v2420 = vadd.f32 %v2400, 1.0
        %v2421 = vadd.f32 %v2402, 1.0
        %v2422 = vadd.f32 %v2404, 1.0
        %v2423 = vadd.f32 %v2406, 1.0
        %v2424 = vadd.f32 %v2408, 1.0
        %v2425 = vrcp.pop %v2409
        %v2426 = vmul.f32 1.0, %v2425
        %v2427 = vrcp.pop %v2410
        %v2428 = vmul.f32 1.0, %v2427
        %v2429 = vrcp.pop %v2411
        %v2430 = vmul.f32 1.0, %v2429
        %v2431 = vrcp.pop %v2412
        %v2432 = vmul.f32 1.0, %v2431
        %v2433 = vrcp.pop %v2413
        %v2434 = vmul.f32 1.0, %v2433
        %v2435 = vrcp.pop %v2414
        %v2436 = vmul.f32 1.0, %v2435
        %v2437 = vrcp.pop %v2415
        %v2438 = vmul.f32 1.0, %v2437
        %v2439 = vrcp.pop %v2416
        %v2440 = vmul.f32 1.0, %v2439
        %v2441 = vrcp.pop %v2417
        %v2442 = vmul.f32 1.0, %v2441
        %v2443 = vrcp.pop %v2418
        %v2444 = vmul.f32 1.0, %v2443
        %v2445 = vrcp.pop %v2419
        %v2446 = vmul.f32 1.0, %v2445
        %v2447 = vrcp.pop %v2420
        %v2448 = vmul.f32 1.0, %v2447
        %v2449 = vrcp.pop %v2421
        %v2450 = vmul.f32 1.0, %v2449
        %v2451 = vrcp.pop %v2422
        %v2452 = vmul.f32 1.0, %v2451
        %v2453 = vrcp.pop %v2423
        %v2454 = vmul.f32 1.0, %v2453
        %v2455 = vrcp.pop %v2424
        %v2456 = vmul.f32 1.0, %v2455
        %s2457 = scalar_lea.vmem %s720, 256 [#allocation3]
        %v2458 = vld [vmem:[%s2457] sm:$0xff]
        %v2459 = vld [vmem:[%s2457 + $0x8] sm:$0xff]
        %v2460 = vld [vmem:[%s2457 + $0x10] sm:$0xff]
        %v2461 = vld [vmem:[%s2457 + $0x18] sm:$0xff]
        %v2462 = vld [vmem:[%s2457 + $0x20] sm:$0xff]
        %v2463 = vld [vmem:[%s2457 + $0x28] sm:$0xff]
        %v2464 = vld [vmem:[%s2457 + $0x30] sm:$0xff]
        %v2465 = vld [vmem:[%s2457 + $0x38] sm:$0xff]
        %v2466 = vld [vmem:[%s2457 + $0x40] sm:$0xff]
        %v2467 = vld [vmem:[%s2457 + $0x48] sm:$0xff]
        %v2468 = vld [vmem:[%s2457 + $0x50] sm:$0xff]
        %v2469 = vld [vmem:[%s2457 + $0x58] sm:$0xff]
        %v2470 = vld [vmem:[%s2457 + $0x60] sm:$0xff]
        %v2471 = vld [vmem:[%s2457 + $0x68] sm:$0xff]
        %v2472 = vld [vmem:[%s2457 + $0x70] sm:$0xff]
        %v2473 = vld [vmem:[%s2457 + $0x78] sm:$0xff]
        %vm2474 = vcmp.lt.f32.partialorder %v2458, %v2426
        %vm2475 = vcmp.lt.f32.partialorder %v2459, %v2428
        %vm2476 = vcmp.lt.f32.partialorder %v2460, %v2430
        %vm2477 = vcmp.lt.f32.partialorder %v2461, %v2432
        %vm2478 = vcmp.lt.f32.partialorder %v2462, %v2434
        %vm2479 = vcmp.lt.f32.partialorder %v2463, %v2436
        %vm2480 = vcmp.lt.f32.partialorder %v2464, %v2438
        %vm2481 = vcmp.lt.f32.partialorder %v2465, %v2440
        %vm2482 = vcmp.lt.f32.partialorder %v2466, %v2442
        %vm2483 = vcmp.lt.f32.partialorder %v2467, %v2444
        %vm2484 = vcmp.lt.f32.partialorder %v2468, %v2446
        %vm2485 = vcmp.lt.f32.partialorder %v2469, %v2448
        %vm2486 = vcmp.lt.f32.partialorder %v2470, %v2450
        %vm2487 = vcmp.lt.f32.partialorder %v2471, %v2452
        %vm2488 = vcmp.lt.f32.partialorder %v2472, %v2454
        %vm2489 = vcmp.lt.f32.partialorder %v2473, %v2456
        %v2490 = vsel %vm2474, 1, 0
        %v2491 = vsel %vm2475, 1, 0
        %v2492 = vsel %vm2476, 1, 0
        %v2493 = vsel %vm2477, 1, 0
        %v2494 = vsel %vm2478, 1, 0
        %v2495 = vsel %vm2479, 1, 0
        %v2496 = vsel %vm2480, 1, 0
        %v2497 = vsel %vm2481, 1, 0
        %v2498 = vsel %vm2482, 1, 0
        %v2499 = vsel %vm2483, 1, 0
        %v2500 = vsel %vm2484, 1, 0
        %v2501 = vsel %vm2485, 1, 0
        %v2502 = vsel %vm2486, 1, 0
        %v2503 = vsel %vm2487, 1, 0
        %v2504 = vsel %vm2488, 1, 0
        %v2505 = vsel %vm2489, 1, 0
        %v2506 = vcvt.s32.f32 %v2490
        %v2507 = vcvt.s32.f32 %v2491
        %v2508 = vcvt.s32.f32 %v2492
        %v2509 = vcvt.s32.f32 %v2493
        %v2510 = vcvt.s32.f32 %v2494
        %v2511 = vcvt.s32.f32 %v2495
        %v2512 = vcvt.s32.f32 %v2496
        %v2513 = vcvt.s32.f32 %v2497
        %v2514 = vcvt.s32.f32 %v2498
        %v2515 = vcvt.s32.f32 %v2499
        %v2516 = vcvt.s32.f32 %v2500
        %v2517 = vcvt.s32.f32 %v2501
        %v2518 = vcvt.s32.f32 %v2502
        %v2519 = vcvt.s32.f32 %v2503
        %v2520 = vcvt.s32.f32 %v2504
        %v2521 = vcvt.s32.f32 %v2505
        %v2522 = vpack.c.bf16 %v2507, %v2506
        %v2523 = vpack.c.bf16 %v2509, %v2508
        %v2524 = vpack.c.bf16 %v2511, %v2510
        %v2525 = vpack.c.bf16 %v2513, %v2512
        %v2526 = vpack.c.bf16 %v2515, %v2514
        %v2527 = vpack.c.bf16 %v2517, %v2516
        %v2528 = vpack.c.bf16 %v2519, %v2518
        %v2529 = vpack.c.bf16 %v2521, %v2520
        %2530 = vmatprep.subr.bf16.mxu0 0
        %2531 = vmatpush1.bf16.msra.mxu0 %v873
        %2532 = vmatprep.subr.bf16.mxu0 0
        %2533 = vmatpush1.bf16.msra.mxu0 %v872
        %2534 = vmatprep.subr.bf16.mxu0 0
        %2535 = vmatpush1.bf16.msra.mxu0 %v871
        %2536 = vmatprep.subr.bf16.mxu0 0
        %2537 = vmatpush1.bf16.msra.mxu0 %v870
        %2538 = vmatprep.subr.bf16.mxu0 0
        %2539 = vmatpush1.bf16.msra.mxu0 %v869
        %2540 = vmatprep.subr.bf16.mxu0 0
        %2541 = vmatpush1.bf16.msra.mxu0 %v868
        %2542 = vmatprep.subr.bf16.mxu0 0
        %2543 = vmatpush1.bf16.msra.mxu0 %v867
        %2544 = vmatprep.subr.bf16.mxu0 0
        %2545 = vmatpush1.bf16.msra.mxu0 %v866
        %2546 = vmatprep.subr.bf16.mxu0 0
        %2547 = vmatpush2.bf16.msra.mxu0 0
        %2548 = vmatprep.subr.bf16.mxu0 0
        %2549 = vmatpush2.bf16.msra.mxu0 0
        %2550 = vmatprep.subr.bf16.mxu0 0
        %2551 = vmatpush2.bf16.msra.mxu0 0
        %2552 = vmatprep.subr.bf16.mxu0 0
        %2553 = vmatpush2.bf16.msra.mxu0 0
        %2554 = vmatprep.subr.bf16.mxu0 0
        %2555 = vmatpush2.bf16.msra.mxu0 0
        %2556 = vmatprep.subr.bf16.mxu0 0
        %2557 = vmatpush2.bf16.msra.mxu0 0
        %2558 = vmatprep.subr.bf16.mxu0 0
        %2559 = vmatpush2.bf16.msra.mxu0 0
        %2560 = vmatprep.subr.bf16.mxu0 0
        %2561 = vmatpush2.bf16.msra.mxu0 0
        %2562 = vmatprep.mubr.bf16.mxu0 0
        %2563 = vmatmul.mubr.bf16.gmra.mxu0 %v2522
        %v2564 = vpop.f32.mrf.mxu0
        %v2565 = vadd.f32 %v832, %v2564
        %v2566 = vpop.f32.mrf.mxu0
        %v2567 = vpop.f32.mrf.mxu0
        %v2568 = vadd.f32 %v832, %v2567
        %v2569 = vpop.f32.mrf.mxu0
        %2570 = vmatprep.mubr.bf16.mxu0 0
        %2571 = vmatmul.mubr.bf16.gmra.mxu0 %v2523
        %v2572 = vpop.f32.mrf.mxu0
        %v2573 = vadd.f32 %v832, %v2572
        %v2574 = vpop.f32.mrf.mxu0
        %v2575 = vpop.f32.mrf.mxu0
        %v2576 = vadd.f32 %v832, %v2575
        %v2577 = vpop.f32.mrf.mxu0
        %2578 = vmatprep.mubr.bf16.mxu0 0
        %2579 = vmatmul.mubr.bf16.gmra.mxu0 %v2524
        %v2580 = vpop.f32.mrf.mxu0
        %v2581 = vadd.f32 %v832, %v2580
        %v2582 = vpop.f32.mrf.mxu0
        %v2583 = vpop.f32.mrf.mxu0
        %v2584 = vadd.f32 %v832, %v2583
        %v2585 = vpop.f32.mrf.mxu0
        %2586 = vmatprep.mubr.bf16.mxu0 0
        %2587 = vmatmul.mubr.bf16.gmra.mxu0 %v2525
        %v2588 = vpop.f32.mrf.mxu0
        %v2589 = vadd.f32 %v832, %v2588
        %v2590 = vpop.f32.mrf.mxu0
        %v2591 = vpop.f32.mrf.mxu0
        %v2592 = vadd.f32 %v832, %v2591
        %v2593 = vpop.f32.mrf.mxu0
        %2594 = vmatprep.mubr.bf16.mxu0 0
        %2595 = vmatmul.mubr.bf16.gmra.mxu0 %v2526
        %v2596 = vpop.f32.mrf.mxu0
        %v2597 = vadd.f32 %v832, %v2596
        %v2598 = vpop.f32.mrf.mxu0
        %v2599 = vpop.f32.mrf.mxu0
        %v2600 = vadd.f32 %v832, %v2599
        %v2601 = vpop.f32.mrf.mxu0
        %2602 = vmatprep.mubr.bf16.mxu0 0
        %2603 = vmatmul.mubr.bf16.gmra.mxu0 %v2527
        %v2604 = vpop.f32.mrf.mxu0
        %v2605 = vadd.f32 %v832, %v2604
        %v2606 = vpop.f32.mrf.mxu0
        %v2607 = vpop.f32.mrf.mxu0
        %v2608 = vadd.f32 %v832, %v2607
        %v2609 = vpop.f32.mrf.mxu0
        %2610 = vmatprep.mubr.bf16.mxu0 0
        %2611 = vmatmul.mubr.bf16.gmra.mxu0 %v2528
        %v2612 = vpop.f32.mrf.mxu0
        %v2613 = vadd.f32 %v832, %v2612
        %v2614 = vpop.f32.mrf.mxu0
        %v2615 = vpop.f32.mrf.mxu0
        %v2616 = vadd.f32 %v832, %v2615
        %v2617 = vpop.f32.mrf.mxu0
        %2618 = vmatprep.mubr.bf16.mxu0 0
        %2619 = vmatmul.mubr.bf16.gmra.mxu0 %v2529
        %v2620 = vpop.f32.mrf.mxu0
        %v2621 = vadd.f32 %v832, %v2620
        %v2622 = vpop.f32.mrf.mxu0
        %v2623 = vpop.f32.mrf.mxu0
        %v2624 = vadd.f32 %v832, %v2623
        %v2625 = vpop.f32.mrf.mxu0
        %2626 = vdwg.mxu0
        %v2627 = vmax.f32 %v917, 0.0
        %v2628 = vmax.f32 %v920, 0.0
        %v2629 = vmax.f32 %v925, 0.0
        %v2630 = vmax.f32 %v928, 0.0
        %v2631 = vmax.f32 %v933, 0.0
        %v2632 = vmax.f32 %v936, 0.0
        %v2633 = vmax.f32 %v941, 0.0
        %v2634 = vmax.f32 %v944, 0.0
        %v2635 = vmax.f32 %v949, 0.0
        %v2636 = vmax.f32 %v952, 0.0
        %v2637 = vmax.f32 %v957, 0.0
        %v2638 = vmax.f32 %v960, 0.0
        %v2639 = vmax.f32 %v965, 0.0
        %v2640 = vmax.f32 %v968, 0.0
        %v2641 = vmax.f32 %v973, 0.0
        %v2642 = vmax.f32 %v976, 0.0
        %v2643 = vand.u32 2147483647, %v917
        %v2644 = vand.u32 2147483647, %v920
        %v2645 = vand.u32 2147483647, %v925
        %v2646 = vand.u32 2147483647, %v928
        %v2647 = vand.u32 2147483647, %v933
        %v2648 = vand.u32 2147483647, %v936
        %v2649 = vand.u32 2147483647, %v941
        %v2650 = vand.u32 2147483647, %v944
        %v2651 = vand.u32 2147483647, %v949
        %v2652 = vand.u32 2147483647, %v952
        %v2653 = vand.u32 2147483647, %v957
        %v2654 = vand.u32 2147483647, %v960
        %v2655 = vand.u32 2147483647, %v965
        %v2656 = vand.u32 2147483647, %v968
        %v2657 = vand.u32 2147483647, %v973
        %v2658 = vand.u32 2147483647, %v976
        %v2659 = vsub.f32 0.0, %v2643
        %v2660 = vsub.f32 0.0, %v2644
        %v2661 = vsub.f32 0.0, %v2645
        %v2662 = vsub.f32 0.0, %v2646
        %v2663 = vsub.f32 0.0, %v2647
        %v2664 = vsub.f32 0.0, %v2648
        %v2665 = vsub.f32 0.0, %v2649
        %v2666 = vsub.f32 0.0, %v2650
        %v2667 = vsub.f32 0.0, %v2651
        %v2668 = vsub.f32 0.0, %v2652
        %v2669 = vsub.f32 0.0, %v2653
        %v2670 = vsub.f32 0.0, %v2654
        %v2671 = vsub.f32 0.0, %v2655
        %v2672 = vsub.f32 0.0, %v2656
        %v2673 = vsub.f32 0.0, %v2657
        %v2674 = vsub.f32 0.0, %v2658
        %v2675 = vmul.f32 %v2659, 1.442695
        %v2676 = vpow.pop %v2675
        %v2677 = vmul.f32 %v2660, 1.442695
        %v2678 = vpow.pop %v2677
        %v2679 = vmul.f32 %v2661, 1.442695
        %v2680 = vpow.pop %v2679
        %v2681 = vmul.f32 %v2662, 1.442695
        %v2682 = vpow.pop %v2681
        %v2683 = vmul.f32 %v2663, 1.442695
        %v2684 = vpow.pop %v2683
        %v2685 = vmul.f32 %v2664, 1.442695
        %v2686 = vpow.pop %v2685
        %v2687 = vmul.f32 %v2665, 1.442695
        %v2688 = vpow.pop %v2687
        %v2689 = vmul.f32 %v2666, 1.442695
        %v2690 = vpow.pop %v2689
        %v2691 = vmul.f32 %v2667, 1.442695
        %v2692 = vpow.pop %v2691
        %v2693 = vmul.f32 %v2668, 1.442695
        %v2694 = vpow.pop %v2693
        %v2695 = vmul.f32 %v2669, 1.442695
        %v2696 = vpow.pop %v2695
        %v2697 = vmul.f32 %v2670, 1.442695
        %v2698 = vpow.pop %v2697
        %v2699 = vmul.f32 %v2671, 1.442695
        %v2700 = vpow.pop %v2699
        %v2701 = vmul.f32 %v2672, 1.442695
        %v2702 = vpow.pop %v2701
        %v2703 = vmul.f32 %v2673, 1.442695
        %v2704 = vpow.pop %v2703
        %v2705 = vmul.f32 %v2674, 1.442695
        %v2706 = vpow.pop %v2705
        %v2707 = vadd.f32 %v2676, 1.0
        %v2708 = vlog2.pop %v2707
        %v2709 = vmul.f32 %v2708, 0.6931472
        %v2710 = vmul.f32 -0.5, %v2676
        %v2711 = vadd.f32 %v2710, 1.0
        %v2712 = vmul.f32 %v2711, %v2676
        %v2713 = vand.u32 2147483647, %v2676
        %vm2714 = vcmp.lt.f32.partialorder %v2713, 0.0004427343
        %v2715 = vsel %vm2714, %v2712, %v2709
        %v2716 = vadd.f32 %v2678, 1.0
        %v2717 = vlog2.pop %v2716
        %v2718 = vmul.f32 %v2717, 0.6931472
        %v2719 = vmul.f32 -0.5, %v2678
        %v2720 = vadd.f32 %v2719, 1.0
        %v2721 = vmul.f32 %v2720, %v2678
        %v2722 = vand.u32 2147483647, %v2678
        %vm2723 = vcmp.lt.f32.partialorder %v2722, 0.0004427343
        %v2724 = vsel %vm2723, %v2721, %v2718
        %v2725 = vadd.f32 %v2680, 1.0
        %v2726 = vlog2.pop %v2725
        %v2727 = vmul.f32 %v2726, 0.6931472
        %v2728 = vmul.f32 -0.5, %v2680
        %v2729 = vadd.f32 %v2728, 1.0
        %v2730 = vmul.f32 %v2729, %v2680
        %v2731 = vand.u32 2147483647, %v2680
        %vm2732 = vcmp.lt.f32.partialorder %v2731, 0.0004427343
        %v2733 = vsel %vm2732, %v2730, %v2727
        %v2734 = vadd.f32 %v2682, 1.0
        %v2735 = vlog2.pop %v2734
        %v2736 = vmul.f32 %v2735, 0.6931472
        %v2737 = vmul.f32 -0.5, %v2682
        %v2738 = vadd.f32 %v2737, 1.0
        %v2739 = vmul.f32 %v2738, %v2682
        %v2740 = vand.u32 2147483647, %v2682
        %vm2741 = vcmp.lt.f32.partialorder %v2740, 0.0004427343
        %v2742 = vsel %vm2741, %v2739, %v2736
        %v2743 = vadd.f32 %v2684, 1.0
        %v2744 = vlog2.pop %v2743
        %v2745 = vmul.f32 %v2744, 0.6931472
        %v2746 = vmul.f32 -0.5, %v2684
        %v2747 = vadd.f32 %v2746, 1.0
        %v2748 = vmul.f32 %v2747, %v2684
        %v2749 = vand.u32 2147483647, %v2684
        %vm2750 = vcmp.lt.f32.partialorder %v2749, 0.0004427343
        %v2751 = vsel %vm2750, %v2748, %v2745
        %v2752 = vadd.f32 %v2686, 1.0
        %v2753 = vlog2.pop %v2752
        %v2754 = vmul.f32 %v2753, 0.6931472
        %v2755 = vmul.f32 -0.5, %v2686
        %v2756 = vadd.f32 %v2755, 1.0
        %v2757 = vmul.f32 %v2756, %v2686
        %v2758 = vand.u32 2147483647, %v2686
        %vm2759 = vcmp.lt.f32.partialorder %v2758, 0.0004427343
        %v2760 = vsel %vm2759, %v2757, %v2754
        %v2761 = vadd.f32 %v2688, 1.0
        %v2762 = vlog2.pop %v2761
        %v2763 = vmul.f32 %v2762, 0.6931472
        %v2764 = vmul.f32 -0.5, %v2688
        %v2765 = vadd.f32 %v2764, 1.0
        %v2766 = vmul.f32 %v2765, %v2688
        %v2767 = vand.u32 2147483647, %v2688
        %vm2768 = vcmp.lt.f32.partialorder %v2767, 0.0004427343
        %v2769 = vsel %vm2768, %v2766, %v2763
        %v2770 = vadd.f32 %v2690, 1.0
        %v2771 = vlog2.pop %v2770
        %v2772 = vmul.f32 %v2771, 0.6931472
        %v2773 = vmul.f32 -0.5, %v2690
        %v2774 = vadd.f32 %v2773, 1.0
        %v2775 = vmul.f32 %v2774, %v2690
        %v2776 = vand.u32 2147483647, %v2690
        %vm2777 = vcmp.lt.f32.partialorder %v2776, 0.0004427343
        %v2778 = vsel %vm2777, %v2775, %v2772
        %v2779 = vadd.f32 %v2692, 1.0
        %v2780 = vlog2.pop %v2779
        %v2781 = vmul.f32 %v2780, 0.6931472
        %v2782 = vmul.f32 -0.5, %v2692
        %v2783 = vadd.f32 %v2782, 1.0
        %v2784 = vmul.f32 %v2783, %v2692
        %v2785 = vand.u32 2147483647, %v2692
        %vm2786 = vcmp.lt.f32.partialorder %v2785, 0.0004427343
        %v2787 = vsel %vm2786, %v2784, %v2781
        %v2788 = vadd.f32 %v2694, 1.0
        %v2789 = vlog2.pop %v2788
        %v2790 = vmul.f32 %v2789, 0.6931472
        %v2791 = vmul.f32 -0.5, %v2694
        %v2792 = vadd.f32 %v2791, 1.0
        %v2793 = vmul.f32 %v2792, %v2694
        %v2794 = vand.u32 2147483647, %v2694
        %vm2795 = vcmp.lt.f32.partialorder %v2794, 0.0004427343
        %v2796 = vsel %vm2795, %v2793, %v2790
        %v2797 = vadd.f32 %v2696, 1.0
        %v2798 = vlog2.pop %v2797
        %v2799 = vmul.f32 %v2798, 0.6931472
        %v2800 = vmul.f32 -0.5, %v2696
        %v2801 = vadd.f32 %v2800, 1.0
        %v2802 = vmul.f32 %v2801, %v2696
        %v2803 = vand.u32 2147483647, %v2696
        %vm2804 = vcmp.lt.f32.partialorder %v2803, 0.0004427343
        %v2805 = vsel %vm2804, %v2802, %v2799
        %v2806 = vadd.f32 %v2698, 1.0
        %v2807 = vlog2.pop %v2806
        %v2808 = vmul.f32 %v2807, 0.6931472
        %v2809 = vmul.f32 -0.5, %v2698
        %v2810 = vadd.f32 %v2809, 1.0
        %v2811 = vmul.f32 %v2810, %v2698
        %v2812 = vand.u32 2147483647, %v2698
        %vm2813 = vcmp.lt.f32.partialorder %v2812, 0.0004427343
        %v2814 = vsel %vm2813, %v2811, %v2808
        %v2815 = vadd.f32 %v2700, 1.0
        %v2816 = vlog2.pop %v2815
        %v2817 = vmul.f32 %v2816, 0.6931472
        %v2818 = vmul.f32 -0.5, %v2700
        %v2819 = vadd.f32 %v2818, 1.0
        %v2820 = vmul.f32 %v2819, %v2700
        %v2821 = vand.u32 2147483647, %v2700
        %vm2822 = vcmp.lt.f32.partialorder %v2821, 0.0004427343
        %v2823 = vsel %vm2822, %v2820, %v2817
        %v2824 = vadd.f32 %v2702, 1.0
        %v2825 = vlog2.pop %v2824
        %v2826 = vmul.f32 %v2825, 0.6931472
        %v2827 = vmul.f32 -0.5, %v2702
        %v2828 = vadd.f32 %v2827, 1.0
        %v2829 = vmul.f32 %v2828, %v2702
        %v2830 = vand.u32 2147483647, %v2702
        %vm2831 = vcmp.lt.f32.partialorder %v2830, 0.0004427343
        %v2832 = vsel %vm2831, %v2829, %v2826
        %v2833 = vadd.f32 %v2704, 1.0
        %v2834 = vlog2.pop %v2833
        %v2835 = vmul.f32 %v2834, 0.6931472
        %v2836 = vmul.f32 -0.5, %v2704
        %v2837 = vadd.f32 %v2836, 1.0
        %v2838 = vmul.f32 %v2837, %v2704
        %v2839 = vand.u32 2147483647, %v2704
        %vm2840 = vcmp.lt.f32.partialorder %v2839, 0.0004427343
        %v2841 = vsel %vm2840, %v2838, %v2835
        %v2842 = vadd.f32 %v2706, 1.0
        %v2843 = vlog2.pop %v2842
        %v2844 = vmul.f32 %v2843, 0.6931472
        %v2845 = vmul.f32 -0.5, %v2706
        %v2846 = vadd.f32 %v2845, 1.0
        %v2847 = vmul.f32 %v2846, %v2706
        %v2848 = vand.u32 2147483647, %v2706
        %vm2849 = vcmp.lt.f32.partialorder %v2848, 0.0004427343
        %v2850 = vsel %vm2849, %v2847, %v2844
        %v2851 = vadd.f32 %v2627, %v2715
        %v2852 = vadd.f32 %v2628, %v2724
        %v2853 = vadd.f32 %v2629, %v2733
        %v2854 = vadd.f32 %v2630, %v2742
        %v2855 = vadd.f32 %v2631, %v2751
        %v2856 = vadd.f32 %v2632, %v2760
        %v2857 = vadd.f32 %v2633, %v2769
        %v2858 = vadd.f32 %v2634, %v2778
        %v2859 = vadd.f32 %v2635, %v2787
        %v2860 = vadd.f32 %v2636, %v2796
        %v2861 = vadd.f32 %v2637, %v2805
        %v2862 = vadd.f32 %v2638, %v2814
        %v2863 = vadd.f32 %v2639, %v2823
        %v2864 = vadd.f32 %v2640, %v2832
        %v2865 = vadd.f32 %v2641, %v2841
        %v2866 = vadd.f32 %v2642, %v2850
        %2867 = vadd.xlane.f32.xlu0 %v2851
        %v2868 = vpop.xlane.xlu0 %2867
        %2869 = vadd.xlane.f32.xlu0 %v2852
        %v2870 = vpop.xlane.xlu0 %2869
        %2871 = vadd.xlane.f32.xlu0 %v2853
        %v2872 = vpop.xlane.xlu0 %2871
        %2873 = vadd.xlane.f32.xlu0 %v2854
        %v2874 = vpop.xlane.xlu0 %2873
        %2875 = vadd.xlane.f32.xlu0 %v2855
        %v2876 = vpop.xlane.xlu0 %2875
        %2877 = vadd.xlane.f32.xlu0 %v2856
        %v2878 = vpop.xlane.xlu0 %2877
        %2879 = vadd.xlane.f32.xlu0 %v2857
        %v2880 = vpop.xlane.xlu0 %2879
        %2881 = vadd.xlane.f32.xlu0 %v2858
        %v2882 = vpop.xlane.xlu0 %2881
        %2883 = vadd.xlane.f32.xlu0 %v2859
        %v2884 = vpop.xlane.xlu0 %2883
        %2885 = vadd.xlane.f32.xlu0 %v2860
        %v2886 = vpop.xlane.xlu0 %2885
        %2887 = vadd.xlane.f32.xlu0 %v2861
        %v2888 = vpop.xlane.xlu0 %2887
        %2889 = vadd.xlane.f32.xlu0 %v2862
        %v2890 = vpop.xlane.xlu0 %2889
        %2891 = vadd.xlane.f32.xlu0 %v2863
        %v2892 = vpop.xlane.xlu0 %2891
        %2893 = vadd.xlane.f32.xlu0 %v2864
        %v2894 = vpop.xlane.xlu0 %2893
        %2895 = vadd.xlane.f32.xlu0 %v2865
        %v2896 = vpop.xlane.xlu0 %2895
        %2897 = vadd.xlane.f32.xlu0 %v2866
        %v2898 = vpop.xlane.xlu0 %2897
        %v2899 = vmul.f32 %v770, %v1151
        %v2900 = vmul.f32 %v771, %v1151
        %v2901 = vmul.f32 %v772, %v1151
        %v2902 = vmul.f32 %v773, %v1151
        %v2903 = vmul.f32 %v774, %v1151
        %v2904 = vmul.f32 %v775, %v1151
        %v2905 = vmul.f32 %v776, %v1151
        %v2906 = vmul.f32 %v777, %v1151
        %v2907 = vmul.f32 %v778, %v1151
        %v2908 = vmul.f32 %v779, %v1151
        %v2909 = vmul.f32 %v780, %v1151
        %v2910 = vmul.f32 %v781, %v1151
        %v2911 = vmul.f32 %v782, %v1151
        %v2912 = vmul.f32 %v783, %v1151
        %v2913 = vmul.f32 %v784, %v1151
        %v2914 = vmul.f32 %v785, %v1151
        %2915 = vadd.xlane.f32.xlu0 %v2899
        %v2916 = vpop.xlane.xlu0 %2915
        %2917 = vadd.xlane.f32.xlu0 %v2900
        %v2918 = vpop.xlane.xlu0 %2917
        %2919 = vadd.xlane.f32.xlu0 %v2901
        %v2920 = vpop.xlane.xlu0 %2919
        %2921 = vadd.xlane.f32.xlu0 %v2902
        %v2922 = vpop.xlane.xlu0 %2921
        %2923 = vadd.xlane.f32.xlu0 %v2903
        %v2924 = vpop.xlane.xlu0 %2923
        %2925 = vadd.xlane.f32.xlu0 %v2904
        %v2926 = vpop.xlane.xlu0 %2925
        %2927 = vadd.xlane.f32.xlu0 %v2905
        %v2928 = vpop.xlane.xlu0 %2927
        %2929 = vadd.xlane.f32.xlu0 %v2906
        %v2930 = vpop.xlane.xlu0 %2929
        %2931 = vadd.xlane.f32.xlu0 %v2907
        %v2932 = vpop.xlane.xlu0 %2931
        %2933 = vadd.xlane.f32.xlu0 %v2908
        %v2934 = vpop.xlane.xlu0 %2933
        %2935 = vadd.xlane.f32.xlu0 %v2909
        %v2936 = vpop.xlane.xlu0 %2935
        %2937 = vadd.xlane.f32.xlu0 %v2910
        %v2938 = vpop.xlane.xlu0 %2937
        %2939 = vadd.xlane.f32.xlu0 %v2911
        %v2940 = vpop.xlane.xlu0 %2939
        %2941 = vadd.xlane.f32.xlu0 %v2912
        %v2942 = vpop.xlane.xlu0 %2941
        %2943 = vadd.xlane.f32.xlu0 %v2913
        %v2944 = vpop.xlane.xlu0 %2943
        %2945 = vadd.xlane.f32.xlu0 %v2914
        %v2946 = vpop.xlane.xlu0 %2945
        %v2947 = vsub.f32 0.0, %v2868
        %v2948 = vsub.f32 0.0, %v2870
        %v2949 = vsub.f32 0.0, %v2872
        %v2950 = vsub.f32 0.0, %v2874
        %v2951 = vsub.f32 0.0, %v2876
        %v2952 = vsub.f32 0.0, %v2878
        %v2953 = vsub.f32 0.0, %v2880
        %v2954 = vsub.f32 0.0, %v2882
        %v2955 = vsub.f32 0.0, %v2884
        %v2956 = vsub.f32 0.0, %v2886
        %v2957 = vsub.f32 0.0, %v2888
        %v2958 = vsub.f32 0.0, %v2890
        %v2959 = vsub.f32 0.0, %v2892
        %v2960 = vsub.f32 0.0, %v2894
        %v2961 = vsub.f32 0.0, %v2896
        %v2962 = vsub.f32 0.0, %v2898
        %v2963 = vsub.f32 %v2947, %v2916
        %v2964 = vsub.f32 %v2948, %v2918
        %v2965 = vsub.f32 %v2949, %v2920
        %v2966 = vsub.f32 %v2950, %v2922
        %v2967 = vsub.f32 %v2951, %v2924
        %v2968 = vsub.f32 %v2952, %v2926
        %v2969 = vsub.f32 %v2953, %v2928
        %v2970 = vsub.f32 %v2954, %v2930
        %v2971 = vsub.f32 %v2955, %v2932
        %v2972 = vsub.f32 %v2956, %v2934
        %v2973 = vsub.f32 %v2957, %v2936
        %v2974 = vsub.f32 %v2958, %v2938
        %v2975 = vsub.f32 %v2959, %v2940
        %v2976 = vsub.f32 %v2960, %v2942
        %v2977 = vsub.f32 %v2961, %v2944
        %v2978 = vsub.f32 %v2962, %v2946
        %v2979 = vmax.f32 %v2565, 0.0
        %v2980 = vmax.f32 %v2568, 0.0
        %v2981 = vmax.f32 %v2573, 0.0
        %v2982 = vmax.f32 %v2576, 0.0
        %v2983 = vmax.f32 %v2581, 0.0
        %v2984 = vmax.f32 %v2584, 0.0
        %v2985 = vmax.f32 %v2589, 0.0
        %v2986 = vmax.f32 %v2592, 0.0
        %v2987 = vmax.f32 %v2597, 0.0
        %v2988 = vmax.f32 %v2600, 0.0
        %v2989 = vmax.f32 %v2605, 0.0
        %v2990 = vmax.f32 %v2608, 0.0
        %v2991 = vmax.f32 %v2613, 0.0
        %v2992 = vmax.f32 %v2616, 0.0
        %v2993 = vmax.f32 %v2621, 0.0
        %v2994 = vmax.f32 %v2624, 0.0
        %v2995 = vand.u32 2147483647, %v2565
        %v2996 = vand.u32 2147483647, %v2568
        %v2997 = vand.u32 2147483647, %v2573
        %v2998 = vand.u32 2147483647, %v2576
        %v2999 = vand.u32 2147483647, %v2581
        %v3000 = vand.u32 2147483647, %v2584
        %v3001 = vand.u32 2147483647, %v2589
        %v3002 = vand.u32 2147483647, %v2592
        %v3003 = vand.u32 2147483647, %v2597
        %v3004 = vand.u32 2147483647, %v2600
        %v3005 = vand.u32 2147483647, %v2605
        %v3006 = vand.u32 2147483647, %v2608
        %v3007 = vand.u32 2147483647, %v2613
        %v3008 = vand.u32 2147483647, %v2616
        %v3009 = vand.u32 2147483647, %v2621
        %v3010 = vand.u32 2147483647, %v2624
        %v3011 = vsub.f32 0.0, %v2995
        %v3012 = vsub.f32 0.0, %v2996
        %v3013 = vsub.f32 0.0, %v2997
        %v3014 = vsub.f32 0.0, %v2998
        %v3015 = vsub.f32 0.0, %v2999
        %v3016 = vsub.f32 0.0, %v3000
        %v3017 = vsub.f32 0.0, %v3001
        %v3018 = vsub.f32 0.0, %v3002
        %v3019 = vsub.f32 0.0, %v3003
        %v3020 = vsub.f32 0.0, %v3004
        %v3021 = vsub.f32 0.0, %v3005
        %v3022 = vsub.f32 0.0, %v3006
        %v3023 = vsub.f32 0.0, %v3007
        %v3024 = vsub.f32 0.0, %v3008
        %v3025 = vsub.f32 0.0, %v3009
        %v3026 = vsub.f32 0.0, %v3010
        %v3027 = vmul.f32 %v3011, 1.442695
        %v3028 = vpow.pop %v3027
        %v3029 = vmul.f32 %v3012, 1.442695
        %v3030 = vpow.pop %v3029
        %v3031 = vmul.f32 %v3013, 1.442695
        %v3032 = vpow.pop %v3031
        %v3033 = vmul.f32 %v3014, 1.442695
        %v3034 = vpow.pop %v3033
        %v3035 = vmul.f32 %v3015, 1.442695
        %v3036 = vpow.pop %v3035
        %v3037 = vmul.f32 %v3016, 1.442695
        %v3038 = vpow.pop %v3037
        %v3039 = vmul.f32 %v3017, 1.442695
        %v3040 = vpow.pop %v3039
        %v3041 = vmul.f32 %v3018, 1.442695
        %v3042 = vpow.pop %v3041
        %v3043 = vmul.f32 %v3019, 1.442695
        %v3044 = vpow.pop %v3043
        %v3045 = vmul.f32 %v3020, 1.442695
        %v3046 = vpow.pop %v3045
        %v3047 = vmul.f32 %v3021, 1.442695
        %v3048 = vpow.pop %v3047
        %v3049 = vmul.f32 %v3022, 1.442695
        %v3050 = vpow.pop %v3049
        %v3051 = vmul.f32 %v3023, 1.442695
        %v3052 = vpow.pop %v3051
        %v3053 = vmul.f32 %v3024, 1.442695
        %v3054 = vpow.pop %v3053
        %v3055 = vmul.f32 %v3025, 1.442695
        %v3056 = vpow.pop %v3055
        %v3057 = vmul.f32 %v3026, 1.442695
        %v3058 = vpow.pop %v3057
        %v3059 = vadd.f32 %v3028, 1.0
        %v3060 = vlog2.pop %v3059
        %v3061 = vmul.f32 %v3060, 0.6931472
        %v3062 = vmul.f32 -0.5, %v3028
        %v3063 = vadd.f32 %v3062, 1.0
        %v3064 = vmul.f32 %v3063, %v3028
        %v3065 = vand.u32 2147483647, %v3028
        %vm3066 = vcmp.lt.f32.partialorder %v3065, 0.0004427343
        %v3067 = vsel %vm3066, %v3064, %v3061
        %v3068 = vadd.f32 %v3030, 1.0
        %v3069 = vlog2.pop %v3068
        %v3070 = vmul.f32 %v3069, 0.6931472
        %v3071 = vmul.f32 -0.5, %v3030
        %v3072 = vadd.f32 %v3071, 1.0
        %v3073 = vmul.f32 %v3072, %v3030
        %v3074 = vand.u32 2147483647, %v3030
        %vm3075 = vcmp.lt.f32.partialorder %v3074, 0.0004427343
        %v3076 = vsel %vm3075, %v3073, %v3070
        %v3077 = vadd.f32 %v3032, 1.0
        %v3078 = vlog2.pop %v3077
        %v3079 = vmul.f32 %v3078, 0.6931472
        %v3080 = vmul.f32 -0.5, %v3032
        %v3081 = vadd.f32 %v3080, 1.0
        %v3082 = vmul.f32 %v3081, %v3032
        %v3083 = vand.u32 2147483647, %v3032
        %vm3084 = vcmp.lt.f32.partialorder %v3083, 0.0004427343
        %v3085 = vsel %vm3084, %v3082, %v3079
        %v3086 = vadd.f32 %v3034, 1.0
        %v3087 = vlog2.pop %v3086
        %v3088 = vmul.f32 %v3087, 0.6931472
        %v3089 = vmul.f32 -0.5, %v3034
        %v3090 = vadd.f32 %v3089, 1.0
        %v3091 = vmul.f32 %v3090, %v3034
        %v3092 = vand.u32 2147483647, %v3034
        %vm3093 = vcmp.lt.f32.partialorder %v3092, 0.0004427343
        %v3094 = vsel %vm3093, %v3091, %v3088
        %v3095 = vadd.f32 %v3036, 1.0
        %v3096 = vlog2.pop %v3095
        %v3097 = vmul.f32 %v3096, 0.6931472
        %v3098 = vmul.f32 -0.5, %v3036
        %v3099 = vadd.f32 %v3098, 1.0
        %v3100 = vmul.f32 %v3099, %v3036
        %v3101 = vand.u32 2147483647, %v3036
        %vm3102 = vcmp.lt.f32.partialorder %v3101, 0.0004427343
        %v3103 = vsel %vm3102, %v3100, %v3097
        %v3104 = vadd.f32 %v3038, 1.0
        %v3105 = vlog2.pop %v3104
        %v3106 = vmul.f32 %v3105, 0.6931472
        %v3107 = vmul.f32 -0.5, %v3038
        %v3108 = vadd.f32 %v3107, 1.0
        %v3109 = vmul.f32 %v3108, %v3038
        %v3110 = vand.u32 2147483647, %v3038
        %vm3111 = vcmp.lt.f32.partialorder %v3110, 0.0004427343
        %v3112 = vsel %vm3111, %v3109, %v3106
        %v3113 = vadd.f32 %v3040, 1.0
        %v3114 = vlog2.pop %v3113
        %v3115 = vmul.f32 %v3114, 0.6931472
        %v3116 = vmul.f32 -0.5, %v3040
        %v3117 = vadd.f32 %v3116, 1.0
        %v3118 = vmul.f32 %v3117, %v3040
        %v3119 = vand.u32 2147483647, %v3040
        %vm3120 = vcmp.lt.f32.partialorder %v3119, 0.0004427343
        %v3121 = vsel %vm3120, %v3118, %v3115
        %v3122 = vadd.f32 %v3042, 1.0
        %v3123 = vlog2.pop %v3122
        %v3124 = vmul.f32 %v3123, 0.6931472
        %v3125 = vmul.f32 -0.5, %v3042
        %v3126 = vadd.f32 %v3125, 1.0
        %v3127 = vmul.f32 %v3126, %v3042
        %v3128 = vand.u32 2147483647, %v3042
        %vm3129 = vcmp.lt.f32.partialorder %v3128, 0.0004427343
        %v3130 = vsel %vm3129, %v3127, %v3124
        %v3131 = vadd.f32 %v3044, 1.0
        %v3132 = vlog2.pop %v3131
        %v3133 = vmul.f32 %v3132, 0.6931472
        %v3134 = vmul.f32 -0.5, %v3044
        %v3135 = vadd.f32 %v3134, 1.0
        %v3136 = vmul.f32 %v3135, %v3044
        %v3137 = vand.u32 2147483647, %v3044
        %vm3138 = vcmp.lt.f32.partialorder %v3137, 0.0004427343
        %v3139 = vsel %vm3138, %v3136, %v3133
        %v3140 = vadd.f32 %v3046, 1.0
        %v3141 = vlog2.pop %v3140
        %v3142 = vmul.f32 %v3141, 0.6931472
        %v3143 = vmul.f32 -0.5, %v3046
        %v3144 = vadd.f32 %v3143, 1.0
        %v3145 = vmul.f32 %v3144, %v3046
        %v3146 = vand.u32 2147483647, %v3046
        %vm3147 = vcmp.lt.f32.partialorder %v3146, 0.0004427343
        %v3148 = vsel %vm3147, %v3145, %v3142
        %v3149 = vadd.f32 %v3048, 1.0
        %v3150 = vlog2.pop %v3149
        %v3151 = vmul.f32 %v3150, 0.6931472
        %v3152 = vmul.f32 -0.5, %v3048
        %v3153 = vadd.f32 %v3152, 1.0
        %v3154 = vmul.f32 %v3153, %v3048
        %v3155 = vand.u32 2147483647, %v3048
        %vm3156 = vcmp.lt.f32.partialorder %v3155, 0.0004427343
        %v3157 = vsel %vm3156, %v3154, %v3151
        %v3158 = vadd.f32 %v3050, 1.0
        %v3159 = vlog2.pop %v3158
        %v3160 = vmul.f32 %v3159, 0.6931472
        %v3161 = vmul.f32 -0.5, %v3050
        %v3162 = vadd.f32 %v3161, 1.0
        %v3163 = vmul.f32 %v3162, %v3050
        %v3164 = vand.u32 2147483647, %v3050
        %vm3165 = vcmp.lt.f32.partialorder %v3164, 0.0004427343
        %v3166 = vsel %vm3165, %v3163, %v3160
        %v3167 = vadd.f32 %v3052, 1.0
        %v3168 = vlog2.pop %v3167
        %v3169 = vmul.f32 %v3168, 0.6931472
        %v3170 = vmul.f32 -0.5, %v3052
        %v3171 = vadd.f32 %v3170, 1.0
        %v3172 = vmul.f32 %v3171, %v3052
        %v3173 = vand.u32 2147483647, %v3052
        %vm3174 = vcmp.lt.f32.partialorder %v3173, 0.0004427343
        %v3175 = vsel %vm3174, %v3172, %v3169
        %v3176 = vadd.f32 %v3054, 1.0
        %v3177 = vlog2.pop %v3176
        %v3178 = vmul.f32 %v3177, 0.6931472
        %v3179 = vmul.f32 -0.5, %v3054
        %v3180 = vadd.f32 %v3179, 1.0
        %v3181 = vmul.f32 %v3180, %v3054
        %v3182 = vand.u32 2147483647, %v3054
        %vm3183 = vcmp.lt.f32.partialorder %v3182, 0.0004427343
        %v3184 = vsel %vm3183, %v3181, %v3178
        %v3185 = vadd.f32 %v3056, 1.0
        %v3186 = vlog2.pop %v3185
        %v3187 = vmul.f32 %v3186, 0.6931472
        %v3188 = vmul.f32 -0.5, %v3056
        %v3189 = vadd.f32 %v3188, 1.0
        %v3190 = vmul.f32 %v3189, %v3056
        %v3191 = vand.u32 2147483647, %v3056
        %vm3192 = vcmp.lt.f32.partialorder %v3191, 0.0004427343
        %v3193 = vsel %vm3192, %v3190, %v3187
        %v3194 = vadd.f32 %v3058, 1.0
        %v3195 = vlog2.pop %v3194
        %v3196 = vmul.f32 %v3195, 0.6931472
        %v3197 = vmul.f32 -0.5, %v3058
        %v3198 = vadd.f32 %v3197, 1.0
        %v3199 = vmul.f32 %v3198, %v3058
        %v3200 = vand.u32 2147483647, %v3058
        %vm3201 = vcmp.lt.f32.partialorder %v3200, 0.0004427343
        %v3202 = vsel %vm3201, %v3199, %v3196
        %v3203 = vadd.f32 %v2979, %v3067
        %v3204 = vadd.f32 %v2980, %v3076
        %v3205 = vadd.f32 %v2981, %v3085
        %v3206 = vadd.f32 %v2982, %v3094
        %v3207 = vadd.f32 %v2983, %v3103
        %v3208 = vadd.f32 %v2984, %v3112
        %v3209 = vadd.f32 %v2985, %v3121
        %v3210 = vadd.f32 %v2986, %v3130
        %v3211 = vadd.f32 %v2987, %v3139
        %v3212 = vadd.f32 %v2988, %v3148
        %v3213 = vadd.f32 %v2989, %v3157
        %v3214 = vadd.f32 %v2990, %v3166
        %v3215 = vadd.f32 %v2991, %v3175
        %v3216 = vadd.f32 %v2992, %v3184
        %v3217 = vadd.f32 %v2993, %v3193
        %v3218 = vadd.f32 %v2994, %v3202
        %3219 = vadd.xlane.f32.xlu0 %v3203
        %v3220 = vpop.xlane.xlu0 %3219
        %3221 = vadd.xlane.f32.xlu0 %v3204
        %v3222 = vpop.xlane.xlu0 %3221
        %3223 = vadd.xlane.f32.xlu0 %v3205
        %v3224 = vpop.xlane.xlu0 %3223
        %3225 = vadd.xlane.f32.xlu0 %v3206
        %v3226 = vpop.xlane.xlu0 %3225
        %3227 = vadd.xlane.f32.xlu0 %v3207
        %v3228 = vpop.xlane.xlu0 %3227
        %3229 = vadd.xlane.f32.xlu0 %v3208
        %v3230 = vpop.xlane.xlu0 %3229
        %3231 = vadd.xlane.f32.xlu0 %v3209
        %v3232 = vpop.xlane.xlu0 %3231
        %3233 = vadd.xlane.f32.xlu0 %v3210
        %v3234 = vpop.xlane.xlu0 %3233
        %3235 = vadd.xlane.f32.xlu0 %v3211
        %v3236 = vpop.xlane.xlu0 %3235
        %3237 = vadd.xlane.f32.xlu0 %v3212
        %v3238 = vpop.xlane.xlu0 %3237
        %3239 = vadd.xlane.f32.xlu0 %v3213
        %v3240 = vpop.xlane.xlu0 %3239
        %3241 = vadd.xlane.f32.xlu0 %v3214
        %v3242 = vpop.xlane.xlu0 %3241
        %3243 = vadd.xlane.f32.xlu0 %v3215
        %v3244 = vpop.xlane.xlu0 %3243
        %3245 = vadd.xlane.f32.xlu0 %v3216
        %v3246 = vpop.xlane.xlu0 %3245
        %3247 = vadd.xlane.f32.xlu0 %v3217
        %v3248 = vpop.xlane.xlu0 %3247
        %3249 = vadd.xlane.f32.xlu0 %v3218
        %v3250 = vpop.xlane.xlu0 %3249
        %v3251 = vmul.f32 %v2506, %v1151
        %v3252 = vmul.f32 %v2507, %v1151
        %v3253 = vmul.f32 %v2508, %v1151
        %v3254 = vmul.f32 %v2509, %v1151
        %v3255 = vmul.f32 %v2510, %v1151
        %v3256 = vmul.f32 %v2511, %v1151
        %v3257 = vmul.f32 %v2512, %v1151
        %v3258 = vmul.f32 %v2513, %v1151
        %v3259 = vmul.f32 %v2514, %v1151
        %v3260 = vmul.f32 %v2515, %v1151
        %v3261 = vmul.f32 %v2516, %v1151
        %v3262 = vmul.f32 %v2517, %v1151
        %v3263 = vmul.f32 %v2518, %v1151
        %v3264 = vmul.f32 %v2519, %v1151
        %v3265 = vmul.f32 %v2520, %v1151
        %v3266 = vmul.f32 %v2521, %v1151
        %3267 = vadd.xlane.f32.xlu0 %v3251
        %v3268 = vpop.xlane.xlu0 %3267
        %3269 = vadd.xlane.f32.xlu0 %v3252
        %v3270 = vpop.xlane.xlu0 %3269
        %3271 = vadd.xlane.f32.xlu0 %v3253
        %v3272 = vpop.xlane.xlu0 %3271
        %3273 = vadd.xlane.f32.xlu0 %v3254
        %v3274 = vpop.xlane.xlu0 %3273
        %3275 = vadd.xlane.f32.xlu0 %v3255
        %v3276 = vpop.xlane.xlu0 %3275
        %3277 = vadd.xlane.f32.xlu0 %v3256
        %v3278 = vpop.xlane.xlu0 %3277
        %3279 = vadd.xlane.f32.xlu0 %v3257
        %v3280 = vpop.xlane.xlu0 %3279
        %3281 = vadd.xlane.f32.xlu0 %v3258
        %v3282 = vpop.xlane.xlu0 %3281
        %3283 = vadd.xlane.f32.xlu0 %v3259
        %v3284 = vpop.xlane.xlu0 %3283
        %3285 = vadd.xlane.f32.xlu0 %v3260
        %v3286 = vpop.xlane.xlu0 %3285
        %3287 = vadd.xlane.f32.xlu0 %v3261
        %v3288 = vpop.xlane.xlu0 %3287
        %3289 = vadd.xlane.f32.xlu0 %v3262
        %v3290 = vpop.xlane.xlu0 %3289
        %3291 = vadd.xlane.f32.xlu0 %v3263
        %v3292 = vpop.xlane.xlu0 %3291
        %3293 = vadd.xlane.f32.xlu0 %v3264
        %v3294 = vpop.xlane.xlu0 %3293
        %3295 = vadd.xlane.f32.xlu0 %v3265
        %v3296 = vpop.xlane.xlu0 %3295
        %3297 = vadd.xlane.f32.xlu0 %v3266
        %v3298 = vpop.xlane.xlu0 %3297
        %v3299 = vsub.f32 0.0, %v3220
        %v3300 = vsub.f32 0.0, %v3222
        %v3301 = vsub.f32 0.0, %v3224
        %v3302 = vsub.f32 0.0, %v3226
        %v3303 = vsub.f32 0.0, %v3228
        %v3304 = vsub.f32 0.0, %v3230
        %v3305 = vsub.f32 0.0, %v3232
        %v3306 = vsub.f32 0.0, %v3234
        %v3307 = vsub.f32 0.0, %v3236
        %v3308 = vsub.f32 0.0, %v3238
        %v3309 = vsub.f32 0.0, %v3240
        %v3310 = vsub.f32 0.0, %v3242
        %v3311 = vsub.f32 0.0, %v3244
        %v3312 = vsub.f32 0.0, %v3246
        %v3313 = vsub.f32 0.0, %v3248
        %v3314 = vsub.f32 0.0, %v3250
        %v3315 = vsub.f32 %v3299, %v3268
        %v3316 = vsub.f32 %v3300, %v3270
        %v3317 = vsub.f32 %v3301, %v3272
        %v3318 = vsub.f32 %v3302, %v3274
        %v3319 = vsub.f32 %v3303, %v3276
        %v3320 = vsub.f32 %v3304, %v3278
        %v3321 = vsub.f32 %v3305, %v3280
        %v3322 = vsub.f32 %v3306, %v3282
        %v3323 = vsub.f32 %v3307, %v3284
        %v3324 = vsub.f32 %v3308, %v3286
        %v3325 = vsub.f32 %v3309, %v3288
        %v3326 = vsub.f32 %v3310, %v3290
        %v3327 = vsub.f32 %v3311, %v3292
        %v3328 = vsub.f32 %v3312, %v3294
        %v3329 = vsub.f32 %v3313, %v3296
        %v3330 = vsub.f32 %v3314, %v3298
        %v3331 = vsub.f32 %v2963, %v3315
        %v3332 = vsub.f32 %v2964, %v3316
        %v3333 = vsub.f32 %v2965, %v3317
        %v3334 = vsub.f32 %v2966, %v3318
        %v3335 = vsub.f32 %v2967, %v3319
        %v3336 = vsub.f32 %v2968, %v3320
        %v3337 = vsub.f32 %v2969, %v3321
        %v3338 = vsub.f32 %v2970, %v3322
        %v3339 = vsub.f32 %v2971, %v3323
        %v3340 = vsub.f32 %v2972, %v3324
        %v3341 = vsub.f32 %v2973, %v3325
        %v3342 = vsub.f32 %v2974, %v3326
        %v3343 = vsub.f32 %v2975, %v3327
        %v3344 = vsub.f32 %v2976, %v3328
        %v3345 = vsub.f32 %v2977, %v3329
        %v3346 = vsub.f32 %v2978, %v3330
        %vm3347 = vcmask 7168
        %v3348 = vsel %vm3347, %v3331, 0.0
        %v3349 = vsel %vm3347, %v3332, 0.0
        %v3350 = vadd.f32 %v3348, %v3349
        %v3351 = vsel %vm3347, %v3333, 0.0
        %v3352 = vadd.f32 %v3350, %v3351
        %v3353 = vsel %vm3347, %v3334, 0.0
        %v3354 = vadd.f32 %v3352, %v3353
        %v3355 = vsel %vm3347, %v3335, 0.0
        %v3356 = vadd.f32 %v3354, %v3355
        %v3357 = vsel %vm3347, %v3336, 0.0
        %v3358 = vadd.f32 %v3356, %v3357
        %v3359 = vsel %vm3347, %v3337, 0.0
        %v3360 = vadd.f32 %v3358, %v3359
        %v3361 = vsel %vm3347, %v3338, 0.0
        %v3362 = vadd.f32 %v3360, %v3361
        %v3363 = vsel %vm3347, %v3339, 0.0
        %v3364 = vadd.f32 %v3362, %v3363
        %v3365 = vsel %vm3347, %v3340, 0.0
        %v3366 = vadd.f32 %v3364, %v3365
        %v3367 = vsel %vm3347, %v3341, 0.0
        %v3368 = vadd.f32 %v3366, %v3367
        %v3369 = vsel %vm3347, %v3342, 0.0
        %v3370 = vadd.f32 %v3368, %v3369
        %v3371 = vsel %vm3347, %v3343, 0.0
        %v3372 = vadd.f32 %v3370, %v3371
        %v3373 = vsel %vm3347, %v3344, 0.0
        %v3374 = vadd.f32 %v3372, %v3373
        %v3375 = vsel %vm3347, %v3345, 0.0
        %v3376 = vadd.f32 %v3374, %v3375
        %v3377 = vsel %vm3347, %v3346, 0.0
        %v3378 = vadd.f32 %v3376, %v3377
        %3379 = vadd.xlane.f32.xlu0 %v3378
        %v3380 = vpop.xlane.xlu0 %3379
        %v3381 = vrot.slane %v3380, 4
        %v3382 = vadd.f32 %v3380, %v3381
        %v3383 = vrot.slane %v3382, 2
        %v3384 = vadd.f32 %v3382, %v3383
        %v3385 = vrot.slane %v3384, 1
        %v3386 = vadd.f32 %v3384, %v3385
        %s3387 = vtos %v3386
        %v3388 = vstv %s3387
        %3389 = vst [vmem:[%s768] sm:$0xff] %v3388
        %p3390 = scmp.lt.s32.totalorder %s18, 1
        %s3391 = scalar_select %p3390, %s18, 1
        %s3392 = smul.addr %s3391, 8
        %s3393 = scalar_lea.vmem %s7, %s3392
        // Predicated region
        $region125: #{rbm_forward.3} parent=115 // pred_check
          %p3394 = pneg %p198
        $region126: #{rbm_forward.3} parent=115 // pred_check_branch
          %3396 = sbr.rel (%p3394) target = $region128
        $region127: #{rbm_forward.3} parent=115 // pred_region
          _
        $region128: #{rbm_forward.3} parent=115 // pred_fallthru
          _
      $region116: #{rbm_forward.3} parent=5 // pred_fallthru
        _
      %p3397 = scmp.le.s32.totalorder 2, %s13
      // Predicated region
      $region129: #{rbm_forward.3} parent=5 // pred_check
        %p3398 = pneg %p3397
      $region130: #{rbm_forward.3} parent=5 // pred_check_branch
        %3400 = sbr.rel (%p3398) target = $region132
      $region131: #{rbm_forward.3} parent=5 // pred_region
        %s3401 = ssub.s32 %s13, 2
        // Predicated region
        $region133: #{rbm_forward.3} parent=131 // pred_check
          %p3402 = pneg %p204
        $region134: #{rbm_forward.3} parent=131 // pred_check_branch
          %3404 = sbr.rel (%p3402) target = $region136
        $region135: #{rbm_forward.3} parent=131 // pred_region
          %p3405 = scmp.lt.s32.totalorder %s19, 1
          %s3406 = scalar_select %p3405, %s19, 1
          %s3407 = smul.addr %s3406, 8
          %s3408 = scalar_lea.vmem %s7, %s3407
        $region136: #{rbm_forward.3} parent=131 // pred_fallthru
          _
      $region132: #{rbm_forward.3} parent=5 // pred_fallthru
        _
    $region6: #{rbm_forward.3} parent=1 // loop_footer
      %s17 = sadd.s32 1, %s13
    $region7: #{rbm_forward.3} parent=1 // loop_footer_branch
      %12 = sbr.rel target = $region3
    $region8: #{rbm_forward.3} parent=1 // loop_exit
      _

</llo_original>
